<compile_context>
chip_gen: v7x
topology: tpu7x:2x2x1
jax: 0.10.0
libtpu: 0.0.40
codegen_flags: <defaults>
</compile_context>

<pallas_src>
import functools

import jax
import jax.numpy as jnp
from jax.experimental import pallas as pl
from jax.experimental.pallas import tpu as pltpu

LANE = 128


def _round_up(n, m):
    return (n + m - 1) // m * m


# ----------------------------------------------------------------------------
# Kernel: fused (conv3x3 + folded-BN bias + ReLU) x 2 for one (batch, H-tile).
# ----------------------------------------------------------------------------
def _double_conv_kernel(x_ref, w1_ref, b1_ref, w2_ref, b2_ref, o_ref, y1_ref,
                        *, tile_h, width, w_pad):
    # x_ref : (1, H+4, w_pad, Ci)   bf16, spatially pre-padded (2 rows / 1 left col of zeros)
    # w1_ref: (3, 3, Ci, Cm)        bf16, BN-scale already folded in
    # b1_ref: (1, Cm)               f32, folded bias
    # w2_ref: (3, 3, Cm, Co)        bf16
    # b2_ref: (1, Co)               f32
    # o_ref : (1, tile_h, W, Co)    f32
    # y1_ref: (tile_h+2, w_pad, Cm) bf16 VMEM scratch (conv1 output + 1-row halo each side)
    t = pl.program_id(1)
    rh = tile_h + 2                       # rows of conv1 output needed by this tile
    ci = x_ref.shape[3]
    cm = w1_ref.shape[3]
    co = w2_ref.shape[3]
    base = pl.multiple_of(t * tile_h, tile_h)

    # ---- conv1: dy taps = major-axis slices, dx taps = sublane rolls + aligned slice ----
    acc1 = None
    for dy in range(3):
        slab = x_ref[0, pl.ds(base + dy, rh), :, :].astype(jnp.float32)
        for dx in range(3):
            shift = (-dx) % w_pad         # rolled[:, w] = slab[:, w + dx]
            tap = pltpu.roll(slab, shift, 1) if shift else slab
            tap = tap[:, :width, :].reshape(rh * width, ci).astype(jnp.bfloat16)
            d = jnp.dot(tap, w1_ref[dy, dx], preferred_element_type=jnp.float32)
            acc1 = d if acc1 is None else acc1 + d
    y1 = jnp.maximum(acc1 + b1_ref[...], 0.0)          # folded-BN bias + ReLU (f32)

    # ---- stash conv1 result: aligned stores only -----------------------------------------
    # Right-hand zero strip supplies the zero halo columns that conv2's rolls wrap into.
    y1_ref[:, width:w_pad, :] = jnp.zeros((rh, w_pad - width, cm), y1_ref.dtype)
    y1_ref[:, 0:width, :] = y1.reshape(rh, width, cm).astype(y1_ref.dtype)

    # Image-edge halo rows must be zero ('SAME' padding of conv2), not extrapolated conv1.
    @pl.when(t == 0)
    def _():
        y1_ref[0, :, :] = jnp.zeros((w_pad, cm), y1_ref.dtype)

    @pl.when(t == pl.num_programs(1) - 1)
    def _():
        y1_ref[rh - 1, :, :] = jnp.zeros((w_pad, cm), y1_ref.dtype)

    # ---- conv2: same scheme over the scratch ----------------------------------------------
    acc2 = None
    for dy in range(3):
        slab = y1_ref[dy:dy + tile_h, :, :].astype(jnp.float32)
        for dx in range(3):
            shift = (1 - dx) % w_pad      # rolled[:, w] = slab[:, w + dx - 1]
            tap = pltpu.roll(slab, shift, 1) if shift else slab
            tap = tap[:, :width, :].reshape(tile_h * width, cm).astype(jnp.bfloat16)
            d = jnp.dot(tap, w2_ref[dy, dx], preferred_element_type=jnp.float32)
            acc2 = d if acc2 is None else acc2 + d
    y2 = jnp.maximum(acc2 + b2_ref[...], 0.0)
    o_ref[0] = y2.reshape(tile_h, width, co).astype(o_ref.dtype)


# ----------------------------------------------------------------------------
# Wrapper: NCHW in / NCHW out.  BN-scale-folded f32 weights + bias come in,
# channel/spatial padding + bf16 cast happen as one fused relayout.
# ----------------------------------------------------------------------------
@functools.partial(jax.jit, static_argnames=("tile_h",))
def double_conv(x_nchw, w1_hwio, b1, w2_hwio, b2, *, tile_h=8):
    B, Cin, H, W = x_nchw.shape
    Cmid = w1_hwio.shape[3]
    Cout = w2_hwio.shape[3]
    assert W % 8 == 0, "W must be a multiple of 8 (sublane width)"
    if H % tile_h != 0:
        tile_h = H                         # fall back to one H tile
    nt = H // tile_h

    ci = _round_up(Cin, LANE)
    cm = _round_up(Cmid, LANE)
    co = _round_up(Cout, LANE)
    w_pad = _round_up(W + 2, 16)           # padded W: >= W+2, tile-aligned

    # One fused relayout: NCHW->NHWC, bf16 cast, channel pad to 128 lanes, 2-row/1-col halo pad.
    x = jnp.transpose(x_nchw, (0, 2, 3, 1)).astype(jnp.bfloat16)
    x = jnp.pad(x, ((0, 0), (2, 2), (1, w_pad - W - 1), (0, ci - Cin)))

    w1p = jnp.pad(w1_hwio, ((0, 0), (0, 0), (0, ci - Cin), (0, cm - Cmid))).astype(jnp.bfloat16)
    w2p = jnp.pad(w2_hwio, ((0, 0), (0, 0), (0, cm - Cmid), (0, co - Cout))).astype(jnp.bfloat16)
    b1p = jnp.pad(b1, (0, cm - Cmid)).astype(jnp.float32).reshape(1, cm)
    b2p = jnp.pad(b2, (0, co - Cout)).astype(jnp.float32).reshape(1, co)

    kernel = functools.partial(_double_conv_kernel, tile_h=tile_h, width=W, w_pad=w_pad)

    out_nhwc = pl.pallas_call(
        kernel,
        out_shape=jax.ShapeDtypeStruct((B, H, W, co), jnp.float32),
        grid_spec=pltpu.PrefetchScalarGridSpec(
            num_scalar_prefetch=0,
            grid=(B, nt),
            in_specs=[
                # Full padded image per batch element; block index constant in t ->
                # DMA'd once per b, stays resident across the H tiles.
                pl.BlockSpec((1, H + 4, w_pad, ci), lambda b, t: (b, 0, 0, 0)),
                pl.BlockSpec((3, 3, ci, cm), lambda b, t: (0, 0, 0, 0)),
                pl.BlockSpec((1, cm), lambda b, t: (0, 0)),
                pl.BlockSpec((3, 3, cm, co), lambda b, t: (0, 0, 0, 0)),
                pl.BlockSpec((1, co), lambda b, t: (0, 0)),
            ],
            out_specs=pl.BlockSpec((1, tile_h, W, co), lambda b, t: (b, t, 0, 0)),
            scratch_shapes=[pltpu.VMEM((tile_h + 2, w_pad, cm), jnp.bfloat16)],
        ),
        compiler_params=pltpu.CompilerParams(
            dimension_semantics=("parallel", "parallel")),
    )(x, w1p, b1p, w2p, b2p)

    # Drop channel padding, back to NCHW (fused slice + transpose).
    return jnp.transpose(out_nhwc[..., :Cout], (0, 3, 1, 2))


# ----------------------------------------------------------------------------
# Deterministic parameter construction with eval-mode BatchNorm folded into the
# conv weights (scale) and bias.
# ----------------------------------------------------------------------------
def make_params(key, in_channels, mid_channels, out_channels, eps=1e-5):
    ks = jax.random.split(key, 10)

    def fold(w_oihw, conv_bias, gamma, beta, mean, var):
        scale = gamma / jnp.sqrt(var + eps)
        w_hwio = jnp.transpose(w_oihw, (2, 3, 1, 0)) * scale[None, None, None, :]
        bias = (conv_bias - mean) * scale + beta
        return w_hwio.astype(jnp.float32), bias.astype(jnp.float32)

    w1 = 0.1 * jax.random.normal(ks[0], (mid_channels, in_channels, 3, 3), jnp.float32)
    cb1 = 0.1 * jax.random.normal(ks[1], (mid_channels,), jnp.float32)
    g1 = 1.0 + 0.1 * jax.random.normal(ks[2], (mid_channels,), jnp.float32)
    be1 = 0.1 * jax.random.normal(ks[3], (mid_channels,), jnp.float32)
    m1 = 0.05 * jax.random.normal(ks[4], (mid_channels,), jnp.float32)
    v1 = 1.0 + 0.1 * jax.random.uniform(ks[5], (mid_channels,), jnp.float32)

    w2 = 0.1 * jax.random.normal(ks[6], (out_channels, mid_channels, 3, 3), jnp.float32)
    cb2 = 0.1 * jax.random.normal(ks[7], (out_channels,), jnp.float32)
    g2 = 1.0 + 0.1 * jax.random.normal(ks[8], (out_channels,), jnp.float32)
    be2 = 0.1 * jax.random.normal(ks[9], (out_channels,), jnp.float32)
    m2 = jnp.zeros((out_channels,), jnp.float32)
    v2 = jnp.ones((out_channels,), jnp.float32)

    w1f, b1f = fold(w1, cb1, g1, be1, m1, v1)
    w2f, b2f = fold(w2, cb2, g2, be2, m2, v2)
    return w1f, b1f, w2f, b2f


# ----------------------------------------------------------------------------
# Pure-JAX reference with the same bf16 MXU-input quantization as the kernel.
# ----------------------------------------------------------------------------
def reference_double_conv(x_nchw, w1_hwio, b1, w2_hwio, b2):
    x = jnp.transpose(x_nchw, (0, 2, 3, 1)).astype(jnp.bfloat16)

    def conv_bias_relu(h, w, b):
        y = jax.lax.conv_general_dilated(
            h, w.astype(jnp.bfloat16), window_strides=(1, 1), padding="SAME",
            dimension_numbers=("NHWC", "HWIO", "NHWC"),
            preferred_element_type=jnp.float32)
        return jnp.maximum(y + b[None, None, None, :], 0.0)

    y = conv_bias_relu(x, w1_hwio, b1).astype(jnp.bfloat16)
    y = conv_bias_relu(y, w2_hwio, b2)
    return jnp.transpose(y, (0, 3, 1, 2)).astype(jnp.float32)


if __name__ == "__main__":
    B, C_IN, H, W = 2, 4, 16, 16
    C_MID, C_OUT = 8, 8

    key = jax.random.PRNGKey(0)
    k_x, k_p = jax.random.split(key)
    x = jax.random.normal(k_x, (B, C_IN, H, W), jnp.float32)
    params = make_params(k_p, C_IN, C_MID, C_OUT)

    out = double_conv(x, *params)
    out = jax.block_until_ready(out)

    ref = reference_double_conv(x, *params)
    assert out.shape == (B, C_OUT, H, W)
    max_err = float(jnp.max(jnp.abs(out - ref)))
    # bf16 MXU inputs (matched in the reference) -> residual difference is only
    # accumulation order / rounding of the bf16 intermediate.
    assert jnp.allclose(out, ref, atol=2e-2, rtol=2e-2), max_err

    print("KERNEL_OK")
</pallas_src>

<mosaic_0001>
module attributes {stable_mosaic.version = 11 : i64} {
  func.func @_double_conv_kernel(%arg0: i32, %arg1: i32, %arg2: memref<1x20x32x128xbf16, #tpu.memory_space<vmem>>, %arg3: memref<3x3x128x128xbf16, #tpu.memory_space<vmem>>, %arg4: memref<1x128xf32, #tpu.memory_space<vmem>>, %arg5: memref<3x3x128x128xbf16, #tpu.memory_space<vmem>>, %arg6: memref<1x128xf32, #tpu.memory_space<vmem>>, %arg7: memref<1x8x16x128xf32, #tpu.memory_space<vmem>>, %arg8: memref<10x32x128xbf16, #tpu.memory_space<vmem>>) attributes {dimension_semantics = [#tpu.dimension_semantics<parallel>, #tpu.dimension_semantics<parallel>], iteration_bounds = array<i64: 2, 2>, scalar_prefetch = 0 : i64, scratch_operands = 1 : i64, tpu.core_type = #tpu.core_type<tc>, window_params = [{transform_indices = @transform_0, window_bounds = array<i64: 1, 20, 32, 128>}, {pipeline_mode = #tpu.pipeline_mode<synchronous>, transform_indices = @transform_1, window_bounds = array<i64: 3, 3, 128, 128>}, {pipeline_mode = #tpu.pipeline_mode<synchronous>, transform_indices = @transform_2, window_bounds = array<i64: 1, 128>}, {pipeline_mode = #tpu.pipeline_mode<synchronous>, transform_indices = @transform_3, window_bounds = array<i64: 3, 3, 128, 128>}, {pipeline_mode = #tpu.pipeline_mode<synchronous>, transform_indices = @transform_4, window_bounds = array<i64: 1, 128>}, {transform_indices = @transform_5, window_bounds = array<i64: 1, 8, 16, 128>}]} {
    %c8_i32 = arith.constant 8 : i32
    %0 = arith.muli %arg1, %c8_i32 : i32
    %1 = tpu.assume_multiple %0, 8 : i32
    %c0_i32 = arith.constant 0 : i32
    %2 = arith.addi %1, %c0_i32 : i32
    %c0 = arith.constant 0 : index
    %3 = arith.index_cast %2 : i32 to index
    %c0_0 = arith.constant 0 : index
    %c0_1 = arith.constant 0 : index
    %4 = vector.load %arg2[%c0, %3, %c0_0, %c0_1] : memref<1x20x32x128xbf16, #tpu.memory_space<vmem>>, vector<1x10x32x128xbf16>
    %5 = vector.shape_cast %4 : vector<1x10x32x128xbf16> to vector<10x32x128xbf16>
    %6 = arith.extf %5 : vector<10x32x128xbf16> to vector<10x32x128xf32>
    %7 = vector.extract_strided_slice %6 {offsets = [0, 0, 0], sizes = [10, 16, 128], strides = [1, 1, 1]} : vector<10x32x128xf32> to vector<10x16x128xf32>
    %8 = vector.shape_cast %7 : vector<10x16x128xf32> to vector<160x128xf32>
    %9 = arith.truncf %8 : vector<160x128xf32> to vector<160x128xbf16>
    %c0_2 = arith.constant 0 : index
    %c0_3 = arith.constant 0 : index
    %c0_4 = arith.constant 0 : index
    %c0_5 = arith.constant 0 : index
    %10 = vector.load %arg3[%c0_2, %c0_3, %c0_4, %c0_5] : memref<3x3x128x128xbf16, #tpu.memory_space<vmem>>, vector<1x1x128x128xbf16>
    %11 = vector.shape_cast %10 : vector<1x1x128x128xbf16> to vector<128x128xbf16>
    %cst = arith.constant dense<0.000000e+00> : vector<160x128xf32>
    %12 = tpu.matmul %9, %11, %cst {dimension_numbers = #tpu.dot_dimension_numbers<[1], [0], [0], [1], [0, 0, 1, 1], [], []>} : vector<160x128xbf16>, vector<128x128xbf16>, vector<160x128xf32> -> vector<160x128xf32>
    %c31_i32 = arith.constant 31 : i32
    %13 = tpu.dynamic_rotate %6 by %c31_i32 dim 1 : vector<10x32x128xf32>, i32 -> vector<10x32x128xf32>
    %14 = vector.extract_strided_slice %13 {offsets = [0, 0, 0], sizes = [10, 16, 128], strides = [1, 1, 1]} : vector<10x32x128xf32> to vector<10x16x128xf32>
    %15 = vector.shape_cast %14 : vector<10x16x128xf32> to vector<160x128xf32>
    %16 = arith.truncf %15 : vector<160x128xf32> to vector<160x128xbf16>
    %c0_6 = arith.constant 0 : index
    %c1 = arith.constant 1 : index
    %c0_7 = arith.constant 0 : index
    %c0_8 = arith.constant 0 : index
    %17 = vector.load %arg3[%c0_6, %c1, %c0_7, %c0_8] : memref<3x3x128x128xbf16, #tpu.memory_space<vmem>>, vector<1x1x128x128xbf16>
    %18 = vector.shape_cast %17 : vector<1x1x128x128xbf16> to vector<128x128xbf16>
    %cst_9 = arith.constant dense<0.000000e+00> : vector<160x128xf32>
    %19 = tpu.matmul %16, %18, %cst_9 {dimension_numbers = #tpu.dot_dimension_numbers<[1], [0], [0], [1], [0, 0, 1, 1], [], []>} : vector<160x128xbf16>, vector<128x128xbf16>, vector<160x128xf32> -> vector<160x128xf32>
    %20 = arith.addf %12, %19 : vector<160x128xf32>
    %c30_i32 = arith.constant 30 : i32
    %21 = tpu.dynamic_rotate %6 by %c30_i32 dim 1 : vector<10x32x128xf32>, i32 -> vector<10x32x128xf32>
    %22 = vector.extract_strided_slice %21 {offsets = [0, 0, 0], sizes = [10, 16, 128], strides = [1, 1, 1]} : vector<10x32x128xf32> to vector<10x16x128xf32>
    %23 = vector.shape_cast %22 : vector<10x16x128xf32> to vector<160x128xf32>
    %24 = arith.truncf %23 : vector<160x128xf32> to vector<160x128xbf16>
    %c0_10 = arith.constant 0 : index
    %c2 = arith.constant 2 : index
    %c0_11 = arith.constant 0 : index
    %c0_12 = arith.constant 0 : index
    %25 = vector.load %arg3[%c0_10, %c2, %c0_11, %c0_12] : memref<3x3x128x128xbf16, #tpu.memory_space<vmem>>, vector<1x1x128x128xbf16>
    %26 = vector.shape_cast %25 : vector<1x1x128x128xbf16> to vector<128x128xbf16>
    %cst_13 = arith.constant dense<0.000000e+00> : vector<160x128xf32>
    %27 = tpu.matmul %24, %26, %cst_13 {dimension_numbers = #tpu.dot_dimension_numbers<[1], [0], [0], [1], [0, 0, 1, 1], [], []>} : vector<160x128xbf16>, vector<128x128xbf16>, vector<160x128xf32> -> vector<160x128xf32>
    %28 = arith.addf %20, %27 : vector<160x128xf32>
    %c1_i32 = arith.constant 1 : i32
    %29 = arith.addi %1, %c1_i32 : i32
    %c0_14 = arith.constant 0 : index
    %30 = arith.index_cast %29 : i32 to index
    %c0_15 = arith.constant 0 : index
    %c0_16 = arith.constant 0 : index
    %31 = vector.load %arg2[%c0_14, %30, %c0_15, %c0_16] : memref<1x20x32x128xbf16, #tpu.memory_space<vmem>>, vector<1x10x32x128xbf16>
    %32 = vector.shape_cast %31 : vector<1x10x32x128xbf16> to vector<10x32x128xbf16>
    %33 = arith.extf %32 : vector<10x32x128xbf16> to vector<10x32x128xf32>
    %34 = vector.extract_strided_slice %33 {offsets = [0, 0, 0], sizes = [10, 16, 128], strides = [1, 1, 1]} : vector<10x32x128xf32> to vector<10x16x128xf32>
    %35 = vector.shape_cast %34 : vector<10x16x128xf32> to vector<160x128xf32>
    %36 = arith.truncf %35 : vector<160x128xf32> to vector<160x128xbf16>
    %c1_17 = arith.constant 1 : index
    %c0_18 = arith.constant 0 : index
    %c0_19 = arith.constant 0 : index
    %c0_20 = arith.constant 0 : index
    %37 = vector.load %arg3[%c1_17, %c0_18, %c0_19, %c0_20] : memref<3x3x128x128xbf16, #tpu.memory_space<vmem>>, vector<1x1x128x128xbf16>
    %38 = vector.shape_cast %37 : vector<1x1x128x128xbf16> to vector<128x128xbf16>
    %cst_21 = arith.constant dense<0.000000e+00> : vector<160x128xf32>
    %39 = tpu.matmul %36, %38, %cst_21 {dimension_numbers = #tpu.dot_dimension_numbers<[1], [0], [0], [1], [0, 0, 1, 1], [], []>} : vector<160x128xbf16>, vector<128x128xbf16>, vector<160x128xf32> -> vector<160x128xf32>
    %40 = arith.addf %28, %39 : vector<160x128xf32>
    %c31_i32_22 = arith.constant 31 : i32
    %41 = tpu.dynamic_rotate %33 by %c31_i32_22 dim 1 : vector<10x32x128xf32>, i32 -> vector<10x32x128xf32>
    %42 = vector.extract_strided_slice %41 {offsets = [0, 0, 0], sizes = [10, 16, 128], strides = [1, 1, 1]} : vector<10x32x128xf32> to vector<10x16x128xf32>
    %43 = vector.shape_cast %42 : vector<10x16x128xf32> to vector<160x128xf32>
    %44 = arith.truncf %43 : vector<160x128xf32> to vector<160x128xbf16>
    %c1_23 = arith.constant 1 : index
    %c1_24 = arith.constant 1 : index
    %c0_25 = arith.constant 0 : index
    %c0_26 = arith.constant 0 : index
    %45 = vector.load %arg3[%c1_23, %c1_24, %c0_25, %c0_26] : memref<3x3x128x128xbf16, #tpu.memory_space<vmem>>, vector<1x1x128x128xbf16>
    %46 = vector.shape_cast %45 : vector<1x1x128x128xbf16> to vector<128x128xbf16>
    %cst_27 = arith.constant dense<0.000000e+00> : vector<160x128xf32>
    %47 = tpu.matmul %44, %46, %cst_27 {dimension_numbers = #tpu.dot_dimension_numbers<[1], [0], [0], [1], [0, 0, 1, 1], [], []>} : vector<160x128xbf16>, vector<128x128xbf16>, vector<160x128xf32> -> vector<160x128xf32>
    %48 = arith.addf %40, %47 : vector<160x128xf32>
    %c30_i32_28 = arith.constant 30 : i32
    %49 = tpu.dynamic_rotate %33 by %c30_i32_28 dim 1 : vector<10x32x128xf32>, i32 -> vector<10x32x128xf32>
    %50 = vector.extract_strided_slice %49 {offsets = [0, 0, 0], sizes = [10, 16, 128], strides = [1, 1, 1]} : vector<10x32x128xf32> to vector<10x16x128xf32>
    %51 = vector.shape_cast %50 : vector<10x16x128xf32> to vector<160x128xf32>
    %52 = arith.truncf %51 : vector<160x128xf32> to vector<160x128xbf16>
    %c1_29 = arith.constant 1 : index
    %c2_30 = arith.constant 2 : index
    %c0_31 = arith.constant 0 : index
    %c0_32 = arith.constant 0 : index
    %53 = vector.load %arg3[%c1_29, %c2_30, %c0_31, %c0_32] : memref<3x3x128x128xbf16, #tpu.memory_space<vmem>>, vector<1x1x128x128xbf16>
    %54 = vector.shape_cast %53 : vector<1x1x128x128xbf16> to vector<128x128xbf16>
    %cst_33 = arith.constant dense<0.000000e+00> : vector<160x128xf32>
    %55 = tpu.matmul %52, %54, %cst_33 {dimension_numbers = #tpu.dot_dimension_numbers<[1], [0], [0], [1], [0, 0, 1, 1], [], []>} : vector<160x128xbf16>, vector<128x128xbf16>, vector<160x128xf32> -> vector<160x128xf32>
    %56 = arith.addf %48, %55 : vector<160x128xf32>
    %c2_i32 = arith.constant 2 : i32
    %57 = arith.addi %1, %c2_i32 : i32
    %c0_34 = arith.constant 0 : index
    %58 = arith.index_cast %57 : i32 to index
    %c0_35 = arith.constant 0 : index
    %c0_36 = arith.constant 0 : index
    %59 = vector.load %arg2[%c0_34, %58, %c0_35, %c0_36] : memref<1x20x32x128xbf16, #tpu.memory_space<vmem>>, vector<1x10x32x128xbf16>
    %60 = vector.shape_cast %59 : vector<1x10x32x128xbf16> to vector<10x32x128xbf16>
    %61 = arith.extf %60 : vector<10x32x128xbf16> to vector<10x32x128xf32>
    %62 = vector.extract_strided_slice %61 {offsets = [0, 0, 0], sizes = [10, 16, 128], strides = [1, 1, 1]} : vector<10x32x128xf32> to vector<10x16x128xf32>
    %63 = vector.shape_cast %62 : vector<10x16x128xf32> to vector<160x128xf32>
    %64 = arith.truncf %63 : vector<160x128xf32> to vector<160x128xbf16>
    %c2_37 = arith.constant 2 : index
    %c0_38 = arith.constant 0 : index
    %c0_39 = arith.constant 0 : index
    %c0_40 = arith.constant 0 : index
    %65 = vector.load %arg3[%c2_37, %c0_38, %c0_39, %c0_40] : memref<3x3x128x128xbf16, #tpu.memory_space<vmem>>, vector<1x1x128x128xbf16>
    %66 = vector.shape_cast %65 : vector<1x1x128x128xbf16> to vector<128x128xbf16>
    %cst_41 = arith.constant dense<0.000000e+00> : vector<160x128xf32>
    %67 = tpu.matmul %64, %66, %cst_41 {dimension_numbers = #tpu.dot_dimension_numbers<[1], [0], [0], [1], [0, 0, 1, 1], [], []>} : vector<160x128xbf16>, vector<128x128xbf16>, vector<160x128xf32> -> vector<160x128xf32>
    %68 = arith.addf %56, %67 : vector<160x128xf32>
    %c31_i32_42 = arith.constant 31 : i32
    %69 = tpu.dynamic_rotate %61 by %c31_i32_42 dim 1 : vector<10x32x128xf32>, i32 -> vector<10x32x128xf32>
    %70 = vector.extract_strided_slice %69 {offsets = [0, 0, 0], sizes = [10, 16, 128], strides = [1, 1, 1]} : vector<10x32x128xf32> to vector<10x16x128xf32>
    %71 = vector.shape_cast %70 : vector<10x16x128xf32> to vector<160x128xf32>
    %72 = arith.truncf %71 : vector<160x128xf32> to vector<160x128xbf16>
    %c2_43 = arith.constant 2 : index
    %c1_44 = arith.constant 1 : index
    %c0_45 = arith.constant 0 : index
    %c0_46 = arith.constant 0 : index
    %73 = vector.load %arg3[%c2_43, %c1_44, %c0_45, %c0_46] : memref<3x3x128x128xbf16, #tpu.memory_space<vmem>>, vector<1x1x128x128xbf16>
    %74 = vector.shape_cast %73 : vector<1x1x128x128xbf16> to vector<128x128xbf16>
    %cst_47 = arith.constant dense<0.000000e+00> : vector<160x128xf32>
    %75 = tpu.matmul %72, %74, %cst_47 {dimension_numbers = #tpu.dot_dimension_numbers<[1], [0], [0], [1], [0, 0, 1, 1], [], []>} : vector<160x128xbf16>, vector<128x128xbf16>, vector<160x128xf32> -> vector<160x128xf32>
    %76 = arith.addf %68, %75 : vector<160x128xf32>
    %c30_i32_48 = arith.constant 30 : i32
    %77 = tpu.dynamic_rotate %61 by %c30_i32_48 dim 1 : vector<10x32x128xf32>, i32 -> vector<10x32x128xf32>
    %78 = vector.extract_strided_slice %77 {offsets = [0, 0, 0], sizes = [10, 16, 128], strides = [1, 1, 1]} : vector<10x32x128xf32> to vector<10x16x128xf32>
    %79 = vector.shape_cast %78 : vector<10x16x128xf32> to vector<160x128xf32>
    %80 = arith.truncf %79 : vector<160x128xf32> to vector<160x128xbf16>
    %c2_49 = arith.constant 2 : index
    %c2_50 = arith.constant 2 : index
    %c0_51 = arith.constant 0 : index
    %c0_52 = arith.constant 0 : index
    %81 = vector.load %arg3[%c2_49, %c2_50, %c0_51, %c0_52] : memref<3x3x128x128xbf16, #tpu.memory_space<vmem>>, vector<1x1x128x128xbf16>
    %82 = vector.shape_cast %81 : vector<1x1x128x128xbf16> to vector<128x128xbf16>
    %cst_53 = arith.constant dense<0.000000e+00> : vector<160x128xf32>
    %83 = tpu.matmul %80, %82, %cst_53 {dimension_numbers = #tpu.dot_dimension_numbers<[1], [0], [0], [1], [0, 0, 1, 1], [], []>} : vector<160x128xbf16>, vector<128x128xbf16>, vector<160x128xf32> -> vector<160x128xf32>
    %84 = arith.addf %76, %83 : vector<160x128xf32>
    %c0_54 = arith.constant 0 : index
    %c0_55 = arith.constant 0 : index
    %85 = vector.load %arg4[%c0_54, %c0_55] : memref<1x128xf32, #tpu.memory_space<vmem>>, vector<1x128xf32>
    %86 = vector.broadcast %85 : vector<1x128xf32> to vector<160x128xf32>
    %87 = arith.addf %84, %86 : vector<160x128xf32>
    %cst_56 = arith.constant 0.000000e+00 : f32
    %88 = vector.broadcast %cst_56 : f32 to vector<160x128xf32>
    %89 = arith.maximumf %87, %88 : vector<160x128xf32>
    %cst_57 = arith.constant 0.000000e+00 : bf16
    %90 = vector.broadcast %cst_57 : bf16 to vector<10x16x128xbf16>
    %c0_58 = arith.constant 0 : index
    %c16 = arith.constant 16 : index
    %c0_59 = arith.constant 0 : index
    %91 = vector.load %arg8[%c0_58, %c16, %c0_59] : memref<10x32x128xbf16, #tpu.memory_space<vmem>>, vector<10x16x128xbf16>
    tpu.vector_store %arg8[%c0_58, %c16, %c0_59], %90 {strides = array<i32>} : memref<10x32x128xbf16, #tpu.memory_space<vmem>>, vector<10x16x128xbf16>,
    %92 = vector.shape_cast %89 : vector<160x128xf32> to vector<10x16x128xf32>
    %93 = arith.truncf %92 : vector<10x16x128xf32> to vector<10x16x128xbf16>
    %c0_60 = arith.constant 0 : index
    %c0_61 = arith.constant 0 : index
    %c0_62 = arith.constant 0 : index
    %94 = vector.load %arg8[%c0_60, %c0_61, %c0_62] : memref<10x32x128xbf16, #tpu.memory_space<vmem>>, vector<10x16x128xbf16>
    tpu.vector_store %arg8[%c0_60, %c0_61, %c0_62], %93 {strides = array<i32>} : memref<10x32x128xbf16, #tpu.memory_space<vmem>>, vector<10x16x128xbf16>,
    %c0_i32_63 = arith.constant 0 : i32
    %95 = arith.cmpi eq, %arg1, %c0_i32_63 : i32
    %96 = arith.extui %95 : i1 to i32
    %c0_i32_64 = arith.constant 0 : i32
    %97 = arith.cmpi ne, %96, %c0_i32_64 : i32
    scf.if %97 {
      %cst_134 = arith.constant 0.000000e+00 : bf16
      %184 = vector.broadcast %cst_134 : bf16 to vector<32x128xbf16>
      %c0_135 = arith.constant 0 : index
      %c0_136 = arith.constant 0 : index
      %c0_137 = arith.constant 0 : index
      %185 = vector.load %arg8[%c0_135, %c0_136, %c0_137] : memref<10x32x128xbf16, #tpu.memory_space<vmem>>, vector<1x32x128xbf16>
      %186 = vector.shape_cast %185 : vector<1x32x128xbf16> to vector<32x128xbf16>
      %187 = vector.shape_cast %184 : vector<32x128xbf16> to vector<1x32x128xbf16>
      tpu.vector_store %arg8[%c0_135, %c0_136, %c0_137], %187 {strides = array<i32>} : memref<10x32x128xbf16, #tpu.memory_space<vmem>>, vector<1x32x128xbf16>,
    } else {
    }
    %c1_i32_65 = arith.constant 1 : i32
    %98 = arith.cmpi eq, %arg1, %c1_i32_65 : i32
    %99 = arith.extui %98 : i1 to i32
    %c0_i32_66 = arith.constant 0 : i32
    %100 = arith.cmpi ne, %99, %c0_i32_66 : i32
    scf.if %100 {
      %cst_134 = arith.constant 0.000000e+00 : bf16
      %184 = vector.broadcast %cst_134 : bf16 to vector<32x128xbf16>
      %c9 = arith.constant 9 : index
      %c0_135 = arith.constant 0 : index
      %c0_136 = arith.constant 0 : index
      %185 = vector.load %arg8[%c9, %c0_135, %c0_136] : memref<10x32x128xbf16, #tpu.memory_space<vmem>>, vector<1x32x128xbf16>
      %186 = vector.shape_cast %185 : vector<1x32x128xbf16> to vector<32x128xbf16>
      %187 = vector.shape_cast %184 : vector<32x128xbf16> to vector<1x32x128xbf16>
      tpu.vector_store %arg8[%c9, %c0_135, %c0_136], %187 {strides = array<i32>} : memref<10x32x128xbf16, #tpu.memory_space<vmem>>, vector<1x32x128xbf16>,
    } else {
    }
    %c0_67 = arith.constant 0 : index
    %c0_68 = arith.constant 0 : index
    %c0_69 = arith.constant 0 : index
    %101 = vector.load %arg8[%c0_67, %c0_68, %c0_69] : memref<10x32x128xbf16, #tpu.memory_space<vmem>>, vector<8x32x128xbf16>
    %102 = arith.extf %101 : vector<8x32x128xbf16> to vector<8x32x128xf32>
    %c1_i32_70 = arith.constant 1 : i32
    %103 = tpu.dynamic_rotate %102 by %c1_i32_70 dim 1 : vector<8x32x128xf32>, i32 -> vector<8x32x128xf32>
    %104 = vector.extract_strided_slice %103 {offsets = [0, 0, 0], sizes = [8, 16, 128], strides = [1, 1, 1]} : vector<8x32x128xf32> to vector<8x16x128xf32>
    %105 = vector.shape_cast %104 : vector<8x16x128xf32> to vector<128x128xf32>
    %106 = arith.truncf %105 : vector<128x128xf32> to vector<128x128xbf16>
    %c0_71 = arith.constant 0 : index
    %c0_72 = arith.constant 0 : index
    %c0_73 = arith.constant 0 : index
    %c0_74 = arith.constant 0 : index
    %107 = vector.load %arg5[%c0_71, %c0_72, %c0_73, %c0_74] : memref<3x3x128x128xbf16, #tpu.memory_space<vmem>>, vector<1x1x128x128xbf16>
    %108 = vector.shape_cast %107 : vector<1x1x128x128xbf16> to vector<128x128xbf16>
    %cst_75 = arith.constant dense<0.000000e+00> : vector<128x128xf32>
    %109 = tpu.matmul %106, %108, %cst_75 {dimension_numbers = #tpu.dot_dimension_numbers<[1], [0], [0], [1], [0, 0, 1, 1], [], []>} : vector<128x128xbf16>, vector<128x128xbf16>, vector<128x128xf32> -> vector<128x128xf32>
    %110 = vector.extract_strided_slice %102 {offsets = [0, 0, 0], sizes = [8, 16, 128], strides = [1, 1, 1]} : vector<8x32x128xf32> to vector<8x16x128xf32>
    %111 = vector.shape_cast %110 : vector<8x16x128xf32> to vector<128x128xf32>
    %112 = arith.truncf %111 : vector<128x128xf32> to vector<128x128xbf16>
    %c0_76 = arith.constant 0 : index
    %c1_77 = arith.constant 1 : index
    %c0_78 = arith.constant 0 : index
    %c0_79 = arith.constant 0 : index
    %113 = vector.load %arg5[%c0_76, %c1_77, %c0_78, %c0_79] : memref<3x3x128x128xbf16, #tpu.memory_space<vmem>>, vector<1x1x128x128xbf16>
    %114 = vector.shape_cast %113 : vector<1x1x128x128xbf16> to vector<128x128xbf16>
    %cst_80 = arith.constant dense<0.000000e+00> : vector<128x128xf32>
    %115 = tpu.matmul %112, %114, %cst_80 {dimension_numbers = #tpu.dot_dimension_numbers<[1], [0], [0], [1], [0, 0, 1, 1], [], []>} : vector<128x128xbf16>, vector<128x128xbf16>, vector<128x128xf32> -> vector<128x128xf32>
    %116 = arith.addf %109, %115 : vector<128x128xf32>
    %c31_i32_81 = arith.constant 31 : i32
    %117 = tpu.dynamic_rotate %102 by %c31_i32_81 dim 1 : vector<8x32x128xf32>, i32 -> vector<8x32x128xf32>
    %118 = vector.extract_strided_slice %117 {offsets = [0, 0, 0], sizes = [8, 16, 128], strides = [1, 1, 1]} : vector<8x32x128xf32> to vector<8x16x128xf32>
    %119 = vector.shape_cast %118 : vector<8x16x128xf32> to vector<128x128xf32>
    %120 = arith.truncf %119 : vector<128x128xf32> to vector<128x128xbf16>
    %c0_82 = arith.constant 0 : index
    %c2_83 = arith.constant 2 : index
    %c0_84 = arith.constant 0 : index
    %c0_85 = arith.constant 0 : index
    %121 = vector.load %arg5[%c0_82, %c2_83, %c0_84, %c0_85] : memref<3x3x128x128xbf16, #tpu.memory_space<vmem>>, vector<1x1x128x128xbf16>
    %122 = vector.shape_cast %121 : vector<1x1x128x128xbf16> to vector<128x128xbf16>
    %cst_86 = arith.constant dense<0.000000e+00> : vector<128x128xf32>
    %123 = tpu.matmul %120, %122, %cst_86 {dimension_numbers = #tpu.dot_dimension_numbers<[1], [0], [0], [1], [0, 0, 1, 1], [], []>} : vector<128x128xbf16>, vector<128x128xbf16>, vector<128x128xf32> -> vector<128x128xf32>
    %124 = arith.addf %116, %123 : vector<128x128xf32>
    %c1_87 = arith.constant 1 : index
    %c0_88 = arith.constant 0 : index
    %c0_89 = arith.constant 0 : index
    %125 = vector.load %arg8[%c1_87, %c0_88, %c0_89] : memref<10x32x128xbf16, #tpu.memory_space<vmem>>, vector<8x32x128xbf16>
    %126 = arith.extf %125 : vector<8x32x128xbf16> to vector<8x32x128xf32>
    %c1_i32_90 = arith.constant 1 : i32
    %127 = tpu.dynamic_rotate %126 by %c1_i32_90 dim 1 : vector<8x32x128xf32>, i32 -> vector<8x32x128xf32>
    %128 = vector.extract_strided_slice %127 {offsets = [0, 0, 0], sizes = [8, 16, 128], strides = [1, 1, 1]} : vector<8x32x128xf32> to vector<8x16x128xf32>
    %129 = vector.shape_cast %128 : vector<8x16x128xf32> to vector<128x128xf32>
    %130 = arith.truncf %129 : vector<128x128xf32> to vector<128x128xbf16>
    %c1_91 = arith.constant 1 : index
    %c0_92 = arith.constant 0 : index
    %c0_93 = arith.constant 0 : index
    %c0_94 = arith.constant 0 : index
    %131 = vector.load %arg5[%c1_91, %c0_92, %c0_93, %c0_94] : memref<3x3x128x128xbf16, #tpu.memory_space<vmem>>, vector<1x1x128x128xbf16>
    %132 = vector.shape_cast %131 : vector<1x1x128x128xbf16> to vector<128x128xbf16>
    %cst_95 = arith.constant dense<0.000000e+00> : vector<128x128xf32>
    %133 = tpu.matmul %130, %132, %cst_95 {dimension_numbers = #tpu.dot_dimension_numbers<[1], [0], [0], [1], [0, 0, 1, 1], [], []>} : vector<128x128xbf16>, vector<128x128xbf16>, vector<128x128xf32> -> vector<128x128xf32>
    %134 = arith.addf %124, %133 : vector<128x128xf32>
    %135 = vector.extract_strided_slice %126 {offsets = [0, 0, 0], sizes = [8, 16, 128], strides = [1, 1, 1]} : vector<8x32x128xf32> to vector<8x16x128xf32>
    %136 = vector.shape_cast %135 : vector<8x16x128xf32> to vector<128x128xf32>
    %137 = arith.truncf %136 : vector<128x128xf32> to vector<128x128xbf16>
    %c1_96 = arith.constant 1 : index
    %c1_97 = arith.constant 1 : index
    %c0_98 = arith.constant 0 : index
    %c0_99 = arith.constant 0 : index
    %138 = vector.load %arg5[%c1_96, %c1_97, %c0_98, %c0_99] : memref<3x3x128x128xbf16, #tpu.memory_space<vmem>>, vector<1x1x128x128xbf16>
    %139 = vector.shape_cast %138 : vector<1x1x128x128xbf16> to vector<128x128xbf16>
    %cst_100 = arith.constant dense<0.000000e+00> : vector<128x128xf32>
    %140 = tpu.matmul %137, %139, %cst_100 {dimension_numbers = #tpu.dot_dimension_numbers<[1], [0], [0], [1], [0, 0, 1, 1], [], []>} : vector<128x128xbf16>, vector<128x128xbf16>, vector<128x128xf32> -> vector<128x128xf32>
    %141 = arith.addf %134, %140 : vector<128x128xf32>
    %c31_i32_101 = arith.constant 31 : i32
    %142 = tpu.dynamic_rotate %126 by %c31_i32_101 dim 1 : vector<8x32x128xf32>, i32 -> vector<8x32x128xf32>
    %143 = vector.extract_strided_slice %142 {offsets = [0, 0, 0], sizes = [8, 16, 128], strides = [1, 1, 1]} : vector<8x32x128xf32> to vector<8x16x128xf32>
    %144 = vector.shape_cast %143 : vector<8x16x128xf32> to vector<128x128xf32>
    %145 = arith.truncf %144 : vector<128x128xf32> to vector<128x128xbf16>
    %c1_102 = arith.constant 1 : index
    %c2_103 = arith.constant 2 : index
    %c0_104 = arith.constant 0 : index
    %c0_105 = arith.constant 0 : index
    %146 = vector.load %arg5[%c1_102, %c2_103, %c0_104, %c0_105] : memref<3x3x128x128xbf16, #tpu.memory_space<vmem>>, vector<1x1x128x128xbf16>
    %147 = vector.shape_cast %146 : vector<1x1x128x128xbf16> to vector<128x128xbf16>
    %cst_106 = arith.constant dense<0.000000e+00> : vector<128x128xf32>
    %148 = tpu.matmul %145, %147, %cst_106 {dimension_numbers = #tpu.dot_dimension_numbers<[1], [0], [0], [1], [0, 0, 1, 1], [], []>} : vector<128x128xbf16>, vector<128x128xbf16>, vector<128x128xf32> -> vector<128x128xf32>
    %149 = arith.addf %141, %148 : vector<128x128xf32>
    %c2_107 = arith.constant 2 : index
    %c0_108 = arith.constant 0 : index
    %c0_109 = arith.constant 0 : index
    %150 = vector.load %arg8[%c2_107, %c0_108, %c0_109] : memref<10x32x128xbf16, #tpu.memory_space<vmem>>, vector<8x32x128xbf16>
    %151 = arith.extf %150 : vector<8x32x128xbf16> to vector<8x32x128xf32>
    %c1_i32_110 = arith.constant 1 : i32
    %152 = tpu.dynamic_rotate %151 by %c1_i32_110 dim 1 : vector<8x32x128xf32>, i32 -> vector<8x32x128xf32>
    %153 = vector.extract_strided_slice %152 {offsets = [0, 0, 0], sizes = [8, 16, 128], strides = [1, 1, 1]} : vector<8x32x128xf32> to vector<8x16x128xf32>
    %154 = vector.shape_cast %153 : vector<8x16x128xf32> to vector<128x128xf32>
    %155 = arith.truncf %154 : vector<128x128xf32> to vector<128x128xbf16>
    %c2_111 = arith.constant 2 : index
    %c0_112 = arith.constant 0 : index
    %c0_113 = arith.constant 0 : index
    %c0_114 = arith.constant 0 : index
    %156 = vector.load %arg5[%c2_111, %c0_112, %c0_113, %c0_114] : memref<3x3x128x128xbf16, #tpu.memory_space<vmem>>, vector<1x1x128x128xbf16>
    %157 = vector.shape_cast %156 : vector<1x1x128x128xbf16> to vector<128x128xbf16>
    %cst_115 = arith.constant dense<0.000000e+00> : vector<128x128xf32>
    %158 = tpu.matmul %155, %157, %cst_115 {dimension_numbers = #tpu.dot_dimension_numbers<[1], [0], [0], [1], [0, 0, 1, 1], [], []>} : vector<128x128xbf16>, vector<128x128xbf16>, vector<128x128xf32> -> vector<128x128xf32>
    %159 = arith.addf %149, %158 : vector<128x128xf32>
    %160 = vector.extract_strided_slice %151 {offsets = [0, 0, 0], sizes = [8, 16, 128], strides = [1, 1, 1]} : vector<8x32x128xf32> to vector<8x16x128xf32>
    %161 = vector.shape_cast %160 : vector<8x16x128xf32> to vector<128x128xf32>
    %162 = arith.truncf %161 : vector<128x128xf32> to vector<128x128xbf16>
    %c2_116 = arith.constant 2 : index
    %c1_117 = arith.constant 1 : index
    %c0_118 = arith.constant 0 : index
    %c0_119 = arith.constant 0 : index
    %163 = vector.load %arg5[%c2_116, %c1_117, %c0_118, %c0_119] : memref<3x3x128x128xbf16, #tpu.memory_space<vmem>>, vector<1x1x128x128xbf16>
    %164 = vector.shape_cast %163 : vector<1x1x128x128xbf16> to vector<128x128xbf16>
    %cst_120 = arith.constant dense<0.000000e+00> : vector<128x128xf32>
    %165 = tpu.matmul %162, %164, %cst_120 {dimension_numbers = #tpu.dot_dimension_numbers<[1], [0], [0], [1], [0, 0, 1, 1], [], []>} : vector<128x128xbf16>, vector<128x128xbf16>, vector<128x128xf32> -> vector<128x128xf32>
    %166 = arith.addf %159, %165 : vector<128x128xf32>
    %c31_i32_121 = arith.constant 31 : i32
    %167 = tpu.dynamic_rotate %151 by %c31_i32_121 dim 1 : vector<8x32x128xf32>, i32 -> vector<8x32x128xf32>
    %168 = vector.extract_strided_slice %167 {offsets = [0, 0, 0], sizes = [8, 16, 128], strides = [1, 1, 1]} : vector<8x32x128xf32> to vector<8x16x128xf32>
    %169 = vector.shape_cast %168 : vector<8x16x128xf32> to vector<128x128xf32>
    %170 = arith.truncf %169 : vector<128x128xf32> to vector<128x128xbf16>
    %c2_122 = arith.constant 2 : index
    %c2_123 = arith.constant 2 : index
    %c0_124 = arith.constant 0 : index
    %c0_125 = arith.constant 0 : index
    %171 = vector.load %arg5[%c2_122, %c2_123, %c0_124, %c0_125] : memref<3x3x128x128xbf16, #tpu.memory_space<vmem>>, vector<1x1x128x128xbf16>
    %172 = vector.shape_cast %171 : vector<1x1x128x128xbf16> to vector<128x128xbf16>
    %cst_126 = arith.constant dense<0.000000e+00> : vector<128x128xf32>
    %173 = tpu.matmul %170, %172, %cst_126 {dimension_numbers = #tpu.dot_dimension_numbers<[1], [0], [0], [1], [0, 0, 1, 1], [], []>} : vector<128x128xbf16>, vector<128x128xbf16>, vector<128x128xf32> -> vector<128x128xf32>
    %174 = arith.addf %166, %173 : vector<128x128xf32>
    %c0_127 = arith.constant 0 : index
    %c0_128 = arith.constant 0 : index
    %175 = vector.load %arg6[%c0_127, %c0_128] : memref<1x128xf32, #tpu.memory_space<vmem>>, vector<1x128xf32>
    %176 = vector.broadcast %175 : vector<1x128xf32> to vector<128x128xf32>
    %177 = arith.addf %174, %176 : vector<128x128xf32>
    %cst_129 = arith.constant 0.000000e+00 : f32
    %178 = vector.broadcast %cst_129 : f32 to vector<128x128xf32>
    %179 = arith.maximumf %177, %178 : vector<128x128xf32>
    %180 = vector.shape_cast %179 : vector<128x128xf32> to vector<8x16x128xf32>
    %c0_130 = arith.constant 0 : index
    %c0_131 = arith.constant 0 : index
    %c0_132 = arith.constant 0 : index
    %c0_133 = arith.constant 0 : index
    %181 = vector.load %arg7[%c0_130, %c0_131, %c0_132, %c0_133] : memref<1x8x16x128xf32, #tpu.memory_space<vmem>>, vector<1x8x16x128xf32>
    %182 = vector.shape_cast %181 : vector<1x8x16x128xf32> to vector<8x16x128xf32>
    %183 = vector.shape_cast %180 : vector<8x16x128xf32> to vector<1x8x16x128xf32>
    tpu.vector_store %arg7[%c0_130, %c0_131, %c0_132, %c0_133], %183 {strides = array<i32>} : memref<1x8x16x128xf32, #tpu.memory_space<vmem>>, vector<1x8x16x128xf32>,
    return
  }
  func.func @transform_0(%arg0: i32, %arg1: i32) -> (i32, i32, i32, i32) {
    %c0_i32 = arith.constant 0 : i32
    %c0_i32_0 = arith.constant 0 : i32
    %c0_i32_1 = arith.constant 0 : i32
    %c0_i32_2 = arith.constant 0 : i32
    return %arg0, %c0_i32, %c0_i32_0, %c0_i32_1 : i32, i32, i32, i32
  }
  func.func @transform_1(%arg0: i32, %arg1: i32) -> (i32, i32, i32, i32) {
    %c0_i32 = arith.constant 0 : i32
    %c0_i32_0 = arith.constant 0 : i32
    %c0_i32_1 = arith.constant 0 : i32
    %c0_i32_2 = arith.constant 0 : i32
    %c0_i32_3 = arith.constant 0 : i32
    return %c0_i32, %c0_i32_0, %c0_i32_1, %c0_i32_2 : i32, i32, i32, i32
  }
  func.func @transform_2(%arg0: i32, %arg1: i32) -> (i32, i32) {
    %c0_i32 = arith.constant 0 : i32
    %c0_i32_0 = arith.constant 0 : i32
    %c0_i32_1 = arith.constant 0 : i32
    return %c0_i32, %c0_i32_0 : i32, i32
  }
  func.func @transform_3(%arg0: i32, %arg1: i32) -> (i32, i32, i32, i32) {
    %c0_i32 = arith.constant 0 : i32
    %c0_i32_0 = arith.constant 0 : i32
    %c0_i32_1 = arith.constant 0 : i32
    %c0_i32_2 = arith.constant 0 : i32
    %c0_i32_3 = arith.constant 0 : i32
    return %c0_i32, %c0_i32_0, %c0_i32_1, %c0_i32_2 : i32, i32, i32, i32
  }
  func.func @transform_4(%arg0: i32, %arg1: i32) -> (i32, i32) {
    %c0_i32 = arith.constant 0 : i32
    %c0_i32_0 = arith.constant 0 : i32
    %c0_i32_1 = arith.constant 0 : i32
    return %c0_i32, %c0_i32_0 : i32, i32
  }
  func.func @transform_5(%arg0: i32, %arg1: i32) -> (i32, i32, i32, i32) {
    %c0_i32 = arith.constant 0 : i32
    %c0_i32_0 = arith.constant 0 : i32
    %c0_i32_1 = arith.constant 0 : i32
    return %arg0, %arg1, %c0_i32, %c0_i32_0 : i32, i32, i32, i32
  }
}

</mosaic_0001>

<llo_original>
// kernel: double_conv.1
$region0: #{double_conv.1}
  #allocation0 [shape = 'u32[]', space=smem, size = 0x4, offset = 0x4, fixed_abs, tag = 'smem constant byte address 0x4 - core index']
  #allocation1 [shape = 'u32[144,128]{1,0:T(1,128)}', space=vmem, size = 0x12000, scoped, tag = 'internal scratch']
  #allocation2 [shape = 'bf16[10,32,128]{2,1,0:T(16,128)(2,1)}', space=vmem, size = 0x14000, scoped, tag = 'scratch operand']
  %s0 = inlined_call_operand.vmem [shape: bf16[2,20,32,128], index: 0, kind: input, shape index: {}]
  %s1 = inlined_call_operand.vmem [shape: bf16[3,3,128,128], index: 1, kind: input, shape index: {}]
  %s2 = inlined_call_operand.vmem [shape: f32[1,128], index: 2, kind: input, shape index: {}]
  %s3 = inlined_call_operand.vmem [shape: bf16[3,3,128,128], index: 3, kind: input, shape index: {}]
  %s4 = inlined_call_operand.vmem [shape: f32[1,128], index: 4, kind: input, shape index: {}]
  %s5 = inlined_call_operand.vmem [shape: f32[2,16,16,128], index: 5, kind: output, shape index: {}]
  %s6 = sld [smem:[#allocation0]]
  $region61: #{double_conv.1} parent=0
    _
  %s8 = ssub.s32 1, %s6
  %s9 = scalar_select 0, %s8, %s6
  loop: start=0, step=1, limit=6
  $region2: #{double_conv.1} parent=0 // loop_pre_header
    _
  $region3: #{double_conv.1} parent=0 // loop_header
    %s11 = sphi 0, %s15
    %p12 = scmp.ge.s32.totalorder %s11, 6
    %s18 = sphi 0, %s30
    %s19 = sphi 0, %s26
    %s20 = sphi 0, %s18
    %s21 = sphi 0, %s19
    %s22 = sphi 0, %s20
    %s23 = sphi 0, %s21
    %s33 = sphi 0, %s35
    %s36 = sphi 0, %s33
    %s37 = sphi 0, %s36
    %s53 = sphi 0, %s37
    %s57 = sphi 0, %s57
    %s59 = sphi 0, %s57
    %s60 = sphi 0, %s59
    %s74 = sphi 0, %s60
    %s78 = sphi 0, %s78
    %s80 = sphi 0, %s78
    %s81 = sphi 0, %s80
    %s95 = sphi 0, %s81
    %s99 = sphi 0, %s99
    %s101 = sphi 0, %s99
    %s102 = sphi 0, %s101
    %s116 = sphi 0, %s102
    %s120 = sphi 0, %s120
    %s122 = sphi 0, %s120
    %s123 = sphi 0, %s122
    %s137 = sphi 0, %s123
    %s145 = sphi 0, %s147
    %s148 = sphi 0, %s145
    %s149 = sphi 0, %s148
    %s165 = sphi 0, %s149
  $region4: #{double_conv.1} parent=0 // loop_header_branch
    %14 = sbr.rel (%p12) target = $region8
  $region5: #{double_conv.1} parent=0 // loop_body
    %s16 = ssub.s32 %s11, 1
    %s17 = ssub.s32 %s11, 2
    %s24 = sadd.s32 1, %s19
    %p25 = scmp.ge.s32.totalorder %s24, 2
    %s26 = scalar_select %p25, 0, %s24
    %s27 = sadd.s32 1, %s18
    %s28 = scalar_select %p25, %s27, %s18
    %p29 = scmp.ge.s32.totalorder %s28, 2
    %s30 = scalar_select %p29, 0, %s28
    %s31 = ssub.s32 %s18, %s30
    %p32 = scmp.eq.s32.totalorder %s31, 0
    %s34 = sadd.s32 %s33, 1
    %s35 = scalar_select %p32, %s33, %s34
    %p38 = pneg %p32
    %p39 = scmp.eq.s32.totalorder %s11, 3
    %p40 = por %p38, %p39
    %p41 = scmp.ne.s32.totalorder %s33, %s36
    %p42 = scmp.eq.s32.totalorder %s11, 0
    %p43 = por %p41, %p42
    %p44 = scmp.ne.s32.totalorder %s33, %s36
    %p45 = scmp.eq.s32.totalorder %s16, 3
    %p46 = por %p44, %p45
    %p47 = scmp.ne.s32.totalorder %s36, %s37
    %p48 = scmp.eq.s32.totalorder %s16, 0
    %p49 = por %p47, %p48
    %p50 = scmp.ne.s32.totalorder %s36, %s37
    %p51 = scmp.eq.s32.totalorder %s17, 3
    %p52 = por %p50, %p51
    %p54 = scmp.ne.s32.totalorder %s37, %s53
    %p55 = scmp.eq.s32.totalorder %s17, 0
    %p56 = por %p54, %p55
    %s58 = sadd.s32 %s57, 1
    %p61 = scmp.eq.s32.totalorder %s11, 3
    %p62 = scmp.ne.s32.totalorder %s57, %s59
    %p63 = scmp.eq.s32.totalorder %s11, 0
    %p64 = por %p62, %p63
    %p65 = scmp.ne.s32.totalorder %s57, %s59
    %p66 = scmp.eq.s32.totalorder %s16, 3
    %p67 = por %p65, %p66
    %p68 = scmp.ne.s32.totalorder %s59, %s60
    %p69 = scmp.eq.s32.totalorder %s16, 0
    %p70 = por %p68, %p69
    %p71 = scmp.ne.s32.totalorder %s59, %s60
    %p72 = scmp.eq.s32.totalorder %s17, 3
    %p73 = por %p71, %p72
    %p75 = scmp.ne.s32.totalorder %s60, %s74
    %p76 = scmp.eq.s32.totalorder %s17, 0
    %p77 = por %p75, %p76
    %s79 = sadd.s32 %s78, 1
    %p82 = scmp.eq.s32.totalorder %s11, 3
    %p83 = scmp.ne.s32.totalorder %s78, %s80
    %p84 = scmp.eq.s32.totalorder %s11, 0
    %p85 = por %p83, %p84
    %p86 = scmp.ne.s32.totalorder %s78, %s80
    %p87 = scmp.eq.s32.totalorder %s16, 3
    %p88 = por %p86, %p87
    %p89 = scmp.ne.s32.totalorder %s80, %s81
    %p90 = scmp.eq.s32.totalorder %s16, 0
    %p91 = por %p89, %p90
    %p92 = scmp.ne.s32.totalorder %s80, %s81
    %p93 = scmp.eq.s32.totalorder %s17, 3
    %p94 = por %p92, %p93
    %p96 = scmp.ne.s32.totalorder %s81, %s95
    %p97 = scmp.eq.s32.totalorder %s17, 0
    %p98 = por %p96, %p97
    %s100 = sadd.s32 %s99, 1
    %p103 = scmp.eq.s32.totalorder %s11, 3
    %p104 = scmp.ne.s32.totalorder %s99, %s101
    %p105 = scmp.eq.s32.totalorder %s11, 0
    %p106 = por %p104, %p105
    %p107 = scmp.ne.s32.totalorder %s99, %s101
    %p108 = scmp.eq.s32.totalorder %s16, 3
    %p109 = por %p107, %p108
    %p110 = scmp.ne.s32.totalorder %s101, %s102
    %p111 = scmp.eq.s32.totalorder %s16, 0
    %p112 = por %p110, %p111
    %p113 = scmp.ne.s32.totalorder %s101, %s102
    %p114 = scmp.eq.s32.totalorder %s17, 3
    %p115 = por %p113, %p114
    %p117 = scmp.ne.s32.totalorder %s102, %s116
    %p118 = scmp.eq.s32.totalorder %s17, 0
    %p119 = por %p117, %p118
    %s121 = sadd.s32 %s120, 1
    %p124 = scmp.eq.s32.totalorder %s11, 3
    %p125 = scmp.ne.s32.totalorder %s120, %s122
    %p126 = scmp.eq.s32.totalorder %s11, 0
    %p127 = por %p125, %p126
    %p128 = scmp.ne.s32.totalorder %s120, %s122
    %p129 = scmp.eq.s32.totalorder %s16, 3
    %p130 = por %p128, %p129
    %p131 = scmp.ne.s32.totalorder %s122, %s123
    %p132 = scmp.eq.s32.totalorder %s16, 0
    %p133 = por %p131, %p132
    %p134 = scmp.ne.s32.totalorder %s122, %s123
    %p135 = scmp.eq.s32.totalorder %s17, 3
    %p136 = por %p134, %p135
    %p138 = scmp.ne.s32.totalorder %s123, %s137
    %p139 = scmp.eq.s32.totalorder %s17, 0
    %p140 = por %p138, %p139
    %s141 = ssub.s32 %s18, %s30
    %s142 = ssub.s32 %s19, %s26
    %s143 = sor.u32 %s141, %s142
    %p144 = scmp.eq.s32.totalorder %s143, 0
    %s146 = sadd.s32 %s145, 1
    %s147 = scalar_select %p144, %s145, %s146
    %p150 = pneg %p144
    %p151 = scmp.eq.s32.totalorder %s11, 3
    %p152 = por %p150, %p151
    %p153 = scmp.ne.s32.totalorder %s145, %s148
    %p154 = scmp.eq.s32.totalorder %s11, 0
    %p155 = por %p153, %p154
    %p156 = scmp.ne.s32.totalorder %s145, %s148
    %p157 = scmp.eq.s32.totalorder %s16, 3
    %p158 = por %p156, %p157
    %p159 = scmp.ne.s32.totalorder %s148, %s149
    %p160 = scmp.eq.s32.totalorder %s16, 0
    %p161 = por %p159, %p160
    %p162 = scmp.ne.s32.totalorder %s148, %s149
    %p163 = scmp.eq.s32.totalorder %s17, 3
    %p164 = por %p162, %p163
    %p166 = scmp.ne.s32.totalorder %s149, %s165
    %p167 = scmp.eq.s32.totalorder %s17, 0
    %p168 = por %p166, %p167
    %p169 = scmp.le.s32.totalorder 1, %s11
    %p170 = scmp.lt.s32.totalorder %s11, 5
    %p171 = pnand %p169, %p170
    %p172 = pneg %p171
    // Predicated region
    $region9: #{double_conv.1} parent=5 // pred_check
      _
    $region10: #{double_conv.1} parent=5 // pred_check_branch
      %174 = sbr.rel (%p171) target = $region12
    $region11: #{double_conv.1} parent=5 // pred_region
      %s175 = ssub.s32 %s11, 1
      // Predicated region
      $region13: #{double_conv.1} parent=11 // pred_check
        %p176 = pneg %p70
      $region14: #{double_conv.1} parent=11 // pred_check_branch
        %178 = sbr.rel (%p176) target = $region16
      $region15: #{double_conv.1} parent=11 // pred_region
        _
      $region16: #{double_conv.1} parent=11 // pred_fallthru
        _
      // Predicated region
      $region17: #{double_conv.1} parent=11 // pred_check
        %p179 = pneg %p91
      $region18: #{double_conv.1} parent=11 // pred_check_branch
        %181 = sbr.rel (%p179) target = $region20
      $region19: #{double_conv.1} parent=11 // pred_region
        _
      $region20: #{double_conv.1} parent=11 // pred_fallthru
        _
      // Predicated region
      $region21: #{double_conv.1} parent=11 // pred_check
        %p182 = pneg %p112
      $region22: #{double_conv.1} parent=11 // pred_check_branch
        %184 = sbr.rel (%p182) target = $region24
      $region23: #{double_conv.1} parent=11 // pred_region
        _
      $region24: #{double_conv.1} parent=11 // pred_fallthru
        _
      // Predicated region
      $region25: #{double_conv.1} parent=11 // pred_check
        %p185 = pneg %p133
      $region26: #{double_conv.1} parent=11 // pred_check_branch
        %187 = sbr.rel (%p185) target = $region28
      $region27: #{double_conv.1} parent=11 // pred_region
        _
      $region28: #{double_conv.1} parent=11 // pred_fallthru
        _
    $region12: #{double_conv.1} parent=5 // pred_fallthru
      _
    %p188 = scmp.lt.s32.totalorder %s11, 4
    // Predicated region
    $region29: #{double_conv.1} parent=5 // pred_check
      %p189 = pneg %p188
    $region30: #{double_conv.1} parent=5 // pred_check_branch
      %191 = sbr.rel (%p189) target = $region32
    $region31: #{double_conv.1} parent=5 // pred_region
      // Predicated region
      $region33: #{double_conv.1} parent=31 // pred_check
        %p192 = pneg %p43
      $region34: #{double_conv.1} parent=31 // pred_check_branch
        %194 = sbr.rel (%p192) target = $region36
      $region35: #{double_conv.1} parent=31 // pred_region
        %p195 = scmp.lt.s32.totalorder %s18, 1
        %s196 = scalar_select %p195, %s18, 1
        %s197 = smul.addr %s196, 80
        %s198 = smul.addr %s197, 4
        %s199 = scalar_lea.vmem %s0, %s198
      $region36: #{double_conv.1} parent=31 // pred_fallthru
        _
    $region32: #{double_conv.1} parent=5 // pred_fallthru
      _
    %p200 = scmp.le.s32.totalorder 1, %s11
    %p201 = scmp.lt.s32.totalorder %s11, 5
    %p202 = pnand %p200, %p201
    %p203 = pneg %p202
    // Predicated region
    $region37: #{double_conv.1} parent=5 // pred_check
      _
    $region38: #{double_conv.1} parent=5 // pred_check_branch
      %205 = sbr.rel (%p202) target = $region40
    $region39: #{double_conv.1} parent=5 // pred_region
      %s206 = ssub.s32 %s11, 1
      %p207 = scmp.lt.s32.totalorder %s20, 1
      %s208 = scalar_select %p207, %s20, 1
      %s209 = smul.addr %s208, 80
      %s210 = smul.addr %s209, 4
      %s211 = scalar_lea.vmem %s0, %s210
      %p212 = pneg %p49
      %p213 = pneg %p46
      %p214 = pneg %p70
      %p215 = pneg %p67
      %p216 = pneg %p91
      %p217 = pneg %p88
      %p218 = pneg %p112
      %p219 = pneg %p109
      %p220 = pneg %p133
      %p221 = pneg %p130
      %p222 = pneg %p161
      %p223 = pneg %p158
      %s224 = smul.u32 8, %s21
      %p225 = scmp.lt.s32.totalorder %s20, 1
      %s226 = scalar_select %p225, %s20, 1
      %p227 = scmp.lt.s32.totalorder %s224, 15
      %s228 = scalar_select %p227, %s224, 15
      %s229 = smul.addr %s228, 2
      %s230 = smul.addr %s226, 32
      %s231 = sadd.s32 %s229, %s230
      %s232 = smul.addr %s231, 8
      %s233 = scalar_lea.vmem %s5, %s232
      %p234 = scmp.lt.s32.totalorder %s20, 1
      %s235 = scalar_select %p234, %s20, 1
      %s236 = smul.addr %s235, 80
      %s237 = smul.addr %s236, 4
      %s238 = scalar_lea.vmem %s0, %s237
      %s239 = smul.u32 8, %s21
      %p240 = scmp.lt.s32.totalorder %s20, 1
      %s241 = scalar_select %p240, %s20, 1
      %p242 = scmp.lt.s32.totalorder %s239, 15
      %s243 = scalar_select %p242, %s239, 15
      %s244 = smul.addr %s243, 2
      %s245 = smul.addr %s241, 32
      %s246 = sadd.s32 %s244, %s245
      %s247 = smul.addr %s246, 8
      %s248 = scalar_lea.vmem %s5, %s247
      %s249 = smul.u32 8, %s21
      %s251 = smul.u32 %s21, 8
      %s252 = smul.u32 %s251, 4
      %s253 = smul.addr %s252, 4
      %s254 = scalar_lea.vmem %s238, %s253
      %v255 = vld [vmem:[%s254] sm:$0xf]
      %v256 = vld [vmem:[%s254 + $0x4] sm:$0xf]
      %v257 = vld [vmem:[%s254 + $0x8] sm:$0xf]
      %v258 = vld [vmem:[%s254 + $0x10] sm:$0xf]
      %v259 = vld [vmem:[%s254 + $0x14] sm:$0xf]
      %v260 = vld [vmem:[%s254 + $0x18] sm:$0xf]
      %v261 = vld [vmem:[%s254 + $0x20] sm:$0xf]
      %v262 = vld [vmem:[%s254 + $0x24] sm:$0xf]
      %v263 = vld [vmem:[%s254 + $0x28] sm:$0xf]
      %v264 = vld [vmem:[%s254 + $0x30] sm:$0xf]
      %v265 = vld [vmem:[%s254 + $0x34] sm:$0xf]
      %v266 = vld [vmem:[%s254 + $0x38] sm:$0xf]
      %v267 = vld [vmem:[%s254 + $0x40] sm:$0xf]
      %v268 = vld [vmem:[%s254 + $0x44] sm:$0xf]
      %v269 = vld [vmem:[%s254 + $0x48] sm:$0xf]
      %v270 = vld [vmem:[%s254 + $0x50] sm:$0xf]
      %v271 = vld [vmem:[%s254 + $0x54] sm:$0xf]
      %v272 = vld [vmem:[%s254 + $0x58] sm:$0xf]
      %v273 = vld [vmem:[%s254 + $0x60] sm:$0xf]
      %v274 = vld [vmem:[%s254 + $0x64] sm:$0xf]
      %v275 = vld [vmem:[%s254 + $0x68] sm:$0xf]
      %v276 = vld [vmem:[%s254 + $0x70] sm:$0xf]
      %v277 = vld [vmem:[%s254 + $0x74] sm:$0xf]
      %v278 = vld [vmem:[%s254 + $0x78] sm:$0xf]
      %v279 = vld [vmem:[%s254 + $0x80] sm:$0xf]
      %v280 = vld [vmem:[%s254 + $0x84] sm:$0xf]
      %v281 = vld [vmem:[%s254 + $0x88] sm:$0xf]
      %v282 = vld [vmem:[%s254 + $0x90] sm:$0xf]
      %v283 = vld [vmem:[%s254 + $0x94] sm:$0xf]
      %v284 = vld [vmem:[%s254 + $0x98] sm:$0xf]
      %v285 = vunpack.c.l.bf16 %v255
      %v286 = vunpack.c.l.bf16 %v256
      %v287 = vunpack.c.l.bf16 %v257
      %v288 = vunpack.c.l.bf16 %v258
      %v289 = vunpack.c.l.bf16 %v259
      %v290 = vunpack.c.l.bf16 %v260
      %v291 = vunpack.c.l.bf16 %v261
      %v292 = vunpack.c.l.bf16 %v262
      %v293 = vunpack.c.l.bf16 %v263
      %v294 = vunpack.c.l.bf16 %v264
      %v295 = vunpack.c.l.bf16 %v265
      %v296 = vunpack.c.l.bf16 %v266
      %v297 = vunpack.c.l.bf16 %v267
      %v298 = vunpack.c.l.bf16 %v268
      %v299 = vunpack.c.l.bf16 %v269
      %v300 = vunpack.c.l.bf16 %v270
      %v301 = vunpack.c.l.bf16 %v271
      %v302 = vunpack.c.l.bf16 %v272
      %v303 = vunpack.c.l.bf16 %v273
      %v304 = vunpack.c.l.bf16 %v274
      %v305 = vunpack.c.l.bf16 %v275
      %v306 = vunpack.c.l.bf16 %v276
      %v307 = vunpack.c.l.bf16 %v277
      %v308 = vunpack.c.l.bf16 %v278
      %v309 = vunpack.c.l.bf16 %v279
      %v310 = vunpack.c.l.bf16 %v280
      %v311 = vunpack.c.l.bf16 %v281
      %v312 = vunpack.c.l.bf16 %v282
      %v313 = vunpack.c.l.bf16 %v283
      %v314 = vunpack.c.l.bf16 %v284
      %v315 = vpack.c.bf16 %v286, %v285
      %v316 = vpack.c.bf16 %v289, %v288
      %v317 = vpack.c.bf16 %v292, %v291
      %v318 = vpack.c.bf16 %v295, %v294
      %v319 = vpack.c.bf16 %v298, %v297
      %v320 = vpack.c.bf16 %v301, %v300
      %v321 = vpack.c.bf16 %v304, %v303
      %v322 = vpack.c.bf16 %v307, %v306
      %v323 = vpack.c.bf16 %v310, %v309
      %v324 = vpack.c.bf16 %v313, %v312
      %v325 = vld [vmem:[%s1] sm:$0xf]
      %v326 = vld [vmem:[%s1 + $0x4] sm:$0xf]
      %v327 = vld [vmem:[%s1 + $0x8] sm:$0xf]
      %v328 = vld [vmem:[%s1 + $0xc] sm:$0xf]
      %v329 = vld [vmem:[%s1 + $0x10] sm:$0xf]
      %v330 = vld [vmem:[%s1 + $0x14] sm:$0xf]
      %v331 = vld [vmem:[%s1 + $0x18] sm:$0xf]
      %v332 = vld [vmem:[%s1 + $0x1c] sm:$0xf]
      %v333 = vld [vmem:[%s1 + $0x20] sm:$0xf]
      %v334 = vld [vmem:[%s1 + $0x24] sm:$0xf]
      %v335 = vld [vmem:[%s1 + $0x28] sm:$0xf]
      %v336 = vld [vmem:[%s1 + $0x2c] sm:$0xf]
      %v337 = vld [vmem:[%s1 + $0x30] sm:$0xf]
      %v338 = vld [vmem:[%s1 + $0x34] sm:$0xf]
      %v339 = vld [vmem:[%s1 + $0x38] sm:$0xf]
      %v340 = vld [vmem:[%s1 + $0x3c] sm:$0xf]
      %v341 = vrot.slane %v285, 1
      %v342 = vrot.slane %v288, 1
      %v343 = vrot.slane %v291, 1
      %v344 = vrot.slane %v294, 1
      %v345 = vrot.slane %v297, 1
      %v346 = vrot.slane %v300, 1
      %v347 = vrot.slane %v303, 1
      %v348 = vrot.slane %v306, 1
      %v349 = vrot.slane %v309, 1
      %v350 = vrot.slane %v312, 1
      %v351 = vrot.slane %v286, 1
      %v352 = vrot.slane %v289, 1
      %v353 = vrot.slane %v292, 1
      %v354 = vrot.slane %v295, 1
      %v355 = vrot.slane %v298, 1
      %v356 = vrot.slane %v301, 1
      %v357 = vrot.slane %v304, 1
      %v358 = vrot.slane %v307, 1
      %v359 = vrot.slane %v310, 1
      %v360 = vrot.slane %v313, 1
      %v361 = vrot.slane %v287, 1
      %v362 = vrot.slane %v290, 1
      %v363 = vrot.slane %v293, 1
      %v364 = vrot.slane %v296, 1
      %v365 = vrot.slane %v299, 1
      %v366 = vrot.slane %v302, 1
      %v367 = vrot.slane %v305, 1
      %v368 = vrot.slane %v308, 1
      %v369 = vrot.slane %v311, 1
      %v370 = vrot.slane %v314, 1
      %v371 = vlaneseq
      %v372 = vshrl.u32 %v371, 7
      %vm373 = vcmp.lt.s32.totalorder %v372, 7
      %v374 = vsel %vm373, %v351, %v361
      %v375 = vsel %vm373, %v352, %v362
      %v376 = vsel %vm373, %v353, %v363
      %v377 = vsel %vm373, %v354, %v364
      %v378 = vsel %vm373, %v355, %v365
      %v379 = vsel %vm373, %v356, %v366
      %v380 = vsel %vm373, %v357, %v367
      %v381 = vsel %vm373, %v358, %v368
      %v382 = vsel %vm373, %v359, %v369
      %v383 = vsel %vm373, %v360, %v370
      %v384 = vsel %vm373, %v341, %v351
      %v385 = vsel %vm373, %v342, %v352
      %v386 = vsel %vm373, %v343, %v353
      %v387 = vsel %vm373, %v344, %v354
      %v388 = vsel %vm373, %v345, %v355
      %v389 = vsel %vm373, %v346, %v356
      %v390 = vsel %vm373, %v347, %v357
      %v391 = vsel %vm373, %v348, %v358
      %v392 = vsel %vm373, %v349, %v359
      %v393 = vsel %vm373, %v350, %v360
      %v394 = vpack.c.bf16 %v374, %v384
      %v395 = vpack.c.bf16 %v375, %v385
      %v396 = vpack.c.bf16 %v376, %v386
      %v397 = vpack.c.bf16 %v377, %v387
      %v398 = vpack.c.bf16 %v378, %v388
      %v399 = vpack.c.bf16 %v379, %v389
      %v400 = vpack.c.bf16 %v380, %v390
      %v401 = vpack.c.bf16 %v381, %v391
      %v402 = vpack.c.bf16 %v382, %v392
      %v403 = vpack.c.bf16 %v383, %v393
      %s404 = scalar_lea.vmem %s1, 64
      %v405 = vld [vmem:[%s404] sm:$0xf]
      %v406 = vld [vmem:[%s404 + $0x4] sm:$0xf]
      %v407 = vld [vmem:[%s404 + $0x8] sm:$0xf]
      %v408 = vld [vmem:[%s404 + $0xc] sm:$0xf]
      %v409 = vld [vmem:[%s404 + $0x10] sm:$0xf]
      %v410 = vld [vmem:[%s404 + $0x14] sm:$0xf]
      %v411 = vld [vmem:[%s404 + $0x18] sm:$0xf]
      %v412 = vld [vmem:[%s404 + $0x1c] sm:$0xf]
      %v413 = vld [vmem:[%s404 + $0x20] sm:$0xf]
      %v414 = vld [vmem:[%s404 + $0x24] sm:$0xf]
      %v415 = vld [vmem:[%s404 + $0x28] sm:$0xf]
      %v416 = vld [vmem:[%s404 + $0x2c] sm:$0xf]
      %v417 = vld [vmem:[%s404 + $0x30] sm:$0xf]
      %v418 = vld [vmem:[%s404 + $0x34] sm:$0xf]
      %v419 = vld [vmem:[%s404 + $0x38] sm:$0xf]
      %v420 = vld [vmem:[%s404 + $0x3c] sm:$0xf]
      %v437 = vunpack.c.l.b16 %v405
      %v438 = vunpack.c.l.b16 %v406
      %v439 = vunpack.c.l.b16 %v407
      %v440 = vunpack.c.l.b16 %v408
      %v441 = vunpack.c.l.b16 %v409
      %v442 = vunpack.c.l.b16 %v410
      %v443 = vunpack.c.l.b16 %v411
      %v444 = vunpack.c.l.b16 %v412
      %v445 = vunpack.c.l.b16 %v413
      %v446 = vunpack.c.l.b16 %v414
      %v447 = vunpack.c.l.b16 %v415
      %v448 = vunpack.c.l.b16 %v416
      %v449 = vunpack.c.l.b16 %v417
      %v450 = vunpack.c.l.b16 %v418
      %v451 = vunpack.c.l.b16 %v419
      %v452 = vunpack.c.l.b16 %v420
      %v453 = vpack.c.b16 %v438, %v437
      %v454 = vpack.c.b16 %v440, %v439
      %v455 = vpack.c.b16 %v442, %v441
      %v456 = vpack.c.b16 %v444, %v443
      %v457 = vpack.c.b16 %v446, %v445
      %v458 = vpack.c.b16 %v448, %v447
      %v459 = vpack.c.b16 %v450, %v449
      %v460 = vpack.c.b16 %v452, %v451
      %469 = vmatprep.subr.bf16.mxu0 0
      %470 = vmatpush1.bf16.msra.mxu0 %v453
      %471 = vmatprep.subr.bf16.mxu0 0
      %472 = vmatpush1.bf16.msra.mxu0 %v454
      %473 = vmatprep.subr.bf16.mxu0 0
      %474 = vmatpush1.bf16.msra.mxu0 %v455
      %475 = vmatprep.subr.bf16.mxu0 0
      %476 = vmatpush1.bf16.msra.mxu0 %v456
      %477 = vmatprep.subr.bf16.mxu0 0
      %478 = vmatpush1.bf16.msra.mxu0 %v457
      %479 = vmatprep.subr.bf16.mxu0 0
      %480 = vmatpush1.bf16.msra.mxu0 %v458
      %481 = vmatprep.subr.bf16.mxu0 0
      %482 = vmatpush1.bf16.msra.mxu0 %v459
      %483 = vmatprep.subr.bf16.mxu0 0
      %484 = vmatpush1.bf16.msra.mxu0 %v460
      %485 = vmatprep.subr.bf16.mxu0 0
      %486 = vmatpush1.bf16.msra.mxu0 0
      %487 = vmatprep.subr.bf16.mxu0 0
      %488 = vmatpush1.bf16.msra.mxu0 0
      %489 = vmatprep.subr.bf16.mxu0 0
      %490 = vmatpush1.bf16.msra.mxu0 0
      %491 = vmatprep.subr.bf16.mxu0 0
      %492 = vmatpush1.bf16.msra.mxu0 0
      %493 = vmatprep.subr.bf16.mxu0 0
      %494 = vmatpush1.bf16.msra.mxu0 0
      %495 = vmatprep.subr.bf16.mxu0 0
      %496 = vmatpush1.bf16.msra.mxu0 0
      %497 = vmatprep.subr.bf16.mxu0 0
      %498 = vmatpush1.bf16.msra.mxu0 0
      %499 = vmatprep.subr.bf16.mxu0 0
      %500 = vmatpush1.bf16.msra.mxu0 0
      %501 = vmatprep.mubr.bf16.mxu0 0
      %502 = vmatmul.mubr.bf16.gmra.mrb[0].mxu0 %v394
      %v503 = vpop.f32.mrb[0].mxu0
      %v504 = vadd.f32 0.0, %v503
      %v505 = vpop.f32.mrb[0].mxu0
      %v506 = vpop.f32.mrb[0].mxu0
      %v507 = vadd.f32 0.0, %v506
      %v508 = vpop.f32.mrb[0].mxu0
      %509 = vmatprep.mubr.bf16.mxu0 0
      %510 = vmatmul.mubr.bf16.gmra.mrb[0].mxu0 %v395
      %v511 = vpop.f32.mrb[0].mxu0
      %v512 = vadd.f32 0.0, %v511
      %v513 = vpop.f32.mrb[0].mxu0
      %v514 = vpop.f32.mrb[0].mxu0
      %v515 = vadd.f32 0.0, %v514
      %v516 = vpop.f32.mrb[0].mxu0
      %517 = vmatprep.mubr.bf16.mxu0 0
      %518 = vmatmul.mubr.bf16.gmra.mrb[0].mxu0 %v396
      %v519 = vpop.f32.mrb[0].mxu0
      %v520 = vadd.f32 0.0, %v519
      %v521 = vpop.f32.mrb[0].mxu0
      %v522 = vpop.f32.mrb[0].mxu0
      %v523 = vadd.f32 0.0, %v522
      %v524 = vpop.f32.mrb[0].mxu0
      %525 = vmatprep.mubr.bf16.mxu0 0
      %526 = vmatmul.mubr.bf16.gmra.mrb[0].mxu0 %v397
      %v527 = vpop.f32.mrb[0].mxu0
      %v528 = vadd.f32 0.0, %v527
      %v529 = vpop.f32.mrb[0].mxu0
      %v530 = vpop.f32.mrb[0].mxu0
      %v531 = vadd.f32 0.0, %v530
      %v532 = vpop.f32.mrb[0].mxu0
      %533 = vmatprep.mubr.bf16.mxu0 0
      %534 = vmatmul.mubr.bf16.gmra.mrb[0].mxu0 %v398
      %v535 = vpop.f32.mrb[0].mxu0
      %v536 = vadd.f32 0.0, %v535
      %v537 = vpop.f32.mrb[0].mxu0
      %v538 = vpop.f32.mrb[0].mxu0
      %v539 = vadd.f32 0.0, %v538
      %v540 = vpop.f32.mrb[0].mxu0
      %541 = vmatprep.mubr.bf16.mxu0 0
      %542 = vmatmul.mubr.bf16.gmra.mrb[0].mxu0 %v399
      %v543 = vpop.f32.mrb[0].mxu0
      %v544 = vadd.f32 0.0, %v543
      %v545 = vpop.f32.mrb[0].mxu0
      %v546 = vpop.f32.mrb[0].mxu0
      %v547 = vadd.f32 0.0, %v546
      %v548 = vpop.f32.mrb[0].mxu0
      %549 = vmatprep.mubr.bf16.mxu0 0
      %550 = vmatmul.mubr.bf16.gmra.mrb[0].mxu0 %v400
      %v551 = vpop.f32.mrb[0].mxu0
      %v552 = vadd.f32 0.0, %v551
      %v553 = vpop.f32.mrb[0].mxu0
      %v554 = vpop.f32.mrb[0].mxu0
      %v555 = vadd.f32 0.0, %v554
      %v556 = vpop.f32.mrb[0].mxu0
      %557 = vmatprep.mubr.bf16.mxu0 0
      %558 = vmatmul.mubr.bf16.gmra.mrb[0].mxu0 %v401
      %v559 = vpop.f32.mrb[0].mxu0
      %v560 = vadd.f32 0.0, %v559
      %v561 = vpop.f32.mrb[0].mxu0
      %v562 = vpop.f32.mrb[0].mxu0
      %v563 = vadd.f32 0.0, %v562
      %v564 = vpop.f32.mrb[0].mxu0
      %565 = vmatprep.mubr.bf16.mxu0 0
      %566 = vmatmul.mubr.bf16.gmra.mrb[0].mxu0 %v402
      %v567 = vpop.f32.mrb[0].mxu0
      %v568 = vadd.f32 0.0, %v567
      %v569 = vpop.f32.mrb[0].mxu0
      %v570 = vpop.f32.mrb[0].mxu0
      %v571 = vadd.f32 0.0, %v570
      %v572 = vpop.f32.mrb[0].mxu0
      %573 = vmatprep.mubr.bf16.mxu0 0
      %574 = vmatmul.mubr.bf16.gmra.mrb[0].mxu0 %v403
      %v575 = vpop.f32.mrb[0].mxu0
      %v576 = vadd.f32 0.0, %v575
      %v577 = vpop.f32.mrb[0].mxu0
      %v578 = vpop.f32.mrb[0].mxu0
      %v579 = vadd.f32 0.0, %v578
      %v580 = vpop.f32.mrb[0].mxu0
      %581 = vdwg.mxu0
      %v598 = vunpack.c.l.b16 %v325
      %v599 = vunpack.c.l.b16 %v326
      %v600 = vunpack.c.l.b16 %v327
      %v601 = vunpack.c.l.b16 %v328
      %v602 = vunpack.c.l.b16 %v329
      %v603 = vunpack.c.l.b16 %v330
      %v604 = vunpack.c.l.b16 %v331
      %v605 = vunpack.c.l.b16 %v332
      %v606 = vunpack.c.l.b16 %v333
      %v607 = vunpack.c.l.b16 %v334
      %v608 = vunpack.c.l.b16 %v335
      %v609 = vunpack.c.l.b16 %v336
      %v610 = vunpack.c.l.b16 %v337
      %v611 = vunpack.c.l.b16 %v338
      %v612 = vunpack.c.l.b16 %v339
      %v613 = vunpack.c.l.b16 %v340
      %v614 = vpack.c.b16 %v599, %v598
      %v615 = vpack.c.b16 %v601, %v600
      %v616 = vpack.c.b16 %v603, %v602
      %v617 = vpack.c.b16 %v605, %v604
      %v618 = vpack.c.b16 %v607, %v606
      %v619 = vpack.c.b16 %v609, %v608
      %v620 = vpack.c.b16 %v611, %v610
      %v621 = vpack.c.b16 %v613, %v612
      %630 = vmatprep.subr.bf16.mxu0 0
      %631 = vmatpush1.bf16.msra.mxu0 %v614
      %632 = vmatprep.subr.bf16.mxu0 0
      %633 = vmatpush1.bf16.msra.mxu0 %v615
      %634 = vmatprep.subr.bf16.mxu0 0
      %635 = vmatpush1.bf16.msra.mxu0 %v616
      %636 = vmatprep.subr.bf16.mxu0 0
      %637 = vmatpush1.bf16.msra.mxu0 %v617
      %638 = vmatprep.subr.bf16.mxu0 0
      %639 = vmatpush1.bf16.msra.mxu0 %v618
      %640 = vmatprep.subr.bf16.mxu0 0
      %641 = vmatpush1.bf16.msra.mxu0 %v619
      %642 = vmatprep.subr.bf16.mxu0 0
      %643 = vmatpush1.bf16.msra.mxu0 %v620
      %644 = vmatprep.subr.bf16.mxu0 0
      %645 = vmatpush1.bf16.msra.mxu0 %v621
      %646 = vmatprep.subr.bf16.mxu0 0
      %647 = vmatpush1.bf16.msra.mxu0 0
      %648 = vmatprep.subr.bf16.mxu0 0
      %649 = vmatpush1.bf16.msra.mxu0 0
      %650 = vmatprep.subr.bf16.mxu0 0
      %651 = vmatpush1.bf16.msra.mxu0 0
      %652 = vmatprep.subr.bf16.mxu0 0
      %653 = vmatpush1.bf16.msra.mxu0 0
      %654 = vmatprep.subr.bf16.mxu0 0
      %655 = vmatpush1.bf16.msra.mxu0 0
      %656 = vmatprep.subr.bf16.mxu0 0
      %657 = vmatpush1.bf16.msra.mxu0 0
      %658 = vmatprep.subr.bf16.mxu0 0
      %659 = vmatpush1.bf16.msra.mxu0 0
      %660 = vmatprep.subr.bf16.mxu0 0
      %661 = vmatpush1.bf16.msra.mxu0 0
      %662 = vmatprep.mubr.bf16.mxu0 0
      %663 = vmatmul.mubr.bf16.gmra.mrb[0].mxu0 %v315
      %v664 = vpop.f32.mrb[0].mxu0
      %v665 = vadd.f32 %v504, %v664
      %v666 = vpop.f32.mrb[0].mxu0
      %v667 = vpop.f32.mrb[0].mxu0
      %v668 = vadd.f32 %v507, %v667
      %v669 = vpop.f32.mrb[0].mxu0
      %670 = vmatprep.mubr.bf16.mxu0 0
      %671 = vmatmul.mubr.bf16.gmra.mrb[0].mxu0 %v316
      %v672 = vpop.f32.mrb[0].mxu0
      %v673 = vadd.f32 %v512, %v672
      %v674 = vpop.f32.mrb[0].mxu0
      %v675 = vpop.f32.mrb[0].mxu0
      %v676 = vadd.f32 %v515, %v675
      %v677 = vpop.f32.mrb[0].mxu0
      %678 = vmatprep.mubr.bf16.mxu0 0
      %679 = vmatmul.mubr.bf16.gmra.mrb[0].mxu0 %v317
      %v680 = vpop.f32.mrb[0].mxu0
      %v681 = vadd.f32 %v520, %v680
      %v682 = vpop.f32.mrb[0].mxu0
      %v683 = vpop.f32.mrb[0].mxu0
      %v684 = vadd.f32 %v523, %v683
      %v685 = vpop.f32.mrb[0].mxu0
      %686 = vmatprep.mubr.bf16.mxu0 0
      %687 = vmatmul.mubr.bf16.gmra.mrb[0].mxu0 %v318
      %v688 = vpop.f32.mrb[0].mxu0
      %v689 = vadd.f32 %v528, %v688
      %v690 = vpop.f32.mrb[0].mxu0
      %v691 = vpop.f32.mrb[0].mxu0
      %v692 = vadd.f32 %v531, %v691
      %v693 = vpop.f32.mrb[0].mxu0
      %694 = vmatprep.mubr.bf16.mxu0 0
      %695 = vmatmul.mubr.bf16.gmra.mrb[0].mxu0 %v319
      %v696 = vpop.f32.mrb[0].mxu0
      %v697 = vadd.f32 %v536, %v696
      %v698 = vpop.f32.mrb[0].mxu0
      %v699 = vpop.f32.mrb[0].mxu0
      %v700 = vadd.f32 %v539, %v699
      %v701 = vpop.f32.mrb[0].mxu0
      %702 = vmatprep.mubr.bf16.mxu0 0
      %703 = vmatmul.mubr.bf16.gmra.mrb[0].mxu0 %v320
      %v704 = vpop.f32.mrb[0].mxu0
      %v705 = vadd.f32 %v544, %v704
      %v706 = vpop.f32.mrb[0].mxu0
      %v707 = vpop.f32.mrb[0].mxu0
      %v708 = vadd.f32 %v547, %v707
      %v709 = vpop.f32.mrb[0].mxu0
      %710 = vmatprep.mubr.bf16.mxu0 0
      %711 = vmatmul.mubr.bf16.gmra.mrb[0].mxu0 %v321
      %v712 = vpop.f32.mrb[0].mxu0
      %v713 = vadd.f32 %v552, %v712
      %v714 = vpop.f32.mrb[0].mxu0
      %v715 = vpop.f32.mrb[0].mxu0
      %v716 = vadd.f32 %v555, %v715
      %v717 = vpop.f32.mrb[0].mxu0
      %718 = vmatprep.mubr.bf16.mxu0 0
      %719 = vmatmul.mubr.bf16.gmra.mrb[0].mxu0 %v322
      %v720 = vpop.f32.mrb[0].mxu0
      %v721 = vadd.f32 %v560, %v720
      %v722 = vpop.f32.mrb[0].mxu0
      %v723 = vpop.f32.mrb[0].mxu0
      %v724 = vadd.f32 %v563, %v723
      %v725 = vpop.f32.mrb[0].mxu0
      %726 = vmatprep.mubr.bf16.mxu0 0
      %727 = vmatmul.mubr.bf16.gmra.mrb[0].mxu0 %v323
      %v728 = vpop.f32.mrb[0].mxu0
      %v729 = vadd.f32 %v568, %v728
      %v730 = vpop.f32.mrb[0].mxu0
      %v731 = vpop.f32.mrb[0].mxu0
      %v732 = vadd.f32 %v571, %v731
      %v733 = vpop.f32.mrb[0].mxu0
      %734 = vmatprep.mubr.bf16.mxu0 0
      %735 = vmatmul.mubr.bf16.gmra.mrb[0].mxu0 %v324
      %v736 = vpop.f32.mrb[0].mxu0
      %v737 = vadd.f32 %v576, %v736
      %v738 = vpop.f32.mrb[0].mxu0
      %v739 = vpop.f32.mrb[0].mxu0
      %v740 = vadd.f32 %v579, %v739
      %v741 = vpop.f32.mrb[0].mxu0
      %742 = vdwg.mxu0
      %v743 = vrot.slane %v285, 2
      %v744 = vrot.slane %v288, 2
      %v745 = vrot.slane %v291, 2
      %v746 = vrot.slane %v294, 2
      %v747 = vrot.slane %v297, 2
      %v748 = vrot.slane %v300, 2
      %v749 = vrot.slane %v303, 2
      %v750 = vrot.slane %v306, 2
      %v751 = vrot.slane %v309, 2
      %v752 = vrot.slane %v312, 2
      %v753 = vrot.slane %v286, 2
      %v754 = vrot.slane %v289, 2
      %v755 = vrot.slane %v292, 2
      %v756 = vrot.slane %v295, 2
      %v757 = vrot.slane %v298, 2
      %v758 = vrot.slane %v301, 2
      %v759 = vrot.slane %v304, 2
      %v760 = vrot.slane %v307, 2
      %v761 = vrot.slane %v310, 2
      %v762 = vrot.slane %v313, 2
      %v763 = vrot.slane %v287, 2
      %v764 = vrot.slane %v290, 2
      %v765 = vrot.slane %v293, 2
      %v766 = vrot.slane %v296, 2
      %v767 = vrot.slane %v299, 2
      %v768 = vrot.slane %v302, 2
      %v769 = vrot.slane %v305, 2
      %v770 = vrot.slane %v308, 2
      %v771 = vrot.slane %v311, 2
      %v772 = vrot.slane %v314, 2
      %vm773 = vcmp.lt.s32.totalorder %v372, 6
      %v774 = vsel %vm773, %v753, %v763
      %v775 = vsel %vm773, %v754, %v764
      %v776 = vsel %vm773, %v755, %v765
      %v777 = vsel %vm773, %v756, %v766
      %v778 = vsel %vm773, %v757, %v767
      %v779 = vsel %vm773, %v758, %v768
      %v780 = vsel %vm773, %v759, %v769
      %v781 = vsel %vm773, %v760, %v770
      %v782 = vsel %vm773, %v761, %v771
      %v783 = vsel %vm773, %v762, %v772
      %v784 = vsel %vm773, %v743, %v753
      %v785 = vsel %vm773, %v744, %v754
      %v786 = vsel %vm773, %v745, %v755
      %v787 = vsel %vm773, %v746, %v756
      %v788 = vsel %vm773, %v747, %v757
      %v789 = vsel %vm773, %v748, %v758
      %v790 = vsel %vm773, %v749, %v759
      %v791 = vsel %vm773, %v750, %v760
      %v792 = vsel %vm773, %v751, %v761
      %v793 = vsel %vm773, %v752, %v762
      %v794 = vpack.c.bf16 %v774, %v784
      %v795 = vpack.c.bf16 %v775, %v785
      %v796 = vpack.c.bf16 %v776, %v786
      %v797 = vpack.c.bf16 %v777, %v787
      %v798 = vpack.c.bf16 %v778, %v788
      %v799 = vpack.c.bf16 %v779, %v789
      %v800 = vpack.c.bf16 %v780, %v790
      %v801 = vpack.c.bf16 %v781, %v791
      %v802 = vpack.c.bf16 %v782, %v792
      %v803 = vpack.c.bf16 %v783, %v793
      %s804 = scalar_lea.vmem %s1, 128
      %v805 = vld [vmem:[%s804] sm:$0xf]
      %v806 = vld [vmem:[%s804 + $0x4] sm:$0xf]
      %v807 = vld [vmem:[%s804 + $0x8] sm:$0xf]
      %v808 = vld [vmem:[%s804 + $0xc] sm:$0xf]
      %v809 = vld [vmem:[%s804 + $0x10] sm:$0xf]
      %v810 = vld [vmem:[%s804 + $0x14] sm:$0xf]
      %v811 = vld [vmem:[%s804 + $0x18] sm:$0xf]
      %v812 = vld [vmem:[%s804 + $0x1c] sm:$0xf]
      %v813 = vld [vmem:[%s804 + $0x20] sm:$0xf]
      %v814 = vld [vmem:[%s804 + $0x24] sm:$0xf]
      %v815 = vld [vmem:[%s804 + $0x28] sm:$0xf]
      %v816 = vld [vmem:[%s804 + $0x2c] sm:$0xf]
      %v817 = vld [vmem:[%s804 + $0x30] sm:$0xf]
      %v818 = vld [vmem:[%s804 + $0x34] sm:$0xf]
      %v819 = vld [vmem:[%s804 + $0x38] sm:$0xf]
      %v820 = vld [vmem:[%s804 + $0x3c] sm:$0xf]
      %v837 = vunpack.c.l.b16 %v805
      %v838 = vunpack.c.l.b16 %v806
      %v839 = vunpack.c.l.b16 %v807
      %v840 = vunpack.c.l.b16 %v808
      %v841 = vunpack.c.l.b16 %v809
      %v842 = vunpack.c.l.b16 %v810
      %v843 = vunpack.c.l.b16 %v811
      %v844 = vunpack.c.l.b16 %v812
      %v845 = vunpack.c.l.b16 %v813
      %v846 = vunpack.c.l.b16 %v814
      %v847 = vunpack.c.l.b16 %v815
      %v848 = vunpack.c.l.b16 %v816
      %v849 = vunpack.c.l.b16 %v817
      %v850 = vunpack.c.l.b16 %v818
      %v851 = vunpack.c.l.b16 %v819
      %v852 = vunpack.c.l.b16 %v820
      %v853 = vpack.c.b16 %v838, %v837
      %v854 = vpack.c.b16 %v840, %v839
      %v855 = vpack.c.b16 %v842, %v841
      %v856 = vpack.c.b16 %v844, %v843
      %v857 = vpack.c.b16 %v846, %v845
      %v858 = vpack.c.b16 %v848, %v847
      %v859 = vpack.c.b16 %v850, %v849
      %v860 = vpack.c.b16 %v852, %v851
      %869 = vmatprep.subr.bf16.mxu0 0
      %870 = vmatpush1.bf16.msra.mxu0 %v853
      %871 = vmatprep.subr.bf16.mxu0 0
      %872 = vmatpush1.bf16.msra.mxu0 %v854
      %873 = vmatprep.subr.bf16.mxu0 0
      %874 = vmatpush1.bf16.msra.mxu0 %v855
      %875 = vmatprep.subr.bf16.mxu0 0
      %876 = vmatpush1.bf16.msra.mxu0 %v856
      %877 = vmatprep.subr.bf16.mxu0 0
      %878 = vmatpush1.bf16.msra.mxu0 %v857
      %879 = vmatprep.subr.bf16.mxu0 0
      %880 = vmatpush1.bf16.msra.mxu0 %v858
      %881 = vmatprep.subr.bf16.mxu0 0
      %882 = vmatpush1.bf16.msra.mxu0 %v859
      %883 = vmatprep.subr.bf16.mxu0 0
      %884 = vmatpush1.bf16.msra.mxu0 %v860
      %885 = vmatprep.subr.bf16.mxu0 0
      %886 = vmatpush1.bf16.msra.mxu0 0
      %887 = vmatprep.subr.bf16.mxu0 0
      %888 = vmatpush1.bf16.msra.mxu0 0
      %889 = vmatprep.subr.bf16.mxu0 0
      %890 = vmatpush1.bf16.msra.mxu0 0
      %891 = vmatprep.subr.bf16.mxu0 0
      %892 = vmatpush1.bf16.msra.mxu0 0
      %893 = vmatprep.subr.bf16.mxu0 0
      %894 = vmatpush1.bf16.msra.mxu0 0
      %895 = vmatprep.subr.bf16.mxu0 0
      %896 = vmatpush1.bf16.msra.mxu0 0
      %897 = vmatprep.subr.bf16.mxu0 0
      %898 = vmatpush1.bf16.msra.mxu0 0
      %899 = vmatprep.subr.bf16.mxu0 0
      %900 = vmatpush1.bf16.msra.mxu0 0
      %901 = vmatprep.mubr.bf16.mxu0 0
      %902 = vmatmul.mubr.bf16.gmra.mrb[0].mxu0 %v794
      %v903 = vpop.f32.mrb[0].mxu0
      %v904 = vadd.f32 0.0, %v903
      %v905 = vpop.f32.mrb[0].mxu0
      %v906 = vpop.f32.mrb[0].mxu0
      %v907 = vadd.f32 0.0, %v906
      %v908 = vpop.f32.mrb[0].mxu0
      %909 = vmatprep.mubr.bf16.mxu0 0
      %910 = vmatmul.mubr.bf16.gmra.mrb[0].mxu0 %v795
      %v911 = vpop.f32.mrb[0].mxu0
      %v912 = vadd.f32 0.0, %v911
      %v913 = vpop.f32.mrb[0].mxu0
      %v914 = vpop.f32.mrb[0].mxu0
      %v915 = vadd.f32 0.0, %v914
      %v916 = vpop.f32.mrb[0].mxu0
      %917 = vmatprep.mubr.bf16.mxu0 0
      %918 = vmatmul.mubr.bf16.gmra.mrb[0].mxu0 %v796
      %v919 = vpop.f32.mrb[0].mxu0
      %v920 = vadd.f32 0.0, %v919
      %v921 = vpop.f32.mrb[0].mxu0
      %v922 = vpop.f32.mrb[0].mxu0
      %v923 = vadd.f32 0.0, %v922
      %v924 = vpop.f32.mrb[0].mxu0
      %925 = vmatprep.mubr.bf16.mxu0 0
      %926 = vmatmul.mubr.bf16.gmra.mrb[0].mxu0 %v797
      %v927 = vpop.f32.mrb[0].mxu0
      %v928 = vadd.f32 0.0, %v927
      %v929 = vpop.f32.mrb[0].mxu0
      %v930 = vpop.f32.mrb[0].mxu0
      %v931 = vadd.f32 0.0, %v930
      %v932 = vpop.f32.mrb[0].mxu0
      %933 = vmatprep.mubr.bf16.mxu0 0
      %934 = vmatmul.mubr.bf16.gmra.mrb[0].mxu0 %v798
      %v935 = vpop.f32.mrb[0].mxu0
      %v936 = vadd.f32 0.0, %v935
      %v937 = vpop.f32.mrb[0].mxu0
      %v938 = vpop.f32.mrb[0].mxu0
      %v939 = vadd.f32 0.0, %v938
      %v940 = vpop.f32.mrb[0].mxu0
      %941 = vmatprep.mubr.bf16.mxu0 0
      %942 = vmatmul.mubr.bf16.gmra.mrb[0].mxu0 %v799
      %v943 = vpop.f32.mrb[0].mxu0
      %v944 = vadd.f32 0.0, %v943
      %v945 = vpop.f32.mrb[0].mxu0
      %v946 = vpop.f32.mrb[0].mxu0
      %v947 = vadd.f32 0.0, %v946
      %v948 = vpop.f32.mrb[0].mxu0
      %949 = vmatprep.mubr.bf16.mxu0 0
      %950 = vmatmul.mubr.bf16.gmra.mrb[0].mxu0 %v800
      %v951 = vpop.f32.mrb[0].mxu0
      %v952 = vadd.f32 0.0, %v951
      %v953 = vpop.f32.mrb[0].mxu0
      %v954 = vpop.f32.mrb[0].mxu0
      %v955 = vadd.f32 0.0, %v954
      %v956 = vpop.f32.mrb[0].mxu0
      %957 = vmatprep.mubr.bf16.mxu0 0
      %958 = vmatmul.mubr.bf16.gmra.mrb[0].mxu0 %v801
      %v959 = vpop.f32.mrb[0].mxu0
      %v960 = vadd.f32 0.0, %v959
      %v961 = vpop.f32.mrb[0].mxu0
      %v962 = vpop.f32.mrb[0].mxu0
      %v963 = vadd.f32 0.0, %v962
      %v964 = vpop.f32.mrb[0].mxu0
      %965 = vmatprep.mubr.bf16.mxu0 0
      %966 = vmatmul.mubr.bf16.gmra.mrb[0].mxu0 %v802
      %v967 = vpop.f32.mrb[0].mxu0
      %v968 = vadd.f32 0.0, %v967
      %v969 = vpop.f32.mrb[0].mxu0
      %v970 = vpop.f32.mrb[0].mxu0
      %v971 = vadd.f32 0.0, %v970
      %v972 = vpop.f32.mrb[0].mxu0
      %973 = vmatprep.mubr.bf16.mxu0 0
      %974 = vmatmul.mubr.bf16.gmra.mrb[0].mxu0 %v803
      %v975 = vpop.f32.mrb[0].mxu0
      %v976 = vadd.f32 0.0, %v975
      %v977 = vpop.f32.mrb[0].mxu0
      %v978 = vpop.f32.mrb[0].mxu0
      %v979 = vadd.f32 0.0, %v978
      %v980 = vpop.f32.mrb[0].mxu0
      %981 = vdwg.mxu0
      %v982 = vadd.f32 %v665, %v904
      %v983 = vadd.f32 %v668, %v907
      %v984 = vadd.f32 %v673, %v912
      %v985 = vadd.f32 %v676, %v915
      %v986 = vadd.f32 %v681, %v920
      %v987 = vadd.f32 %v684, %v923
      %v988 = vadd.f32 %v689, %v928
      %v989 = vadd.f32 %v692, %v931
      %v990 = vadd.f32 %v697, %v936
      %v991 = vadd.f32 %v700, %v939
      %v992 = vadd.f32 %v705, %v944
      %v993 = vadd.f32 %v708, %v947
      %v994 = vadd.f32 %v713, %v952
      %v995 = vadd.f32 %v716, %v955
      %v996 = vadd.f32 %v721, %v960
      %v997 = vadd.f32 %v724, %v963
      %v998 = vadd.f32 %v729, %v968
      %v999 = vadd.f32 %v732, %v971
      %v1000 = vadd.f32 %v737, %v976
      %v1001 = vadd.f32 %v740, %v979
      %s1002 = sadd.s32 %s251, 1
      %s1003 = smul.u32 %s1002, 4
      %s1004 = smul.addr %s1003, 4
      %s1005 = scalar_lea.vmem %s238, %s1004
      %v1006 = vld [vmem:[%s1005] sm:$0xf]
      %v1007 = vld [vmem:[%s1005 + $0x4] sm:$0xf]
      %v1008 = vld [vmem:[%s1005 + $0x8] sm:$0xf]
      %v1009 = vld [vmem:[%s1005 + $0x10] sm:$0xf]
      %v1010 = vld [vmem:[%s1005 + $0x14] sm:$0xf]
      %v1011 = vld [vmem:[%s1005 + $0x18] sm:$0xf]
      %v1012 = vld [vmem:[%s1005 + $0x20] sm:$0xf]
      %v1013 = vld [vmem:[%s1005 + $0x24] sm:$0xf]
      %v1014 = vld [vmem:[%s1005 + $0x28] sm:$0xf]
      %v1015 = vld [vmem:[%s1005 + $0x30] sm:$0xf]
      %v1016 = vld [vmem:[%s1005 + $0x34] sm:$0xf]
      %v1017 = vld [vmem:[%s1005 + $0x38] sm:$0xf]
      %v1018 = vld [vmem:[%s1005 + $0x40] sm:$0xf]
      %v1019 = vld [vmem:[%s1005 + $0x44] sm:$0xf]
      %v1020 = vld [vmem:[%s1005 + $0x48] sm:$0xf]
      %v1021 = vld [vmem:[%s1005 + $0x50] sm:$0xf]
      %v1022 = vld [vmem:[%s1005 + $0x54] sm:$0xf]
      %v1023 = vld [vmem:[%s1005 + $0x58] sm:$0xf]
      %v1024 = vld [vmem:[%s1005 + $0x60] sm:$0xf]
      %v1025 = vld [vmem:[%s1005 + $0x64] sm:$0xf]
      %v1026 = vld [vmem:[%s1005 + $0x68] sm:$0xf]
      %v1027 = vld [vmem:[%s1005 + $0x70] sm:$0xf]
      %v1028 = vld [vmem:[%s1005 + $0x74] sm:$0xf]
      %v1029 = vld [vmem:[%s1005 + $0x78] sm:$0xf]
      %v1030 = vld [vmem:[%s1005 + $0x80] sm:$0xf]
      %v1031 = vld [vmem:[%s1005 + $0x84] sm:$0xf]
      %v1032 = vld [vmem:[%s1005 + $0x88] sm:$0xf]
      %v1033 = vld [vmem:[%s1005 + $0x90] sm:$0xf]
      %v1034 = vld [vmem:[%s1005 + $0x94] sm:$0xf]
      %v1035 = vld [vmem:[%s1005 + $0x98] sm:$0xf]
      %v1036 = vunpack.c.l.bf16 %v1006
      %v1037 = vunpack.c.l.bf16 %v1007
      %v1038 = vunpack.c.l.bf16 %v1008
      %v1039 = vunpack.c.l.bf16 %v1009
      %v1040 = vunpack.c.l.bf16 %v1010
      %v1041 = vunpack.c.l.bf16 %v1011
      %v1042 = vunpack.c.l.bf16 %v1012
      %v1043 = vunpack.c.l.bf16 %v1013
      %v1044 = vunpack.c.l.bf16 %v1014
      %v1045 = vunpack.c.l.bf16 %v1015
      %v1046 = vunpack.c.l.bf16 %v1016
      %v1047 = vunpack.c.l.bf16 %v1017
      %v1048 = vunpack.c.l.bf16 %v1018
      %v1049 = vunpack.c.l.bf16 %v1019
      %v1050 = vunpack.c.l.bf16 %v1020
      %v1051 = vunpack.c.l.bf16 %v1021
      %v1052 = vunpack.c.l.bf16 %v1022
      %v1053 = vunpack.c.l.bf16 %v1023
      %v1054 = vunpack.c.l.bf16 %v1024
      %v1055 = vunpack.c.l.bf16 %v1025
      %v1056 = vunpack.c.l.bf16 %v1026
      %v1057 = vunpack.c.l.bf16 %v1027
      %v1058 = vunpack.c.l.bf16 %v1028
      %v1059 = vunpack.c.l.bf16 %v1029
      %v1060 = vunpack.c.l.bf16 %v1030
      %v1061 = vunpack.c.l.bf16 %v1031
      %v1062 = vunpack.c.l.bf16 %v1032
      %v1063 = vunpack.c.l.bf16 %v1033
      %v1064 = vunpack.c.l.bf16 %v1034
      %v1065 = vunpack.c.l.bf16 %v1035
      %v1066 = vpack.c.bf16 %v1037, %v1036
      %v1067 = vpack.c.bf16 %v1040, %v1039
      %v1068 = vpack.c.bf16 %v1043, %v1042
      %v1069 = vpack.c.bf16 %v1046, %v1045
      %v1070 = vpack.c.bf16 %v1049, %v1048
      %v1071 = vpack.c.bf16 %v1052, %v1051
      %v1072 = vpack.c.bf16 %v1055, %v1054
      %v1073 = vpack.c.bf16 %v1058, %v1057
      %v1074 = vpack.c.bf16 %v1061, %v1060
      %v1075 = vpack.c.bf16 %v1064, %v1063
      %s1076 = scalar_lea.vmem %s1, 192
      %v1077 = vld [vmem:[%s1076] sm:$0xf]
      %v1078 = vld [vmem:[%s1076 + $0x4] sm:$0xf]
      %v1079 = vld [vmem:[%s1076 + $0x8] sm:$0xf]
      %v1080 = vld [vmem:[%s1076 + $0xc] sm:$0xf]
      %v1081 = vld [vmem:[%s1076 + $0x10] sm:$0xf]
      %v1082 = vld [vmem:[%s1076 + $0x14] sm:$0xf]
      %v1083 = vld [vmem:[%s1076 + $0x18] sm:$0xf]
      %v1084 = vld [vmem:[%s1076 + $0x1c] sm:$0xf]
      %v1085 = vld [vmem:[%s1076 + $0x20] sm:$0xf]
      %v1086 = vld [vmem:[%s1076 + $0x24] sm:$0xf]
      %v1087 = vld [vmem:[%s1076 + $0x28] sm:$0xf]
      %v1088 = vld [vmem:[%s1076 + $0x2c] sm:$0xf]
      %v1089 = vld [vmem:[%s1076 + $0x30] sm:$0xf]
      %v1090 = vld [vmem:[%s1076 + $0x34] sm:$0xf]
      %v1091 = vld [vmem:[%s1076 + $0x38] sm:$0xf]
      %v1092 = vld [vmem:[%s1076 + $0x3c] sm:$0xf]
      %v1109 = vunpack.c.l.b16 %v1077
      %v1110 = vunpack.c.l.b16 %v1078
      %v1111 = vunpack.c.l.b16 %v1079
      %v1112 = vunpack.c.l.b16 %v1080
      %v1113 = vunpack.c.l.b16 %v1081
      %v1114 = vunpack.c.l.b16 %v1082
      %v1115 = vunpack.c.l.b16 %v1083
      %v1116 = vunpack.c.l.b16 %v1084
      %v1117 = vunpack.c.l.b16 %v1085
      %v1118 = vunpack.c.l.b16 %v1086
      %v1119 = vunpack.c.l.b16 %v1087
      %v1120 = vunpack.c.l.b16 %v1088
      %v1121 = vunpack.c.l.b16 %v1089
      %v1122 = vunpack.c.l.b16 %v1090
      %v1123 = vunpack.c.l.b16 %v1091
      %v1124 = vunpack.c.l.b16 %v1092
      %v1125 = vpack.c.b16 %v1110, %v1109
      %v1126 = vpack.c.b16 %v1112, %v1111
      %v1127 = vpack.c.b16 %v1114, %v1113
      %v1128 = vpack.c.b16 %v1116, %v1115
      %v1129 = vpack.c.b16 %v1118, %v1117
      %v1130 = vpack.c.b16 %v1120, %v1119
      %v1131 = vpack.c.b16 %v1122, %v1121
      %v1132 = vpack.c.b16 %v1124, %v1123
      %1141 = vmatprep.subr.bf16.mxu0 0
      %1142 = vmatpush1.bf16.msra.mxu0 %v1125
      %1143 = vmatprep.subr.bf16.mxu0 0
      %1144 = vmatpush1.bf16.msra.mxu0 %v1126
      %1145 = vmatprep.subr.bf16.mxu0 0
      %1146 = vmatpush1.bf16.msra.mxu0 %v1127
      %1147 = vmatprep.subr.bf16.mxu0 0
      %1148 = vmatpush1.bf16.msra.mxu0 %v1128
      %1149 = vmatprep.subr.bf16.mxu0 0
      %1150 = vmatpush1.bf16.msra.mxu0 %v1129
      %1151 = vmatprep.subr.bf16.mxu0 0
      %1152 = vmatpush1.bf16.msra.mxu0 %v1130
      %1153 = vmatprep.subr.bf16.mxu0 0
      %1154 = vmatpush1.bf16.msra.mxu0 %v1131
      %1155 = vmatprep.subr.bf16.mxu0 0
      %1156 = vmatpush1.bf16.msra.mxu0 %v1132
      %1157 = vmatprep.subr.bf16.mxu0 0
      %1158 = vmatpush1.bf16.msra.mxu0 0
      %1159 = vmatprep.subr.bf16.mxu0 0
      %1160 = vmatpush1.bf16.msra.mxu0 0
      %1161 = vmatprep.subr.bf16.mxu0 0
      %1162 = vmatpush1.bf16.msra.mxu0 0
      %1163 = vmatprep.subr.bf16.mxu0 0
      %1164 = vmatpush1.bf16.msra.mxu0 0
      %1165 = vmatprep.subr.bf16.mxu0 0
      %1166 = vmatpush1.bf16.msra.mxu0 0
      %1167 = vmatprep.subr.bf16.mxu0 0
      %1168 = vmatpush1.bf16.msra.mxu0 0
      %1169 = vmatprep.subr.bf16.mxu0 0
      %1170 = vmatpush1.bf16.msra.mxu0 0
      %1171 = vmatprep.subr.bf16.mxu0 0
      %1172 = vmatpush1.bf16.msra.mxu0 0
      %1173 = vmatprep.mubr.bf16.mxu0 0
      %1174 = vmatmul.mubr.bf16.gmra.mrb[0].mxu0 %v1066
      %v1175 = vpop.f32.mrb[0].mxu0
      %v1176 = vadd.f32 0.0, %v1175
      %v1177 = vpop.f32.mrb[0].mxu0
      %v1178 = vpop.f32.mrb[0].mxu0
      %v1179 = vadd.f32 0.0, %v1178
      %v1180 = vpop.f32.mrb[0].mxu0
      %1181 = vmatprep.mubr.bf16.mxu0 0
      %1182 = vmatmul.mubr.bf16.gmra.mrb[0].mxu0 %v1067
      %v1183 = vpop.f32.mrb[0].mxu0
      %v1184 = vadd.f32 0.0, %v1183
      %v1185 = vpop.f32.mrb[0].mxu0
      %v1186 = vpop.f32.mrb[0].mxu0
      %v1187 = vadd.f32 0.0, %v1186
      %v1188 = vpop.f32.mrb[0].mxu0
      %1189 = vmatprep.mubr.bf16.mxu0 0
      %1190 = vmatmul.mubr.bf16.gmra.mrb[0].mxu0 %v1068
      %v1191 = vpop.f32.mrb[0].mxu0
      %v1192 = vadd.f32 0.0, %v1191
      %v1193 = vpop.f32.mrb[0].mxu0
      %v1194 = vpop.f32.mrb[0].mxu0
      %v1195 = vadd.f32 0.0, %v1194
      %v1196 = vpop.f32.mrb[0].mxu0
      %1197 = vmatprep.mubr.bf16.mxu0 0
      %1198 = vmatmul.mubr.bf16.gmra.mrb[0].mxu0 %v1069
      %v1199 = vpop.f32.mrb[0].mxu0
      %v1200 = vadd.f32 0.0, %v1199
      %v1201 = vpop.f32.mrb[0].mxu0
      %v1202 = vpop.f32.mrb[0].mxu0
      %v1203 = vadd.f32 0.0, %v1202
      %v1204 = vpop.f32.mrb[0].mxu0
      %1205 = vmatprep.mubr.bf16.mxu0 0
      %1206 = vmatmul.mubr.bf16.gmra.mrb[0].mxu0 %v1070
      %v1207 = vpop.f32.mrb[0].mxu0
      %v1208 = vadd.f32 0.0, %v1207
      %v1209 = vpop.f32.mrb[0].mxu0
      %v1210 = vpop.f32.mrb[0].mxu0
      %v1211 = vadd.f32 0.0, %v1210
      %v1212 = vpop.f32.mrb[0].mxu0
      %1213 = vmatprep.mubr.bf16.mxu0 0
      %1214 = vmatmul.mubr.bf16.gmra.mrb[0].mxu0 %v1071
      %v1215 = vpop.f32.mrb[0].mxu0
      %v1216 = vadd.f32 0.0, %v1215
      %v1217 = vpop.f32.mrb[0].mxu0
      %v1218 = vpop.f32.mrb[0].mxu0
      %v1219 = vadd.f32 0.0, %v1218
      %v1220 = vpop.f32.mrb[0].mxu0
      %1221 = vmatprep.mubr.bf16.mxu0 0
      %1222 = vmatmul.mubr.bf16.gmra.mrb[0].mxu0 %v1072
      %v1223 = vpop.f32.mrb[0].mxu0
      %v1224 = vadd.f32 0.0, %v1223
      %v1225 = vpop.f32.mrb[0].mxu0
      %v1226 = vpop.f32.mrb[0].mxu0
      %v1227 = vadd.f32 0.0, %v1226
      %v1228 = vpop.f32.mrb[0].mxu0
      %1229 = vmatprep.mubr.bf16.mxu0 0
      %1230 = vmatmul.mubr.bf16.gmra.mrb[0].mxu0 %v1073
      %v1231 = vpop.f32.mrb[0].mxu0
      %v1232 = vadd.f32 0.0, %v1231
      %v1233 = vpop.f32.mrb[0].mxu0
      %v1234 = vpop.f32.mrb[0].mxu0
      %v1235 = vadd.f32 0.0, %v1234
      %v1236 = vpop.f32.mrb[0].mxu0
      %1237 = vmatprep.mubr.bf16.mxu0 0
      %1238 = vmatmul.mubr.bf16.gmra.mrb[0].mxu0 %v1074
      %v1239 = vpop.f32.mrb[0].mxu0
      %v1240 = vadd.f32 0.0, %v1239
      %v1241 = vpop.f32.mrb[0].mxu0
      %v1242 = vpop.f32.mrb[0].mxu0
      %v1243 = vadd.f32 0.0, %v1242
      %v1244 = vpop.f32.mrb[0].mxu0
      %1245 = vmatprep.mubr.bf16.mxu0 0
      %1246 = vmatmul.mubr.bf16.gmra.mrb[0].mxu0 %v1075
      %v1247 = vpop.f32.mrb[0].mxu0
      %v1248 = vadd.f32 0.0, %v1247
      %v1249 = vpop.f32.mrb[0].mxu0
      %v1250 = vpop.f32.mrb[0].mxu0
      %v1251 = vadd.f32 0.0, %v1250
      %v1252 = vpop.f32.mrb[0].mxu0
      %1253 = vdwg.mxu0
      %v1254 = vadd.f32 %v982, %v1176
      %v1255 = vadd.f32 %v983, %v1179
      %v1256 = vadd.f32 %v984, %v1184
      %v1257 = vadd.f32 %v985, %v1187
      %v1258 = vadd.f32 %v986, %v1192
      %v1259 = vadd.f32 %v987, %v1195
      %v1260 = vadd.f32 %v988, %v1200
      %v1261 = vadd.f32 %v989, %v1203
      %v1262 = vadd.f32 %v990, %v1208
      %v1263 = vadd.f32 %v991, %v1211
      %v1264 = vadd.f32 %v992, %v1216
      %v1265 = vadd.f32 %v993, %v1219
      %v1266 = vadd.f32 %v994, %v1224
      %v1267 = vadd.f32 %v995, %v1227
      %v1268 = vadd.f32 %v996, %v1232
      %v1269 = vadd.f32 %v997, %v1235
      %v1270 = vadd.f32 %v998, %v1240
      %v1271 = vadd.f32 %v999, %v1243
      %v1272 = vadd.f32 %v1000, %v1248
      %v1273 = vadd.f32 %v1001, %v1251
      %v1274 = vrot.slane %v1036, 1
      %v1275 = vrot.slane %v1039, 1
      %v1276 = vrot.slane %v1042, 1
      %v1277 = vrot.slane %v1045, 1
      %v1278 = vrot.slane %v1048, 1
      %v1279 = vrot.slane %v1051, 1
      %v1280 = vrot.slane %v1054, 1
      %v1281 = vrot.slane %v1057, 1
      %v1282 = vrot.slane %v1060, 1
      %v1283 = vrot.slane %v1063, 1
      %v1284 = vrot.slane %v1037, 1
      %v1285 = vrot.slane %v1040, 1
      %v1286 = vrot.slane %v1043, 1
      %v1287 = vrot.slane %v1046, 1
      %v1288 = vrot.slane %v1049, 1
      %v1289 = vrot.slane %v1052, 1
      %v1290 = vrot.slane %v1055, 1
      %v1291 = vrot.slane %v1058, 1
      %v1292 = vrot.slane %v1061, 1
      %v1293 = vrot.slane %v1064, 1
      %v1294 = vrot.slane %v1038, 1
      %v1295 = vrot.slane %v1041, 1
      %v1296 = vrot.slane %v1044, 1
      %v1297 = vrot.slane %v1047, 1
      %v1298 = vrot.slane %v1050, 1
      %v1299 = vrot.slane %v1053, 1
      %v1300 = vrot.slane %v1056, 1
      %v1301 = vrot.slane %v1059, 1
      %v1302 = vrot.slane %v1062, 1
      %v1303 = vrot.slane %v1065, 1
      %v1304 = vsel %vm373, %v1284, %v1294
      %v1305 = vsel %vm373, %v1285, %v1295
      %v1306 = vsel %vm373, %v1286, %v1296
      %v1307 = vsel %vm373, %v1287, %v1297
      %v1308 = vsel %vm373, %v1288, %v1298
      %v1309 = vsel %vm373, %v1289, %v1299
      %v1310 = vsel %vm373, %v1290, %v1300
      %v1311 = vsel %vm373, %v1291, %v1301
      %v1312 = vsel %vm373, %v1292, %v1302
      %v1313 = vsel %vm373, %v1293, %v1303
      %v1314 = vsel %vm373, %v1274, %v1284
      %v1315 = vsel %vm373, %v1275, %v1285
      %v1316 = vsel %vm373, %v1276, %v1286
      %v1317 = vsel %vm373, %v1277, %v1287
      %v1318 = vsel %vm373, %v1278, %v1288
      %v1319 = vsel %vm373, %v1279, %v1289
      %v1320 = vsel %vm373, %v1280, %v1290
      %v1321 = vsel %vm373, %v1281, %v1291
      %v1322 = vsel %vm373, %v1282, %v1292
      %v1323 = vsel %vm373, %v1283, %v1293
      %v1324 = vpack.c.bf16 %v1304, %v1314
      %v1325 = vpack.c.bf16 %v1305, %v1315
      %v1326 = vpack.c.bf16 %v1306, %v1316
      %v1327 = vpack.c.bf16 %v1307, %v1317
      %v1328 = vpack.c.bf16 %v1308, %v1318
      %v1329 = vpack.c.bf16 %v1309, %v1319
      %v1330 = vpack.c.bf16 %v1310, %v1320
      %v1331 = vpack.c.bf16 %v1311, %v1321
      %v1332 = vpack.c.bf16 %v1312, %v1322
      %v1333 = vpack.c.bf16 %v1313, %v1323
      %s1334 = scalar_lea.vmem %s1, 256
      %v1335 = vld [vmem:[%s1334] sm:$0xf]
      %v1336 = vld [vmem:[%s1334 + $0x4] sm:$0xf]
      %v1337 = vld [vmem:[%s1334 + $0x8] sm:$0xf]
      %v1338 = vld [vmem:[%s1334 + $0xc] sm:$0xf]
      %v1339 = vld [vmem:[%s1334 + $0x10] sm:$0xf]
      %v1340 = vld [vmem:[%s1334 + $0x14] sm:$0xf]
      %v1341 = vld [vmem:[%s1334 + $0x18] sm:$0xf]
      %v1342 = vld [vmem:[%s1334 + $0x1c] sm:$0xf]
      %v1343 = vld [vmem:[%s1334 + $0x20] sm:$0xf]
      %v1344 = vld [vmem:[%s1334 + $0x24] sm:$0xf]
      %v1345 = vld [vmem:[%s1334 + $0x28] sm:$0xf]
      %v1346 = vld [vmem:[%s1334 + $0x2c] sm:$0xf]
      %v1347 = vld [vmem:[%s1334 + $0x30] sm:$0xf]
      %v1348 = vld [vmem:[%s1334 + $0x34] sm:$0xf]
      %v1349 = vld [vmem:[%s1334 + $0x38] sm:$0xf]
      %v1350 = vld [vmem:[%s1334 + $0x3c] sm:$0xf]
      %v1367 = vunpack.c.l.b16 %v1335
      %v1368 = vunpack.c.l.b16 %v1336
      %v1369 = vunpack.c.l.b16 %v1337
      %v1370 = vunpack.c.l.b16 %v1338
      %v1371 = vunpack.c.l.b16 %v1339
      %v1372 = vunpack.c.l.b16 %v1340
      %v1373 = vunpack.c.l.b16 %v1341
      %v1374 = vunpack.c.l.b16 %v1342
      %v1375 = vunpack.c.l.b16 %v1343
      %v1376 = vunpack.c.l.b16 %v1344
      %v1377 = vunpack.c.l.b16 %v1345
      %v1378 = vunpack.c.l.b16 %v1346
      %v1379 = vunpack.c.l.b16 %v1347
      %v1380 = vunpack.c.l.b16 %v1348
      %v1381 = vunpack.c.l.b16 %v1349
      %v1382 = vunpack.c.l.b16 %v1350
      %v1383 = vpack.c.b16 %v1368, %v1367
      %v1384 = vpack.c.b16 %v1370, %v1369
      %v1385 = vpack.c.b16 %v1372, %v1371
      %v1386 = vpack.c.b16 %v1374, %v1373
      %v1387 = vpack.c.b16 %v1376, %v1375
      %v1388 = vpack.c.b16 %v1378, %v1377
      %v1389 = vpack.c.b16 %v1380, %v1379
      %v1390 = vpack.c.b16 %v1382, %v1381
      %1399 = vmatprep.subr.bf16.mxu0 0
      %1400 = vmatpush1.bf16.msra.mxu0 %v1383
      %1401 = vmatprep.subr.bf16.mxu0 0
      %1402 = vmatpush1.bf16.msra.mxu0 %v1384
      %1403 = vmatprep.subr.bf16.mxu0 0
      %1404 = vmatpush1.bf16.msra.mxu0 %v1385
      %1405 = vmatprep.subr.bf16.mxu0 0
      %1406 = vmatpush1.bf16.msra.mxu0 %v1386
      %1407 = vmatprep.subr.bf16.mxu0 0
      %1408 = vmatpush1.bf16.msra.mxu0 %v1387
      %1409 = vmatprep.subr.bf16.mxu0 0
      %1410 = vmatpush1.bf16.msra.mxu0 %v1388
      %1411 = vmatprep.subr.bf16.mxu0 0
      %1412 = vmatpush1.bf16.msra.mxu0 %v1389
      %1413 = vmatprep.subr.bf16.mxu0 0
      %1414 = vmatpush1.bf16.msra.mxu0 %v1390
      %1415 = vmatprep.subr.bf16.mxu0 0
      %1416 = vmatpush1.bf16.msra.mxu0 0
      %1417 = vmatprep.subr.bf16.mxu0 0
      %1418 = vmatpush1.bf16.msra.mxu0 0
      %1419 = vmatprep.subr.bf16.mxu0 0
      %1420 = vmatpush1.bf16.msra.mxu0 0
      %1421 = vmatprep.subr.bf16.mxu0 0
      %1422 = vmatpush1.bf16.msra.mxu0 0
      %1423 = vmatprep.subr.bf16.mxu0 0
      %1424 = vmatpush1.bf16.msra.mxu0 0
      %1425 = vmatprep.subr.bf16.mxu0 0
      %1426 = vmatpush1.bf16.msra.mxu0 0
      %1427 = vmatprep.subr.bf16.mxu0 0
      %1428 = vmatpush1.bf16.msra.mxu0 0
      %1429 = vmatprep.subr.bf16.mxu0 0
      %1430 = vmatpush1.bf16.msra.mxu0 0
      %1431 = vmatprep.mubr.bf16.mxu0 0
      %1432 = vmatmul.mubr.bf16.gmra.mrb[0].mxu0 %v1324
      %v1433 = vpop.f32.mrb[0].mxu0
      %v1434 = vadd.f32 0.0, %v1433
      %v1435 = vpop.f32.mrb[0].mxu0
      %v1436 = vpop.f32.mrb[0].mxu0
      %v1437 = vadd.f32 0.0, %v1436
      %v1438 = vpop.f32.mrb[0].mxu0
      %1439 = vmatprep.mubr.bf16.mxu0 0
      %1440 = vmatmul.mubr.bf16.gmra.mrb[0].mxu0 %v1325
      %v1441 = vpop.f32.mrb[0].mxu0
      %v1442 = vadd.f32 0.0, %v1441
      %v1443 = vpop.f32.mrb[0].mxu0
      %v1444 = vpop.f32.mrb[0].mxu0
      %v1445 = vadd.f32 0.0, %v1444
      %v1446 = vpop.f32.mrb[0].mxu0
      %1447 = vmatprep.mubr.bf16.mxu0 0
      %1448 = vmatmul.mubr.bf16.gmra.mrb[0].mxu0 %v1326
      %v1449 = vpop.f32.mrb[0].mxu0
      %v1450 = vadd.f32 0.0, %v1449
      %v1451 = vpop.f32.mrb[0].mxu0
      %v1452 = vpop.f32.mrb[0].mxu0
      %v1453 = vadd.f32 0.0, %v1452
      %v1454 = vpop.f32.mrb[0].mxu0
      %1455 = vmatprep.mubr.bf16.mxu0 0
      %1456 = vmatmul.mubr.bf16.gmra.mrb[0].mxu0 %v1327
      %v1457 = vpop.f32.mrb[0].mxu0
      %v1458 = vadd.f32 0.0, %v1457
      %v1459 = vpop.f32.mrb[0].mxu0
      %v1460 = vpop.f32.mrb[0].mxu0
      %v1461 = vadd.f32 0.0, %v1460
      %v1462 = vpop.f32.mrb[0].mxu0
      %1463 = vmatprep.mubr.bf16.mxu0 0
      %1464 = vmatmul.mubr.bf16.gmra.mrb[0].mxu0 %v1328
      %v1465 = vpop.f32.mrb[0].mxu0
      %v1466 = vadd.f32 0.0, %v1465
      %v1467 = vpop.f32.mrb[0].mxu0
      %v1468 = vpop.f32.mrb[0].mxu0
      %v1469 = vadd.f32 0.0, %v1468
      %v1470 = vpop.f32.mrb[0].mxu0
      %1471 = vmatprep.mubr.bf16.mxu0 0
      %1472 = vmatmul.mubr.bf16.gmra.mrb[0].mxu0 %v1329
      %v1473 = vpop.f32.mrb[0].mxu0
      %v1474 = vadd.f32 0.0, %v1473
      %v1475 = vpop.f32.mrb[0].mxu0
      %v1476 = vpop.f32.mrb[0].mxu0
      %v1477 = vadd.f32 0.0, %v1476
      %v1478 = vpop.f32.mrb[0].mxu0
      %1479 = vmatprep.mubr.bf16.mxu0 0
      %1480 = vmatmul.mubr.bf16.gmra.mrb[0].mxu0 %v1330
      %v1481 = vpop.f32.mrb[0].mxu0
      %v1482 = vadd.f32 0.0, %v1481
      %v1483 = vpop.f32.mrb[0].mxu0
      %v1484 = vpop.f32.mrb[0].mxu0
      %v1485 = vadd.f32 0.0, %v1484
      %v1486 = vpop.f32.mrb[0].mxu0
      %1487 = vmatprep.mubr.bf16.mxu0 0
      %1488 = vmatmul.mubr.bf16.gmra.mrb[0].mxu0 %v1331
      %v1489 = vpop.f32.mrb[0].mxu0
      %v1490 = vadd.f32 0.0, %v1489
      %v1491 = vpop.f32.mrb[0].mxu0
      %v1492 = vpop.f32.mrb[0].mxu0
      %v1493 = vadd.f32 0.0, %v1492
      %v1494 = vpop.f32.mrb[0].mxu0
      %1495 = vmatprep.mubr.bf16.mxu0 0
      %1496 = vmatmul.mubr.bf16.gmra.mrb[0].mxu0 %v1332
      %v1497 = vpop.f32.mrb[0].mxu0
      %v1498 = vadd.f32 0.0, %v1497
      %v1499 = vpop.f32.mrb[0].mxu0
      %v1500 = vpop.f32.mrb[0].mxu0
      %v1501 = vadd.f32 0.0, %v1500
      %v1502 = vpop.f32.mrb[0].mxu0
      %1503 = vmatprep.mubr.bf16.mxu0 0
      %1504 = vmatmul.mubr.bf16.gmra.mrb[0].mxu0 %v1333
      %v1505 = vpop.f32.mrb[0].mxu0
      %v1506 = vadd.f32 0.0, %v1505
      %v1507 = vpop.f32.mrb[0].mxu0
      %v1508 = vpop.f32.mrb[0].mxu0
      %v1509 = vadd.f32 0.0, %v1508
      %v1510 = vpop.f32.mrb[0].mxu0
      %1511 = vdwg.mxu0
      %v1512 = vadd.f32 %v1254, %v1434
      %v1513 = vadd.f32 %v1255, %v1437
      %v1514 = vadd.f32 %v1256, %v1442
      %v1515 = vadd.f32 %v1257, %v1445
      %v1516 = vadd.f32 %v1258, %v1450
      %v1517 = vadd.f32 %v1259, %v1453
      %v1518 = vadd.f32 %v1260, %v1458
      %v1519 = vadd.f32 %v1261, %v1461
      %v1520 = vadd.f32 %v1262, %v1466
      %v1521 = vadd.f32 %v1263, %v1469
      %v1522 = vadd.f32 %v1264, %v1474
      %v1523 = vadd.f32 %v1265, %v1477
      %v1524 = vadd.f32 %v1266, %v1482
      %v1525 = vadd.f32 %v1267, %v1485
      %v1526 = vadd.f32 %v1268, %v1490
      %v1527 = vadd.f32 %v1269, %v1493
      %v1528 = vadd.f32 %v1270, %v1498
      %v1529 = vadd.f32 %v1271, %v1501
      %v1530 = vadd.f32 %v1272, %v1506
      %v1531 = vadd.f32 %v1273, %v1509
      %v1532 = vrot.slane %v1036, 2
      %v1533 = vrot.slane %v1039, 2
      %v1534 = vrot.slane %v1042, 2
      %v1535 = vrot.slane %v1045, 2
      %v1536 = vrot.slane %v1048, 2
      %v1537 = vrot.slane %v1051, 2
      %v1538 = vrot.slane %v1054, 2
      %v1539 = vrot.slane %v1057, 2
      %v1540 = vrot.slane %v1060, 2
      %v1541 = vrot.slane %v1063, 2
      %v1542 = vrot.slane %v1037, 2
      %v1543 = vrot.slane %v1040, 2
      %v1544 = vrot.slane %v1043, 2
      %v1545 = vrot.slane %v1046, 2
      %v1546 = vrot.slane %v1049, 2
      %v1547 = vrot.slane %v1052, 2
      %v1548 = vrot.slane %v1055, 2
      %v1549 = vrot.slane %v1058, 2
      %v1550 = vrot.slane %v1061, 2
      %v1551 = vrot.slane %v1064, 2
      %v1552 = vrot.slane %v1038, 2
      %v1553 = vrot.slane %v1041, 2
      %v1554 = vrot.slane %v1044, 2
      %v1555 = vrot.slane %v1047, 2
      %v1556 = vrot.slane %v1050, 2
      %v1557 = vrot.slane %v1053, 2
      %v1558 = vrot.slane %v1056, 2
      %v1559 = vrot.slane %v1059, 2
      %v1560 = vrot.slane %v1062, 2
      %v1561 = vrot.slane %v1065, 2
      %v1562 = vsel %vm773, %v1542, %v1552
      %v1563 = vsel %vm773, %v1543, %v1553
      %v1564 = vsel %vm773, %v1544, %v1554
      %v1565 = vsel %vm773, %v1545, %v1555
      %v1566 = vsel %vm773, %v1546, %v1556
      %v1567 = vsel %vm773, %v1547, %v1557
      %v1568 = vsel %vm773, %v1548, %v1558
      %v1569 = vsel %vm773, %v1549, %v1559
      %v1570 = vsel %vm773, %v1550, %v1560
      %v1571 = vsel %vm773, %v1551, %v1561
      %v1572 = vsel %vm773, %v1532, %v1542
      %v1573 = vsel %vm773, %v1533, %v1543
      %v1574 = vsel %vm773, %v1534, %v1544
      %v1575 = vsel %vm773, %v1535, %v1545
      %v1576 = vsel %vm773, %v1536, %v1546
      %v1577 = vsel %vm773, %v1537, %v1547
      %v1578 = vsel %vm773, %v1538, %v1548
      %v1579 = vsel %vm773, %v1539, %v1549
      %v1580 = vsel %vm773, %v1540, %v1550
      %v1581 = vsel %vm773, %v1541, %v1551
      %v1582 = vpack.c.bf16 %v1562, %v1572
      %v1583 = vpack.c.bf16 %v1563, %v1573
      %v1584 = vpack.c.bf16 %v1564, %v1574
      %v1585 = vpack.c.bf16 %v1565, %v1575
      %v1586 = vpack.c.bf16 %v1566, %v1576
      %v1587 = vpack.c.bf16 %v1567, %v1577
      %v1588 = vpack.c.bf16 %v1568, %v1578
      %v1589 = vpack.c.bf16 %v1569, %v1579
      %v1590 = vpack.c.bf16 %v1570, %v1580
      %v1591 = vpack.c.bf16 %v1571, %v1581
      %s1592 = scalar_lea.vmem %s1, 320
      %v1593 = vld [vmem:[%s1592] sm:$0xf]
      %v1594 = vld [vmem:[%s1592 + $0x4] sm:$0xf]
      %v1595 = vld [vmem:[%s1592 + $0x8] sm:$0xf]
      %v1596 = vld [vmem:[%s1592 + $0xc] sm:$0xf]
      %v1597 = vld [vmem:[%s1592 + $0x10] sm:$0xf]
      %v1598 = vld [vmem:[%s1592 + $0x14] sm:$0xf]
      %v1599 = vld [vmem:[%s1592 + $0x18] sm:$0xf]
      %v1600 = vld [vmem:[%s1592 + $0x1c] sm:$0xf]
      %v1601 = vld [vmem:[%s1592 + $0x20] sm:$0xf]
      %v1602 = vld [vmem:[%s1592 + $0x24] sm:$0xf]
      %v1603 = vld [vmem:[%s1592 + $0x28] sm:$0xf]
      %v1604 = vld [vmem:[%s1592 + $0x2c] sm:$0xf]
      %v1605 = vld [vmem:[%s1592 + $0x30] sm:$0xf]
      %v1606 = vld [vmem:[%s1592 + $0x34] sm:$0xf]
      %v1607 = vld [vmem:[%s1592 + $0x38] sm:$0xf]
      %v1608 = vld [vmem:[%s1592 + $0x3c] sm:$0xf]
      %v1625 = vunpack.c.l.b16 %v1593
      %v1626 = vunpack.c.l.b16 %v1594
      %v1627 = vunpack.c.l.b16 %v1595
      %v1628 = vunpack.c.l.b16 %v1596
      %v1629 = vunpack.c.l.b16 %v1597
      %v1630 = vunpack.c.l.b16 %v1598
      %v1631 = vunpack.c.l.b16 %v1599
      %v1632 = vunpack.c.l.b16 %v1600
      %v1633 = vunpack.c.l.b16 %v1601
      %v1634 = vunpack.c.l.b16 %v1602
      %v1635 = vunpack.c.l.b16 %v1603
      %v1636 = vunpack.c.l.b16 %v1604
      %v1637 = vunpack.c.l.b16 %v1605
      %v1638 = vunpack.c.l.b16 %v1606
      %v1639 = vunpack.c.l.b16 %v1607
      %v1640 = vunpack.c.l.b16 %v1608
      %v1641 = vpack.c.b16 %v1626, %v1625
      %v1642 = vpack.c.b16 %v1628, %v1627
      %v1643 = vpack.c.b16 %v1630, %v1629
      %v1644 = vpack.c.b16 %v1632, %v1631
      %v1645 = vpack.c.b16 %v1634, %v1633
      %v1646 = vpack.c.b16 %v1636, %v1635
      %v1647 = vpack.c.b16 %v1638, %v1637
      %v1648 = vpack.c.b16 %v1640, %v1639
      %1657 = vmatprep.subr.bf16.mxu0 0
      %1658 = vmatpush1.bf16.msra.mxu0 %v1641
      %1659 = vmatprep.subr.bf16.mxu0 0
      %1660 = vmatpush1.bf16.msra.mxu0 %v1642
      %1661 = vmatprep.subr.bf16.mxu0 0
      %1662 = vmatpush1.bf16.msra.mxu0 %v1643
      %1663 = vmatprep.subr.bf16.mxu0 0
      %1664 = vmatpush1.bf16.msra.mxu0 %v1644
      %1665 = vmatprep.subr.bf16.mxu0 0
      %1666 = vmatpush1.bf16.msra.mxu0 %v1645
      %1667 = vmatprep.subr.bf16.mxu0 0
      %1668 = vmatpush1.bf16.msra.mxu0 %v1646
      %1669 = vmatprep.subr.bf16.mxu0 0
      %1670 = vmatpush1.bf16.msra.mxu0 %v1647
      %1671 = vmatprep.subr.bf16.mxu0 0
      %1672 = vmatpush1.bf16.msra.mxu0 %v1648
      %1673 = vmatprep.subr.bf16.mxu0 0
      %1674 = vmatpush1.bf16.msra.mxu0 0
      %1675 = vmatprep.subr.bf16.mxu0 0
      %1676 = vmatpush1.bf16.msra.mxu0 0
      %1677 = vmatprep.subr.bf16.mxu0 0
      %1678 = vmatpush1.bf16.msra.mxu0 0
      %1679 = vmatprep.subr.bf16.mxu0 0
      %1680 = vmatpush1.bf16.msra.mxu0 0
      %1681 = vmatprep.subr.bf16.mxu0 0
      %1682 = vmatpush1.bf16.msra.mxu0 0
      %1683 = vmatprep.subr.bf16.mxu0 0
      %1684 = vmatpush1.bf16.msra.mxu0 0
      %1685 = vmatprep.subr.bf16.mxu0 0
      %1686 = vmatpush1.bf16.msra.mxu0 0
      %1687 = vmatprep.subr.bf16.mxu0 0
      %1688 = vmatpush1.bf16.msra.mxu0 0
      %1689 = vmatprep.mubr.bf16.mxu0 0
      %1690 = vmatmul.mubr.bf16.gmra.mrb[0].mxu0 %v1582
      %v1691 = vpop.f32.mrb[0].mxu0
      %v1692 = vadd.f32 0.0, %v1691
      %v1693 = vpop.f32.mrb[0].mxu0
      %v1694 = vpop.f32.mrb[0].mxu0
      %v1695 = vadd.f32 0.0, %v1694
      %v1696 = vpop.f32.mrb[0].mxu0
      %1697 = vmatprep.mubr.bf16.mxu0 0
      %1698 = vmatmul.mubr.bf16.gmra.mrb[0].mxu0 %v1583
      %v1699 = vpop.f32.mrb[0].mxu0
      %v1700 = vadd.f32 0.0, %v1699
      %v1701 = vpop.f32.mrb[0].mxu0
      %v1702 = vpop.f32.mrb[0].mxu0
      %v1703 = vadd.f32 0.0, %v1702
      %v1704 = vpop.f32.mrb[0].mxu0
      %1705 = vmatprep.mubr.bf16.mxu0 0
      %1706 = vmatmul.mubr.bf16.gmra.mrb[0].mxu0 %v1584
      %v1707 = vpop.f32.mrb[0].mxu0
      %v1708 = vadd.f32 0.0, %v1707
      %v1709 = vpop.f32.mrb[0].mxu0
      %v1710 = vpop.f32.mrb[0].mxu0
      %v1711 = vadd.f32 0.0, %v1710
      %v1712 = vpop.f32.mrb[0].mxu0
      %1713 = vmatprep.mubr.bf16.mxu0 0
      %1714 = vmatmul.mubr.bf16.gmra.mrb[0].mxu0 %v1585
      %v1715 = vpop.f32.mrb[0].mxu0
      %v1716 = vadd.f32 0.0, %v1715
      %v1717 = vpop.f32.mrb[0].mxu0
      %v1718 = vpop.f32.mrb[0].mxu0
      %v1719 = vadd.f32 0.0, %v1718
      %v1720 = vpop.f32.mrb[0].mxu0
      %1721 = vmatprep.mubr.bf16.mxu0 0
      %1722 = vmatmul.mubr.bf16.gmra.mrb[0].mxu0 %v1586
      %v1723 = vpop.f32.mrb[0].mxu0
      %v1724 = vadd.f32 0.0, %v1723
      %v1725 = vpop.f32.mrb[0].mxu0
      %v1726 = vpop.f32.mrb[0].mxu0
      %v1727 = vadd.f32 0.0, %v1726
      %v1728 = vpop.f32.mrb[0].mxu0
      %1729 = vmatprep.mubr.bf16.mxu0 0
      %1730 = vmatmul.mubr.bf16.gmra.mrb[0].mxu0 %v1587
      %v1731 = vpop.f32.mrb[0].mxu0
      %v1732 = vadd.f32 0.0, %v1731
      %v1733 = vpop.f32.mrb[0].mxu0
      %v1734 = vpop.f32.mrb[0].mxu0
      %v1735 = vadd.f32 0.0, %v1734
      %v1736 = vpop.f32.mrb[0].mxu0
      %1737 = vmatprep.mubr.bf16.mxu0 0
      %1738 = vmatmul.mubr.bf16.gmra.mrb[0].mxu0 %v1588
      %v1739 = vpop.f32.mrb[0].mxu0
      %v1740 = vadd.f32 0.0, %v1739
      %v1741 = vpop.f32.mrb[0].mxu0
      %v1742 = vpop.f32.mrb[0].mxu0
      %v1743 = vadd.f32 0.0, %v1742
      %v1744 = vpop.f32.mrb[0].mxu0
      %1745 = vmatprep.mubr.bf16.mxu0 0
      %1746 = vmatmul.mubr.bf16.gmra.mrb[0].mxu0 %v1589
      %v1747 = vpop.f32.mrb[0].mxu0
      %v1748 = vadd.f32 0.0, %v1747
      %v1749 = vpop.f32.mrb[0].mxu0
      %v1750 = vpop.f32.mrb[0].mxu0
      %v1751 = vadd.f32 0.0, %v1750
      %v1752 = vpop.f32.mrb[0].mxu0
      %1753 = vmatprep.mubr.bf16.mxu0 0
      %1754 = vmatmul.mubr.bf16.gmra.mrb[0].mxu0 %v1590
      %v1755 = vpop.f32.mrb[0].mxu0
      %v1756 = vadd.f32 0.0, %v1755
      %v1757 = vpop.f32.mrb[0].mxu0
      %v1758 = vpop.f32.mrb[0].mxu0
      %v1759 = vadd.f32 0.0, %v1758
      %v1760 = vpop.f32.mrb[0].mxu0
      %1761 = vmatprep.mubr.bf16.mxu0 0
      %1762 = vmatmul.mubr.bf16.gmra.mrb[0].mxu0 %v1591
      %v1763 = vpop.f32.mrb[0].mxu0
      %v1764 = vadd.f32 0.0, %v1763
      %v1765 = vpop.f32.mrb[0].mxu0
      %v1766 = vpop.f32.mrb[0].mxu0
      %v1767 = vadd.f32 0.0, %v1766
      %v1768 = vpop.f32.mrb[0].mxu0
      %1769 = vdwg.mxu0
      %v1770 = vadd.f32 %v1512, %v1692
      %v1771 = vadd.f32 %v1513, %v1695
      %v1772 = vadd.f32 %v1514, %v1700
      %v1773 = vadd.f32 %v1515, %v1703
      %v1774 = vadd.f32 %v1516, %v1708
      %v1775 = vadd.f32 %v1517, %v1711
      %v1776 = vadd.f32 %v1518, %v1716
      %v1777 = vadd.f32 %v1519, %v1719
      %v1778 = vadd.f32 %v1520, %v1724
      %v1779 = vadd.f32 %v1521, %v1727
      %v1780 = vadd.f32 %v1522, %v1732
      %v1781 = vadd.f32 %v1523, %v1735
      %v1782 = vadd.f32 %v1524, %v1740
      %v1783 = vadd.f32 %v1525, %v1743
      %v1784 = vadd.f32 %v1526, %v1748
      %v1785 = vadd.f32 %v1527, %v1751
      %v1786 = vadd.f32 %v1528, %v1756
      %v1787 = vadd.f32 %v1529, %v1759
      %v1788 = vadd.f32 %v1530, %v1764
      %v1789 = vadd.f32 %v1531, %v1767
      %s1790 = sadd.s32 %s251, 2
      %s1791 = smul.u32 %s1790, 4
      %s1792 = smul.addr %s1791, 4
      %s1793 = scalar_lea.vmem %s238, %s1792
      %v1794 = vld [vmem:[%s1793] sm:$0xf]
      %v1795 = vld [vmem:[%s1793 + $0x4] sm:$0xf]
      %v1796 = vld [vmem:[%s1793 + $0x8] sm:$0xf]
      %v1797 = vld [vmem:[%s1793 + $0x10] sm:$0xf]
      %v1798 = vld [vmem:[%s1793 + $0x14] sm:$0xf]
      %v1799 = vld [vmem:[%s1793 + $0x18] sm:$0xf]
      %v1800 = vld [vmem:[%s1793 + $0x20] sm:$0xf]
      %v1801 = vld [vmem:[%s1793 + $0x24] sm:$0xf]
      %v1802 = vld [vmem:[%s1793 + $0x28] sm:$0xf]
      %v1803 = vld [vmem:[%s1793 + $0x30] sm:$0xf]
      %v1804 = vld [vmem:[%s1793 + $0x34] sm:$0xf]
      %v1805 = vld [vmem:[%s1793 + $0x38] sm:$0xf]
      %v1806 = vld [vmem:[%s1793 + $0x40] sm:$0xf]
      %v1807 = vld [vmem:[%s1793 + $0x44] sm:$0xf]
      %v1808 = vld [vmem:[%s1793 + $0x48] sm:$0xf]
      %v1809 = vld [vmem:[%s1793 + $0x50] sm:$0xf]
      %v1810 = vld [vmem:[%s1793 + $0x54] sm:$0xf]
      %v1811 = vld [vmem:[%s1793 + $0x58] sm:$0xf]
      %v1812 = vld [vmem:[%s1793 + $0x60] sm:$0xf]
      %v1813 = vld [vmem:[%s1793 + $0x64] sm:$0xf]
      %v1814 = vld [vmem:[%s1793 + $0x68] sm:$0xf]
      %v1815 = vld [vmem:[%s1793 + $0x70] sm:$0xf]
      %v1816 = vld [vmem:[%s1793 + $0x74] sm:$0xf]
      %v1817 = vld [vmem:[%s1793 + $0x78] sm:$0xf]
      %v1818 = vld [vmem:[%s1793 + $0x80] sm:$0xf]
      %v1819 = vld [vmem:[%s1793 + $0x84] sm:$0xf]
      %v1820 = vld [vmem:[%s1793 + $0x88] sm:$0xf]
      %v1821 = vld [vmem:[%s1793 + $0x90] sm:$0xf]
      %v1822 = vld [vmem:[%s1793 + $0x94] sm:$0xf]
      %v1823 = vld [vmem:[%s1793 + $0x98] sm:$0xf]
      %v1824 = vunpack.c.l.bf16 %v1794
      %v1825 = vunpack.c.l.bf16 %v1795
      %v1826 = vunpack.c.l.bf16 %v1796
      %v1827 = vunpack.c.l.bf16 %v1797
      %v1828 = vunpack.c.l.bf16 %v1798
      %v1829 = vunpack.c.l.bf16 %v1799
      %v1830 = vunpack.c.l.bf16 %v1800
      %v1831 = vunpack.c.l.bf16 %v1801
      %v1832 = vunpack.c.l.bf16 %v1802
      %v1833 = vunpack.c.l.bf16 %v1803
      %v1834 = vunpack.c.l.bf16 %v1804
      %v1835 = vunpack.c.l.bf16 %v1805
      %v1836 = vunpack.c.l.bf16 %v1806
      %v1837 = vunpack.c.l.bf16 %v1807
      %v1838 = vunpack.c.l.bf16 %v1808
      %v1839 = vunpack.c.l.bf16 %v1809
      %v1840 = vunpack.c.l.bf16 %v1810
      %v1841 = vunpack.c.l.bf16 %v1811
      %v1842 = vunpack.c.l.bf16 %v1812
      %v1843 = vunpack.c.l.bf16 %v1813
      %v1844 = vunpack.c.l.bf16 %v1814
      %v1845 = vunpack.c.l.bf16 %v1815
      %v1846 = vunpack.c.l.bf16 %v1816
      %v1847 = vunpack.c.l.bf16 %v1817
      %v1848 = vunpack.c.l.bf16 %v1818
      %v1849 = vunpack.c.l.bf16 %v1819
      %v1850 = vunpack.c.l.bf16 %v1820
      %v1851 = vunpack.c.l.bf16 %v1821
      %v1852 = vunpack.c.l.bf16 %v1822
      %v1853 = vunpack.c.l.bf16 %v1823
      %v1854 = vpack.c.bf16 %v1825, %v1824
      %v1855 = vpack.c.bf16 %v1828, %v1827
      %v1856 = vpack.c.bf16 %v1831, %v1830
      %v1857 = vpack.c.bf16 %v1834, %v1833
      %v1858 = vpack.c.bf16 %v1837, %v1836
      %v1859 = vpack.c.bf16 %v1840, %v1839
      %v1860 = vpack.c.bf16 %v1843, %v1842
      %v1861 = vpack.c.bf16 %v1846, %v1845
      %v1862 = vpack.c.bf16 %v1849, %v1848
      %v1863 = vpack.c.bf16 %v1852, %v1851
      %s1864 = scalar_lea.vmem %s1, 384
      %v1865 = vld [vmem:[%s1864] sm:$0xf]
      %v1866 = vld [vmem:[%s1864 + $0x4] sm:$0xf]
      %v1867 = vld [vmem:[%s1864 + $0x8] sm:$0xf]
      %v1868 = vld [vmem:[%s1864 + $0xc] sm:$0xf]
      %v1869 = vld [vmem:[%s1864 + $0x10] sm:$0xf]
      %v1870 = vld [vmem:[%s1864 + $0x14] sm:$0xf]
      %v1871 = vld [vmem:[%s1864 + $0x18] sm:$0xf]
      %v1872 = vld [vmem:[%s1864 + $0x1c] sm:$0xf]
      %v1873 = vld [vmem:[%s1864 + $0x20] sm:$0xf]
      %v1874 = vld [vmem:[%s1864 + $0x24] sm:$0xf]
      %v1875 = vld [vmem:[%s1864 + $0x28] sm:$0xf]
      %v1876 = vld [vmem:[%s1864 + $0x2c] sm:$0xf]
      %v1877 = vld [vmem:[%s1864 + $0x30] sm:$0xf]
      %v1878 = vld [vmem:[%s1864 + $0x34] sm:$0xf]
      %v1879 = vld [vmem:[%s1864 + $0x38] sm:$0xf]
      %v1880 = vld [vmem:[%s1864 + $0x3c] sm:$0xf]
      %v1897 = vunpack.c.l.b16 %v1865
      %v1898 = vunpack.c.l.b16 %v1866
      %v1899 = vunpack.c.l.b16 %v1867
      %v1900 = vunpack.c.l.b16 %v1868
      %v1901 = vunpack.c.l.b16 %v1869
      %v1902 = vunpack.c.l.b16 %v1870
      %v1903 = vunpack.c.l.b16 %v1871
      %v1904 = vunpack.c.l.b16 %v1872
      %v1905 = vunpack.c.l.b16 %v1873
      %v1906 = vunpack.c.l.b16 %v1874
      %v1907 = vunpack.c.l.b16 %v1875
      %v1908 = vunpack.c.l.b16 %v1876
      %v1909 = vunpack.c.l.b16 %v1877
      %v1910 = vunpack.c.l.b16 %v1878
      %v1911 = vunpack.c.l.b16 %v1879
      %v1912 = vunpack.c.l.b16 %v1880
      %v1913 = vpack.c.b16 %v1898, %v1897
      %v1914 = vpack.c.b16 %v1900, %v1899
      %v1915 = vpack.c.b16 %v1902, %v1901
      %v1916 = vpack.c.b16 %v1904, %v1903
      %v1917 = vpack.c.b16 %v1906, %v1905
      %v1918 = vpack.c.b16 %v1908, %v1907
      %v1919 = vpack.c.b16 %v1910, %v1909
      %v1920 = vpack.c.b16 %v1912, %v1911
      %1929 = vmatprep.subr.bf16.mxu0 0
      %1930 = vmatpush1.bf16.msra.mxu0 %v1913
      %1931 = vmatprep.subr.bf16.mxu0 0
      %1932 = vmatpush1.bf16.msra.mxu0 %v1914
      %1933 = vmatprep.subr.bf16.mxu0 0
      %1934 = vmatpush1.bf16.msra.mxu0 %v1915
      %1935 = vmatprep.subr.bf16.mxu0 0
      %1936 = vmatpush1.bf16.msra.mxu0 %v1916
      %1937 = vmatprep.subr.bf16.mxu0 0
      %1938 = vmatpush1.bf16.msra.mxu0 %v1917
      %1939 = vmatprep.subr.bf16.mxu0 0
      %1940 = vmatpush1.bf16.msra.mxu0 %v1918
      %1941 = vmatprep.subr.bf16.mxu0 0
      %1942 = vmatpush1.bf16.msra.mxu0 %v1919
      %1943 = vmatprep.subr.bf16.mxu0 0
      %1944 = vmatpush1.bf16.msra.mxu0 %v1920
      %1945 = vmatprep.subr.bf16.mxu0 0
      %1946 = vmatpush1.bf16.msra.mxu0 0
      %1947 = vmatprep.subr.bf16.mxu0 0
      %1948 = vmatpush1.bf16.msra.mxu0 0
      %1949 = vmatprep.subr.bf16.mxu0 0
      %1950 = vmatpush1.bf16.msra.mxu0 0
      %1951 = vmatprep.subr.bf16.mxu0 0
      %1952 = vmatpush1.bf16.msra.mxu0 0
      %1953 = vmatprep.subr.bf16.mxu0 0
      %1954 = vmatpush1.bf16.msra.mxu0 0
      %1955 = vmatprep.subr.bf16.mxu0 0
      %1956 = vmatpush1.bf16.msra.mxu0 0
      %1957 = vmatprep.subr.bf16.mxu0 0
      %1958 = vmatpush1.bf16.msra.mxu0 0
      %1959 = vmatprep.subr.bf16.mxu0 0
      %1960 = vmatpush1.bf16.msra.mxu0 0
      %1961 = vmatprep.mubr.bf16.mxu0 0
      %1962 = vmatmul.mubr.bf16.gmra.mrb[0].mxu0 %v1854
      %v1963 = vpop.f32.mrb[0].mxu0
      %v1964 = vadd.f32 0.0, %v1963
      %v1965 = vpop.f32.mrb[0].mxu0
      %v1966 = vpop.f32.mrb[0].mxu0
      %v1967 = vadd.f32 0.0, %v1966
      %v1968 = vpop.f32.mrb[0].mxu0
      %1969 = vmatprep.mubr.bf16.mxu0 0
      %1970 = vmatmul.mubr.bf16.gmra.mrb[0].mxu0 %v1855
      %v1971 = vpop.f32.mrb[0].mxu0
      %v1972 = vadd.f32 0.0, %v1971
      %v1973 = vpop.f32.mrb[0].mxu0
      %v1974 = vpop.f32.mrb[0].mxu0
      %v1975 = vadd.f32 0.0, %v1974
      %v1976 = vpop.f32.mrb[0].mxu0
      %1977 = vmatprep.mubr.bf16.mxu0 0
      %1978 = vmatmul.mubr.bf16.gmra.mrb[0].mxu0 %v1856
      %v1979 = vpop.f32.mrb[0].mxu0
      %v1980 = vadd.f32 0.0, %v1979
      %v1981 = vpop.f32.mrb[0].mxu0
      %v1982 = vpop.f32.mrb[0].mxu0
      %v1983 = vadd.f32 0.0, %v1982
      %v1984 = vpop.f32.mrb[0].mxu0
      %1985 = vmatprep.mubr.bf16.mxu0 0
      %1986 = vmatmul.mubr.bf16.gmra.mrb[0].mxu0 %v1857
      %v1987 = vpop.f32.mrb[0].mxu0
      %v1988 = vadd.f32 0.0, %v1987
      %v1989 = vpop.f32.mrb[0].mxu0
      %v1990 = vpop.f32.mrb[0].mxu0
      %v1991 = vadd.f32 0.0, %v1990
      %v1992 = vpop.f32.mrb[0].mxu0
      %1993 = vmatprep.mubr.bf16.mxu0 0
      %1994 = vmatmul.mubr.bf16.gmra.mrb[0].mxu0 %v1858
      %v1995 = vpop.f32.mrb[0].mxu0
      %v1996 = vadd.f32 0.0, %v1995
      %v1997 = vpop.f32.mrb[0].mxu0
      %v1998 = vpop.f32.mrb[0].mxu0
      %v1999 = vadd.f32 0.0, %v1998
      %v2000 = vpop.f32.mrb[0].mxu0
      %2001 = vmatprep.mubr.bf16.mxu0 0
      %2002 = vmatmul.mubr.bf16.gmra.mrb[0].mxu0 %v1859
      %v2003 = vpop.f32.mrb[0].mxu0
      %v2004 = vadd.f32 0.0, %v2003
      %v2005 = vpop.f32.mrb[0].mxu0
      %v2006 = vpop.f32.mrb[0].mxu0
      %v2007 = vadd.f32 0.0, %v2006
      %v2008 = vpop.f32.mrb[0].mxu0
      %2009 = vmatprep.mubr.bf16.mxu0 0
      %2010 = vmatmul.mubr.bf16.gmra.mrb[0].mxu0 %v1860
      %v2011 = vpop.f32.mrb[0].mxu0
      %v2012 = vadd.f32 0.0, %v2011
      %v2013 = vpop.f32.mrb[0].mxu0
      %v2014 = vpop.f32.mrb[0].mxu0
      %v2015 = vadd.f32 0.0, %v2014
      %v2016 = vpop.f32.mrb[0].mxu0
      %2017 = vmatprep.mubr.bf16.mxu0 0
      %2018 = vmatmul.mubr.bf16.gmra.mrb[0].mxu0 %v1861
      %v2019 = vpop.f32.mrb[0].mxu0
      %v2020 = vadd.f32 0.0, %v2019
      %v2021 = vpop.f32.mrb[0].mxu0
      %v2022 = vpop.f32.mrb[0].mxu0
      %v2023 = vadd.f32 0.0, %v2022
      %v2024 = vpop.f32.mrb[0].mxu0
      %2025 = vmatprep.mubr.bf16.mxu0 0
      %2026 = vmatmul.mubr.bf16.gmra.mrb[0].mxu0 %v1862
      %v2027 = vpop.f32.mrb[0].mxu0
      %v2028 = vadd.f32 0.0, %v2027
      %v2029 = vpop.f32.mrb[0].mxu0
      %v2030 = vpop.f32.mrb[0].mxu0
      %v2031 = vadd.f32 0.0, %v2030
      %v2032 = vpop.f32.mrb[0].mxu0
      %2033 = vmatprep.mubr.bf16.mxu0 0
      %2034 = vmatmul.mubr.bf16.gmra.mrb[0].mxu0 %v1863
      %v2035 = vpop.f32.mrb[0].mxu0
      %v2036 = vadd.f32 0.0, %v2035
      %v2037 = vpop.f32.mrb[0].mxu0
      %v2038 = vpop.f32.mrb[0].mxu0
      %v2039 = vadd.f32 0.0, %v2038
      %v2040 = vpop.f32.mrb[0].mxu0
      %2041 = vdwg.mxu0
      %v2042 = vadd.f32 %v1770, %v1964
      %v2043 = vadd.f32 %v1771, %v1967
      %v2044 = vadd.f32 %v1772, %v1972
      %v2045 = vadd.f32 %v1773, %v1975
      %v2046 = vadd.f32 %v1774, %v1980
      %v2047 = vadd.f32 %v1775, %v1983
      %v2048 = vadd.f32 %v1776, %v1988
      %v2049 = vadd.f32 %v1777, %v1991
      %v2050 = vadd.f32 %v1778, %v1996
      %v2051 = vadd.f32 %v1779, %v1999
      %v2052 = vadd.f32 %v1780, %v2004
      %v2053 = vadd.f32 %v1781, %v2007
      %v2054 = vadd.f32 %v1782, %v2012
      %v2055 = vadd.f32 %v1783, %v2015
      %v2056 = vadd.f32 %v1784, %v2020
      %v2057 = vadd.f32 %v1785, %v2023
      %v2058 = vadd.f32 %v1786, %v2028
      %v2059 = vadd.f32 %v1787, %v2031
      %v2060 = vadd.f32 %v1788, %v2036
      %v2061 = vadd.f32 %v1789, %v2039
      %v2062 = vrot.slane %v1824, 1
      %v2063 = vrot.slane %v1827, 1
      %v2064 = vrot.slane %v1830, 1
      %v2065 = vrot.slane %v1833, 1
      %v2066 = vrot.slane %v1836, 1
      %v2067 = vrot.slane %v1839, 1
      %v2068 = vrot.slane %v1842, 1
      %v2069 = vrot.slane %v1845, 1
      %v2070 = vrot.slane %v1848, 1
      %v2071 = vrot.slane %v1851, 1
      %v2072 = vrot.slane %v1825, 1
      %v2073 = vrot.slane %v1828, 1
      %v2074 = vrot.slane %v1831, 1
      %v2075 = vrot.slane %v1834, 1
      %v2076 = vrot.slane %v1837, 1
      %v2077 = vrot.slane %v1840, 1
      %v2078 = vrot.slane %v1843, 1
      %v2079 = vrot.slane %v1846, 1
      %v2080 = vrot.slane %v1849, 1
      %v2081 = vrot.slane %v1852, 1
      %v2082 = vrot.slane %v1826, 1
      %v2083 = vrot.slane %v1829, 1
      %v2084 = vrot.slane %v1832, 1
      %v2085 = vrot.slane %v1835, 1
      %v2086 = vrot.slane %v1838, 1
      %v2087 = vrot.slane %v1841, 1
      %v2088 = vrot.slane %v1844, 1
      %v2089 = vrot.slane %v1847, 1
      %v2090 = vrot.slane %v1850, 1
      %v2091 = vrot.slane %v1853, 1
      %v2092 = vsel %vm373, %v2072, %v2082
      %v2093 = vsel %vm373, %v2073, %v2083
      %v2094 = vsel %vm373, %v2074, %v2084
      %v2095 = vsel %vm373, %v2075, %v2085
      %v2096 = vsel %vm373, %v2076, %v2086
      %v2097 = vsel %vm373, %v2077, %v2087
      %v2098 = vsel %vm373, %v2078, %v2088
      %v2099 = vsel %vm373, %v2079, %v2089
      %v2100 = vsel %vm373, %v2080, %v2090
      %v2101 = vsel %vm373, %v2081, %v2091
      %v2102 = vsel %vm373, %v2062, %v2072
      %v2103 = vsel %vm373, %v2063, %v2073
      %v2104 = vsel %vm373, %v2064, %v2074
      %v2105 = vsel %vm373, %v2065, %v2075
      %v2106 = vsel %vm373, %v2066, %v2076
      %v2107 = vsel %vm373, %v2067, %v2077
      %v2108 = vsel %vm373, %v2068, %v2078
      %v2109 = vsel %vm373, %v2069, %v2079
      %v2110 = vsel %vm373, %v2070, %v2080
      %v2111 = vsel %vm373, %v2071, %v2081
      %v2112 = vpack.c.bf16 %v2092, %v2102
      %v2113 = vpack.c.bf16 %v2093, %v2103
      %v2114 = vpack.c.bf16 %v2094, %v2104
      %v2115 = vpack.c.bf16 %v2095, %v2105
      %v2116 = vpack.c.bf16 %v2096, %v2106
      %v2117 = vpack.c.bf16 %v2097, %v2107
      %v2118 = vpack.c.bf16 %v2098, %v2108
      %v2119 = vpack.c.bf16 %v2099, %v2109
      %v2120 = vpack.c.bf16 %v2100, %v2110
      %v2121 = vpack.c.bf16 %v2101, %v2111
      %s2122 = scalar_lea.vmem %s1, 448
      %v2123 = vld [vmem:[%s2122] sm:$0xf]
      %v2124 = vld [vmem:[%s2122 + $0x4] sm:$0xf]
      %v2125 = vld [vmem:[%s2122 + $0x8] sm:$0xf]
      %v2126 = vld [vmem:[%s2122 + $0xc] sm:$0xf]
      %v2127 = vld [vmem:[%s2122 + $0x10] sm:$0xf]
      %v2128 = vld [vmem:[%s2122 + $0x14] sm:$0xf]
      %v2129 = vld [vmem:[%s2122 + $0x18] sm:$0xf]
      %v2130 = vld [vmem:[%s2122 + $0x1c] sm:$0xf]
      %v2131 = vld [vmem:[%s2122 + $0x20] sm:$0xf]
      %v2132 = vld [vmem:[%s2122 + $0x24] sm:$0xf]
      %v2133 = vld [vmem:[%s2122 + $0x28] sm:$0xf]
      %v2134 = vld [vmem:[%s2122 + $0x2c] sm:$0xf]
      %v2135 = vld [vmem:[%s2122 + $0x30] sm:$0xf]
      %v2136 = vld [vmem:[%s2122 + $0x34] sm:$0xf]
      %v2137 = vld [vmem:[%s2122 + $0x38] sm:$0xf]
      %v2138 = vld [vmem:[%s2122 + $0x3c] sm:$0xf]
      %v2155 = vunpack.c.l.b16 %v2123
      %v2156 = vunpack.c.l.b16 %v2124
      %v2157 = vunpack.c.l.b16 %v2125
      %v2158 = vunpack.c.l.b16 %v2126
      %v2159 = vunpack.c.l.b16 %v2127
      %v2160 = vunpack.c.l.b16 %v2128
      %v2161 = vunpack.c.l.b16 %v2129
      %v2162 = vunpack.c.l.b16 %v2130
      %v2163 = vunpack.c.l.b16 %v2131
      %v2164 = vunpack.c.l.b16 %v2132
      %v2165 = vunpack.c.l.b16 %v2133
      %v2166 = vunpack.c.l.b16 %v2134
      %v2167 = vunpack.c.l.b16 %v2135
      %v2168 = vunpack.c.l.b16 %v2136
      %v2169 = vunpack.c.l.b16 %v2137
      %v2170 = vunpack.c.l.b16 %v2138
      %v2171 = vpack.c.b16 %v2156, %v2155
      %v2172 = vpack.c.b16 %v2158, %v2157
      %v2173 = vpack.c.b16 %v2160, %v2159
      %v2174 = vpack.c.b16 %v2162, %v2161
      %v2175 = vpack.c.b16 %v2164, %v2163
      %v2176 = vpack.c.b16 %v2166, %v2165
      %v2177 = vpack.c.b16 %v2168, %v2167
      %v2178 = vpack.c.b16 %v2170, %v2169
      %2187 = vmatprep.subr.bf16.mxu0 0
      %2188 = vmatpush1.bf16.msra.mxu0 %v2171
      %2189 = vmatprep.subr.bf16.mxu0 0
      %2190 = vmatpush1.bf16.msra.mxu0 %v2172
      %2191 = vmatprep.subr.bf16.mxu0 0
      %2192 = vmatpush1.bf16.msra.mxu0 %v2173
      %2193 = vmatprep.subr.bf16.mxu0 0
      %2194 = vmatpush1.bf16.msra.mxu0 %v2174
      %2195 = vmatprep.subr.bf16.mxu0 0
      %2196 = vmatpush1.bf16.msra.mxu0 %v2175
      %2197 = vmatprep.subr.bf16.mxu0 0
      %2198 = vmatpush1.bf16.msra.mxu0 %v2176
      %2199 = vmatprep.subr.bf16.mxu0 0
      %2200 = vmatpush1.bf16.msra.mxu0 %v2177
      %2201 = vmatprep.subr.bf16.mxu0 0
      %2202 = vmatpush1.bf16.msra.mxu0 %v2178
      %2203 = vmatprep.subr.bf16.mxu0 0
      %2204 = vmatpush1.bf16.msra.mxu0 0
      %2205 = vmatprep.subr.bf16.mxu0 0
      %2206 = vmatpush1.bf16.msra.mxu0 0
      %2207 = vmatprep.subr.bf16.mxu0 0
      %2208 = vmatpush1.bf16.msra.mxu0 0
      %2209 = vmatprep.subr.bf16.mxu0 0
      %2210 = vmatpush1.bf16.msra.mxu0 0
      %2211 = vmatprep.subr.bf16.mxu0 0
      %2212 = vmatpush1.bf16.msra.mxu0 0
      %2213 = vmatprep.subr.bf16.mxu0 0
      %2214 = vmatpush1.bf16.msra.mxu0 0
      %2215 = vmatprep.subr.bf16.mxu0 0
      %2216 = vmatpush1.bf16.msra.mxu0 0
      %2217 = vmatprep.subr.bf16.mxu0 0
      %2218 = vmatpush1.bf16.msra.mxu0 0
      %2219 = vmatprep.mubr.bf16.mxu0 0
      %2220 = vmatmul.mubr.bf16.gmra.mrb[0].mxu0 %v2112
      %v2221 = vpop.f32.mrb[0].mxu0
      %v2222 = vadd.f32 0.0, %v2221
      %v2223 = vpop.f32.mrb[0].mxu0
      %v2224 = vpop.f32.mrb[0].mxu0
      %v2225 = vadd.f32 0.0, %v2224
      %v2226 = vpop.f32.mrb[0].mxu0
      %2227 = vmatprep.mubr.bf16.mxu0 0
      %2228 = vmatmul.mubr.bf16.gmra.mrb[0].mxu0 %v2113
      %v2229 = vpop.f32.mrb[0].mxu0
      %v2230 = vadd.f32 0.0, %v2229
      %v2231 = vpop.f32.mrb[0].mxu0
      %v2232 = vpop.f32.mrb[0].mxu0
      %v2233 = vadd.f32 0.0, %v2232
      %v2234 = vpop.f32.mrb[0].mxu0
      %2235 = vmatprep.mubr.bf16.mxu0 0
      %2236 = vmatmul.mubr.bf16.gmra.mrb[0].mxu0 %v2114
      %v2237 = vpop.f32.mrb[0].mxu0
      %v2238 = vadd.f32 0.0, %v2237
      %v2239 = vpop.f32.mrb[0].mxu0
      %v2240 = vpop.f32.mrb[0].mxu0
      %v2241 = vadd.f32 0.0, %v2240
      %v2242 = vpop.f32.mrb[0].mxu0
      %2243 = vmatprep.mubr.bf16.mxu0 0
      %2244 = vmatmul.mubr.bf16.gmra.mrb[0].mxu0 %v2115
      %v2245 = vpop.f32.mrb[0].mxu0
      %v2246 = vadd.f32 0.0, %v2245
      %v2247 = vpop.f32.mrb[0].mxu0
      %v2248 = vpop.f32.mrb[0].mxu0
      %v2249 = vadd.f32 0.0, %v2248
      %v2250 = vpop.f32.mrb[0].mxu0
      %2251 = vmatprep.mubr.bf16.mxu0 0
      %2252 = vmatmul.mubr.bf16.gmra.mrb[0].mxu0 %v2116
      %v2253 = vpop.f32.mrb[0].mxu0
      %v2254 = vadd.f32 0.0, %v2253
      %v2255 = vpop.f32.mrb[0].mxu0
      %v2256 = vpop.f32.mrb[0].mxu0
      %v2257 = vadd.f32 0.0, %v2256
      %v2258 = vpop.f32.mrb[0].mxu0
      %2259 = vmatprep.mubr.bf16.mxu0 0
      %2260 = vmatmul.mubr.bf16.gmra.mrb[0].mxu0 %v2117
      %v2261 = vpop.f32.mrb[0].mxu0
      %v2262 = vadd.f32 0.0, %v2261
      %v2263 = vpop.f32.mrb[0].mxu0
      %v2264 = vpop.f32.mrb[0].mxu0
      %v2265 = vadd.f32 0.0, %v2264
      %v2266 = vpop.f32.mrb[0].mxu0
      %2267 = vmatprep.mubr.bf16.mxu0 0
      %2268 = vmatmul.mubr.bf16.gmra.mrb[0].mxu0 %v2118
      %v2269 = vpop.f32.mrb[0].mxu0
      %v2270 = vadd.f32 0.0, %v2269
      %v2271 = vpop.f32.mrb[0].mxu0
      %v2272 = vpop.f32.mrb[0].mxu0
      %v2273 = vadd.f32 0.0, %v2272
      %v2274 = vpop.f32.mrb[0].mxu0
      %2275 = vmatprep.mubr.bf16.mxu0 0
      %2276 = vmatmul.mubr.bf16.gmra.mrb[0].mxu0 %v2119
      %v2277 = vpop.f32.mrb[0].mxu0
      %v2278 = vadd.f32 0.0, %v2277
      %v2279 = vpop.f32.mrb[0].mxu0
      %v2280 = vpop.f32.mrb[0].mxu0
      %v2281 = vadd.f32 0.0, %v2280
      %v2282 = vpop.f32.mrb[0].mxu0
      %2283 = vmatprep.mubr.bf16.mxu0 0
      %2284 = vmatmul.mubr.bf16.gmra.mrb[0].mxu0 %v2120
      %v2285 = vpop.f32.mrb[0].mxu0
      %v2286 = vadd.f32 0.0, %v2285
      %v2287 = vpop.f32.mrb[0].mxu0
      %v2288 = vpop.f32.mrb[0].mxu0
      %v2289 = vadd.f32 0.0, %v2288
      %v2290 = vpop.f32.mrb[0].mxu0
      %2291 = vmatprep.mubr.bf16.mxu0 0
      %2292 = vmatmul.mubr.bf16.gmra.mrb[0].mxu0 %v2121
      %v2293 = vpop.f32.mrb[0].mxu0
      %v2294 = vadd.f32 0.0, %v2293
      %v2295 = vpop.f32.mrb[0].mxu0
      %v2296 = vpop.f32.mrb[0].mxu0
      %v2297 = vadd.f32 0.0, %v2296
      %v2298 = vpop.f32.mrb[0].mxu0
      %2299 = vdwg.mxu0
      %v2300 = vadd.f32 %v2042, %v2222
      %v2301 = vadd.f32 %v2043, %v2225
      %v2302 = vadd.f32 %v2044, %v2230
      %v2303 = vadd.f32 %v2045, %v2233
      %v2304 = vadd.f32 %v2046, %v2238
      %v2305 = vadd.f32 %v2047, %v2241
      %v2306 = vadd.f32 %v2048, %v2246
      %v2307 = vadd.f32 %v2049, %v2249
      %v2308 = vadd.f32 %v2050, %v2254
      %v2309 = vadd.f32 %v2051, %v2257
      %v2310 = vadd.f32 %v2052, %v2262
      %v2311 = vadd.f32 %v2053, %v2265
      %v2312 = vadd.f32 %v2054, %v2270
      %v2313 = vadd.f32 %v2055, %v2273
      %v2314 = vadd.f32 %v2056, %v2278
      %v2315 = vadd.f32 %v2057, %v2281
      %v2316 = vadd.f32 %v2058, %v2286
      %v2317 = vadd.f32 %v2059, %v2289
      %v2318 = vadd.f32 %v2060, %v2294
      %v2319 = vadd.f32 %v2061, %v2297
      %v2320 = vrot.slane %v1824, 2
      %v2321 = vrot.slane %v1827, 2
      %v2322 = vrot.slane %v1830, 2
      %v2323 = vrot.slane %v1833, 2
      %v2324 = vrot.slane %v1836, 2
      %v2325 = vrot.slane %v1839, 2
      %v2326 = vrot.slane %v1842, 2
      %v2327 = vrot.slane %v1845, 2
      %v2328 = vrot.slane %v1848, 2
      %v2329 = vrot.slane %v1851, 2
      %v2330 = vrot.slane %v1825, 2
      %v2331 = vrot.slane %v1828, 2
      %v2332 = vrot.slane %v1831, 2
      %v2333 = vrot.slane %v1834, 2
      %v2334 = vrot.slane %v1837, 2
      %v2335 = vrot.slane %v1840, 2
      %v2336 = vrot.slane %v1843, 2
      %v2337 = vrot.slane %v1846, 2
      %v2338 = vrot.slane %v1849, 2
      %v2339 = vrot.slane %v1852, 2
      %v2340 = vrot.slane %v1826, 2
      %v2341 = vrot.slane %v1829, 2
      %v2342 = vrot.slane %v1832, 2
      %v2343 = vrot.slane %v1835, 2
      %v2344 = vrot.slane %v1838, 2
      %v2345 = vrot.slane %v1841, 2
      %v2346 = vrot.slane %v1844, 2
      %v2347 = vrot.slane %v1847, 2
      %v2348 = vrot.slane %v1850, 2
      %v2349 = vrot.slane %v1853, 2
      %v2350 = vsel %vm773, %v2330, %v2340
      %v2351 = vsel %vm773, %v2331, %v2341
      %v2352 = vsel %vm773, %v2332, %v2342
      %v2353 = vsel %vm773, %v2333, %v2343
      %v2354 = vsel %vm773, %v2334, %v2344
      %v2355 = vsel %vm773, %v2335, %v2345
      %v2356 = vsel %vm773, %v2336, %v2346
      %v2357 = vsel %vm773, %v2337, %v2347
      %v2358 = vsel %vm773, %v2338, %v2348
      %v2359 = vsel %vm773, %v2339, %v2349
      %v2360 = vsel %vm773, %v2320, %v2330
      %v2361 = vsel %vm773, %v2321, %v2331
      %v2362 = vsel %vm773, %v2322, %v2332
      %v2363 = vsel %vm773, %v2323, %v2333
      %v2364 = vsel %vm773, %v2324, %v2334
      %v2365 = vsel %vm773, %v2325, %v2335
      %v2366 = vsel %vm773, %v2326, %v2336
      %v2367 = vsel %vm773, %v2327, %v2337
      %v2368 = vsel %vm773, %v2328, %v2338
      %v2369 = vsel %vm773, %v2329, %v2339
      %v2370 = vpack.c.bf16 %v2350, %v2360
      %v2371 = vpack.c.bf16 %v2351, %v2361
      %v2372 = vpack.c.bf16 %v2352, %v2362
      %v2373 = vpack.c.bf16 %v2353, %v2363
      %v2374 = vpack.c.bf16 %v2354, %v2364
      %v2375 = vpack.c.bf16 %v2355, %v2365
      %v2376 = vpack.c.bf16 %v2356, %v2366
      %v2377 = vpack.c.bf16 %v2357, %v2367
      %v2378 = vpack.c.bf16 %v2358, %v2368
      %v2379 = vpack.c.bf16 %v2359, %v2369
      %s2380 = scalar_lea.vmem %s1, 512
      %v2381 = vld [vmem:[%s2380] sm:$0xf]
      %v2382 = vld [vmem:[%s2380 + $0x4] sm:$0xf]
      %v2383 = vld [vmem:[%s2380 + $0x8] sm:$0xf]
      %v2384 = vld [vmem:[%s2380 + $0xc] sm:$0xf]
      %v2385 = vld [vmem:[%s2380 + $0x10] sm:$0xf]
      %v2386 = vld [vmem:[%s2380 + $0x14] sm:$0xf]
      %v2387 = vld [vmem:[%s2380 + $0x18] sm:$0xf]
      %v2388 = vld [vmem:[%s2380 + $0x1c] sm:$0xf]
      %v2389 = vld [vmem:[%s2380 + $0x20] sm:$0xf]
      %v2390 = vld [vmem:[%s2380 + $0x24] sm:$0xf]
      %v2391 = vld [vmem:[%s2380 + $0x28] sm:$0xf]
      %v2392 = vld [vmem:[%s2380 + $0x2c] sm:$0xf]
      %v2393 = vld [vmem:[%s2380 + $0x30] sm:$0xf]
      %v2394 = vld [vmem:[%s2380 + $0x34] sm:$0xf]
      %v2395 = vld [vmem:[%s2380 + $0x38] sm:$0xf]
      %v2396 = vld [vmem:[%s2380 + $0x3c] sm:$0xf]
      %v2413 = vunpack.c.l.b16 %v2381
      %v2414 = vunpack.c.l.b16 %v2382
      %v2415 = vunpack.c.l.b16 %v2383
      %v2416 = vunpack.c.l.b16 %v2384
      %v2417 = vunpack.c.l.b16 %v2385
      %v2418 = vunpack.c.l.b16 %v2386
      %v2419 = vunpack.c.l.b16 %v2387
      %v2420 = vunpack.c.l.b16 %v2388
      %v2421 = vunpack.c.l.b16 %v2389
      %v2422 = vunpack.c.l.b16 %v2390
      %v2423 = vunpack.c.l.b16 %v2391
      %v2424 = vunpack.c.l.b16 %v2392
      %v2425 = vunpack.c.l.b16 %v2393
      %v2426 = vunpack.c.l.b16 %v2394
      %v2427 = vunpack.c.l.b16 %v2395
      %v2428 = vunpack.c.l.b16 %v2396
      %v2429 = vpack.c.b16 %v2414, %v2413
      %v2430 = vpack.c.b16 %v2416, %v2415
      %v2431 = vpack.c.b16 %v2418, %v2417
      %v2432 = vpack.c.b16 %v2420, %v2419
      %v2433 = vpack.c.b16 %v2422, %v2421
      %v2434 = vpack.c.b16 %v2424, %v2423
      %v2435 = vpack.c.b16 %v2426, %v2425
      %v2436 = vpack.c.b16 %v2428, %v2427
      %2445 = vmatprep.subr.bf16.mxu0 0
      %2446 = vmatpush1.bf16.msra.mxu0 %v2429
      %2447 = vmatprep.subr.bf16.mxu0 0
      %2448 = vmatpush1.bf16.msra.mxu0 %v2430
      %2449 = vmatprep.subr.bf16.mxu0 0
      %2450 = vmatpush1.bf16.msra.mxu0 %v2431
      %2451 = vmatprep.subr.bf16.mxu0 0
      %2452 = vmatpush1.bf16.msra.mxu0 %v2432
      %2453 = vmatprep.subr.bf16.mxu0 0
      %2454 = vmatpush1.bf16.msra.mxu0 %v2433
      %2455 = vmatprep.subr.bf16.mxu0 0
      %2456 = vmatpush1.bf16.msra.mxu0 %v2434
      %2457 = vmatprep.subr.bf16.mxu0 0
      %2458 = vmatpush1.bf16.msra.mxu0 %v2435
      %2459 = vmatprep.subr.bf16.mxu0 0
      %2460 = vmatpush1.bf16.msra.mxu0 %v2436
      %2461 = vmatprep.subr.bf16.mxu0 0
      %2462 = vmatpush1.bf16.msra.mxu0 0
      %2463 = vmatprep.subr.bf16.mxu0 0
      %2464 = vmatpush1.bf16.msra.mxu0 0
      %2465 = vmatprep.subr.bf16.mxu0 0
      %2466 = vmatpush1.bf16.msra.mxu0 0
      %2467 = vmatprep.subr.bf16.mxu0 0
      %2468 = vmatpush1.bf16.msra.mxu0 0
      %2469 = vmatprep.subr.bf16.mxu0 0
      %2470 = vmatpush1.bf16.msra.mxu0 0
      %2471 = vmatprep.subr.bf16.mxu0 0
      %2472 = vmatpush1.bf16.msra.mxu0 0
      %2473 = vmatprep.subr.bf16.mxu0 0
      %2474 = vmatpush1.bf16.msra.mxu0 0
      %2475 = vmatprep.subr.bf16.mxu0 0
      %2476 = vmatpush1.bf16.msra.mxu0 0
      %2477 = vmatprep.mubr.bf16.mxu0 0
      %2478 = vmatmul.mubr.bf16.gmra.mrb[0].mxu0 %v2370
      %v2479 = vpop.f32.mrb[0].mxu0
      %v2480 = vadd.f32 0.0, %v2479
      %v2481 = vpop.f32.mrb[0].mxu0
      %v2482 = vpop.f32.mrb[0].mxu0
      %v2483 = vadd.f32 0.0, %v2482
      %v2484 = vpop.f32.mrb[0].mxu0
      %2485 = vmatprep.mubr.bf16.mxu0 0
      %2486 = vmatmul.mubr.bf16.gmra.mrb[0].mxu0 %v2371
      %v2487 = vpop.f32.mrb[0].mxu0
      %v2488 = vadd.f32 0.0, %v2487
      %v2489 = vpop.f32.mrb[0].mxu0
      %v2490 = vpop.f32.mrb[0].mxu0
      %v2491 = vadd.f32 0.0, %v2490
      %v2492 = vpop.f32.mrb[0].mxu0
      %2493 = vmatprep.mubr.bf16.mxu0 0
      %2494 = vmatmul.mubr.bf16.gmra.mrb[0].mxu0 %v2372
      %v2495 = vpop.f32.mrb[0].mxu0
      %v2496 = vadd.f32 0.0, %v2495
      %v2497 = vpop.f32.mrb[0].mxu0
      %v2498 = vpop.f32.mrb[0].mxu0
      %v2499 = vadd.f32 0.0, %v2498
      %v2500 = vpop.f32.mrb[0].mxu0
      %2501 = vmatprep.mubr.bf16.mxu0 0
      %2502 = vmatmul.mubr.bf16.gmra.mrb[0].mxu0 %v2373
      %v2503 = vpop.f32.mrb[0].mxu0
      %v2504 = vadd.f32 0.0, %v2503
      %v2505 = vpop.f32.mrb[0].mxu0
      %v2506 = vpop.f32.mrb[0].mxu0
      %v2507 = vadd.f32 0.0, %v2506
      %v2508 = vpop.f32.mrb[0].mxu0
      %2509 = vmatprep.mubr.bf16.mxu0 0
      %2510 = vmatmul.mubr.bf16.gmra.mrb[0].mxu0 %v2374
      %v2511 = vpop.f32.mrb[0].mxu0
      %v2512 = vadd.f32 0.0, %v2511
      %v2513 = vpop.f32.mrb[0].mxu0
      %v2514 = vpop.f32.mrb[0].mxu0
      %v2515 = vadd.f32 0.0, %v2514
      %v2516 = vpop.f32.mrb[0].mxu0
      %2517 = vmatprep.mubr.bf16.mxu0 0
      %2518 = vmatmul.mubr.bf16.gmra.mrb[0].mxu0 %v2375
      %v2519 = vpop.f32.mrb[0].mxu0
      %v2520 = vadd.f32 0.0, %v2519
      %v2521 = vpop.f32.mrb[0].mxu0
      %v2522 = vpop.f32.mrb[0].mxu0
      %v2523 = vadd.f32 0.0, %v2522
      %v2524 = vpop.f32.mrb[0].mxu0
      %2525 = vmatprep.mubr.bf16.mxu0 0
      %2526 = vmatmul.mubr.bf16.gmra.mrb[0].mxu0 %v2376
      %v2527 = vpop.f32.mrb[0].mxu0
      %v2528 = vadd.f32 0.0, %v2527
      %v2529 = vpop.f32.mrb[0].mxu0
      %v2530 = vpop.f32.mrb[0].mxu0
      %v2531 = vadd.f32 0.0, %v2530
      %v2532 = vpop.f32.mrb[0].mxu0
      %2533 = vmatprep.mubr.bf16.mxu0 0
      %2534 = vmatmul.mubr.bf16.gmra.mrb[0].mxu0 %v2377
      %v2535 = vpop.f32.mrb[0].mxu0
      %v2536 = vadd.f32 0.0, %v2535
      %v2537 = vpop.f32.mrb[0].mxu0
      %v2538 = vpop.f32.mrb[0].mxu0
      %v2539 = vadd.f32 0.0, %v2538
      %v2540 = vpop.f32.mrb[0].mxu0
      %2541 = vmatprep.mubr.bf16.mxu0 0
      %2542 = vmatmul.mubr.bf16.gmra.mrb[0].mxu0 %v2378
      %v2543 = vpop.f32.mrb[0].mxu0
      %v2544 = vadd.f32 0.0, %v2543
      %v2545 = vpop.f32.mrb[0].mxu0
      %v2546 = vpop.f32.mrb[0].mxu0
      %v2547 = vadd.f32 0.0, %v2546
      %v2548 = vpop.f32.mrb[0].mxu0
      %2549 = vmatprep.mubr.bf16.mxu0 0
      %2550 = vmatmul.mubr.bf16.gmra.mrb[0].mxu0 %v2379
      %v2551 = vpop.f32.mrb[0].mxu0
      %v2552 = vadd.f32 0.0, %v2551
      %v2553 = vpop.f32.mrb[0].mxu0
      %v2554 = vpop.f32.mrb[0].mxu0
      %v2555 = vadd.f32 0.0, %v2554
      %v2556 = vpop.f32.mrb[0].mxu0
      %2557 = vdwg.mxu0
      %v2558 = vadd.f32 %v2300, %v2480
      %v2559 = vadd.f32 %v2301, %v2483
      %v2560 = vadd.f32 %v2302, %v2488
      %v2561 = vadd.f32 %v2303, %v2491
      %v2562 = vadd.f32 %v2304, %v2496
      %v2563 = vadd.f32 %v2305, %v2499
      %v2564 = vadd.f32 %v2306, %v2504
      %v2565 = vadd.f32 %v2307, %v2507
      %v2566 = vadd.f32 %v2308, %v2512
      %v2567 = vadd.f32 %v2309, %v2515
      %v2568 = vadd.f32 %v2310, %v2520
      %v2569 = vadd.f32 %v2311, %v2523
      %v2570 = vadd.f32 %v2312, %v2528
      %v2571 = vadd.f32 %v2313, %v2531
      %v2572 = vadd.f32 %v2314, %v2536
      %v2573 = vadd.f32 %v2315, %v2539
      %v2574 = vadd.f32 %v2316, %v2544
      %v2575 = vadd.f32 %v2317, %v2547
      %v2576 = vadd.f32 %v2318, %v2552
      %v2577 = vadd.f32 %v2319, %v2555
      %v2578 = vld [vmem:[%s2] sm:$0x1]
      %v2580 = vlaneseq
      %v2581 = vshrl.u32 %v2580, 7
      %v2582 = vsub.s32 0, %v2581
      %v2583 = vrot.slane %v2578, %v2582
      %v2585 = vadd.f32 %v2558, %v2583
      %v2586 = vadd.f32 %v2559, %v2583
      %v2587 = vadd.f32 %v2560, %v2583
      %v2588 = vadd.f32 %v2561, %v2583
      %v2589 = vadd.f32 %v2562, %v2583
      %v2590 = vadd.f32 %v2563, %v2583
      %v2591 = vadd.f32 %v2564, %v2583
      %v2592 = vadd.f32 %v2565, %v2583
      %v2593 = vadd.f32 %v2566, %v2583
      %v2594 = vadd.f32 %v2567, %v2583
      %v2595 = vadd.f32 %v2568, %v2583
      %v2596 = vadd.f32 %v2569, %v2583
      %v2597 = vadd.f32 %v2570, %v2583
      %v2598 = vadd.f32 %v2571, %v2583
      %v2599 = vadd.f32 %v2572, %v2583
      %v2600 = vadd.f32 %v2573, %v2583
      %v2601 = vadd.f32 %v2574, %v2583
      %v2602 = vadd.f32 %v2575, %v2583
      %v2603 = vadd.f32 %v2576, %v2583
      %v2604 = vadd.f32 %v2577, %v2583
      %v2605 = vmax.f32 %v2585, 0.0
      %v2606 = vmax.f32 %v2586, 0.0
      %v2607 = vmax.f32 %v2587, 0.0
      %v2608 = vmax.f32 %v2588, 0.0
      %v2609 = vmax.f32 %v2589, 0.0
      %v2610 = vmax.f32 %v2590, 0.0
      %v2611 = vmax.f32 %v2591, 0.0
      %v2612 = vmax.f32 %v2592, 0.0
      %v2613 = vmax.f32 %v2593, 0.0
      %v2614 = vmax.f32 %v2594, 0.0
      %v2615 = vmax.f32 %v2595, 0.0
      %v2616 = vmax.f32 %v2596, 0.0
      %v2617 = vmax.f32 %v2597, 0.0
      %v2618 = vmax.f32 %v2598, 0.0
      %v2619 = vmax.f32 %v2599, 0.0
      %v2620 = vmax.f32 %v2600, 0.0
      %v2621 = vmax.f32 %v2601, 0.0
      %v2622 = vmax.f32 %v2602, 0.0
      %v2623 = vmax.f32 %v2603, 0.0
      %v2624 = vmax.f32 %v2604, 0.0
      %2625 = vst [vmem:[#allocation2 + $0x8] sm:$0xff] 0
      %2626 = vst [vmem:[#allocation2 + $0x18] sm:$0xff] 0
      %2627 = vst [vmem:[#allocation2 + $0x28] sm:$0xff] 0
      %2628 = vst [vmem:[#allocation2 + $0x38] sm:$0xff] 0
      %2629 = vst [vmem:[#allocation2 + $0x48] sm:$0xff] 0
      %2630 = vst [vmem:[#allocation2 + $0x58] sm:$0xff] 0
      %2631 = vst [vmem:[#allocation2 + $0x68] sm:$0xff] 0
      %2632 = vst [vmem:[#allocation2 + $0x78] sm:$0xff] 0
      %2633 = vst [vmem:[#allocation2 + $0x88] sm:$0xff] 0
      %2634 = vst [vmem:[#allocation2 + $0x98] sm:$0xff] 0
      %v2635 = vpack.c.bf16 %v2606, %v2605
      %v2636 = vpack.c.bf16 %v2608, %v2607
      %v2637 = vpack.c.bf16 %v2610, %v2609
      %v2638 = vpack.c.bf16 %v2612, %v2611
      %v2639 = vpack.c.bf16 %v2614, %v2613
      %v2640 = vpack.c.bf16 %v2616, %v2615
      %v2641 = vpack.c.bf16 %v2618, %v2617
      %v2642 = vpack.c.bf16 %v2620, %v2619
      %v2643 = vpack.c.bf16 %v2622, %v2621
      %v2644 = vpack.c.bf16 %v2624, %v2623
      %2645 = vst [vmem:[#allocation2] sm:$0xff] %v2635
      %2646 = vst [vmem:[#allocation2 + $0x10] sm:$0xff] %v2636
      %2647 = vst [vmem:[#allocation2 + $0x20] sm:$0xff] %v2637
      %2648 = vst [vmem:[#allocation2 + $0x30] sm:$0xff] %v2638
      %2649 = vst [vmem:[#allocation2 + $0x40] sm:$0xff] %v2639
      %2650 = vst [vmem:[#allocation2 + $0x50] sm:$0xff] %v2640
      %2651 = vst [vmem:[#allocation2 + $0x60] sm:$0xff] %v2641
      %2652 = vst [vmem:[#allocation2 + $0x70] sm:$0xff] %v2642
      %2653 = vst [vmem:[#allocation2 + $0x80] sm:$0xff] %v2643
      %2654 = vst [vmem:[#allocation2 + $0x90] sm:$0xff] %v2644
      %p2655 = scmp.eq.s32.totalorder %s21, 0
      // Predicated region
      $region41: #{double_conv.1} parent=39 // pred_check
        %p2656 = pneg %p2655
      $region42: #{double_conv.1} parent=39 // pred_check_branch
        %2658 = sbr.rel (%p2656) target = $region44
      $region43: #{double_conv.1} parent=39 // pred_region
        %2659 = vst [vmem:[#allocation2] sm:$0xff] 0
        %2660 = vst [vmem:[#allocation2 + $0x8] sm:$0xff] 0
      $region44: #{double_conv.1} parent=39 // pred_fallthru
        _
      %p2661 = scmp.eq.s32.totalorder %s21, 1
      // Predicated region
      $region45: #{double_conv.1} parent=39 // pred_check
        %p2662 = pneg %p2661
      $region46: #{double_conv.1} parent=39 // pred_check_branch
        %2664 = sbr.rel (%p2662) target = $region48
      $region47: #{double_conv.1} parent=39 // pred_region
        %s2665 = scalar_lea.vmem [#allocation2], 144
        %2666 = vst [vmem:[%s2665] sm:$0xff] 0
        %2667 = vst [vmem:[%s2665 + $0x8] sm:$0xff] 0
      $region48: #{double_conv.1} parent=39 // pred_fallthru
        _
      %v2668 = vld [vmem:[#allocation2] sm:$0xff]
      %v2669 = vld [vmem:[#allocation2 + $0x8] sm:$0xff]
      %v2670 = vld [vmem:[#allocation2 + $0x10] sm:$0xff]
      %v2671 = vld [vmem:[#allocation2 + $0x18] sm:$0xff]
      %v2672 = vld [vmem:[#allocation2 + $0x20] sm:$0xff]
      %v2673 = vld [vmem:[#allocation2 + $0x28] sm:$0xff]
      %v2674 = vld [vmem:[#allocation2 + $0x30] sm:$0xff]
      %v2675 = vld [vmem:[#allocation2 + $0x38] sm:$0xff]
      %v2676 = vld [vmem:[#allocation2 + $0x40] sm:$0xff]
      %v2677 = vld [vmem:[#allocation2 + $0x48] sm:$0xff]
      %v2678 = vld [vmem:[#allocation2 + $0x50] sm:$0xff]
      %v2679 = vld [vmem:[#allocation2 + $0x58] sm:$0xff]
      %v2680 = vld [vmem:[#allocation2 + $0x60] sm:$0xff]
      %v2681 = vld [vmem:[#allocation2 + $0x68] sm:$0xff]
      %v2682 = vld [vmem:[#allocation2 + $0x70] sm:$0xff]
      %v2683 = vld [vmem:[#allocation2 + $0x78] sm:$0xff]
      %v2684 = vunpack.c.l.bf16 %v2668
      %v2685 = vunpack.c.h.bf16 %v2668
      %v2686 = vunpack.c.l.bf16 %v2669
      %v2687 = vunpack.c.h.bf16 %v2669
      %v2688 = vunpack.c.l.bf16 %v2670
      %v2689 = vunpack.c.h.bf16 %v2670
      %v2690 = vunpack.c.l.bf16 %v2671
      %v2691 = vunpack.c.h.bf16 %v2671
      %v2692 = vunpack.c.l.bf16 %v2672
      %v2693 = vunpack.c.h.bf16 %v2672
      %v2694 = vunpack.c.l.bf16 %v2673
      %v2695 = vunpack.c.h.bf16 %v2673
      %v2696 = vunpack.c.l.bf16 %v2674
      %v2697 = vunpack.c.h.bf16 %v2674
      %v2698 = vunpack.c.l.bf16 %v2675
      %v2699 = vunpack.c.h.bf16 %v2675
      %v2700 = vunpack.c.l.bf16 %v2676
      %v2701 = vunpack.c.h.bf16 %v2676
      %v2702 = vunpack.c.l.bf16 %v2677
      %v2703 = vunpack.c.h.bf16 %v2677
      %v2704 = vunpack.c.l.bf16 %v2678
      %v2705 = vunpack.c.h.bf16 %v2678
      %v2706 = vunpack.c.l.bf16 %v2679
      %v2707 = vunpack.c.h.bf16 %v2679
      %v2708 = vunpack.c.l.bf16 %v2680
      %v2709 = vunpack.c.h.bf16 %v2680
      %v2710 = vunpack.c.l.bf16 %v2681
      %v2711 = vunpack.c.h.bf16 %v2681
      %v2712 = vunpack.c.l.bf16 %v2682
      %v2713 = vunpack.c.h.bf16 %v2682
      %v2714 = vunpack.c.l.bf16 %v2683
      %v2715 = vunpack.c.h.bf16 %v2683
      %v2716 = vrot.slane %v2684, 7
      %v2717 = vrot.slane %v2688, 7
      %v2718 = vrot.slane %v2692, 7
      %v2719 = vrot.slane %v2696, 7
      %v2720 = vrot.slane %v2700, 7
      %v2721 = vrot.slane %v2704, 7
      %v2722 = vrot.slane %v2708, 7
      %v2723 = vrot.slane %v2712, 7
      %v2724 = vrot.slane %v2685, 7
      %v2725 = vrot.slane %v2689, 7
      %v2726 = vrot.slane %v2693, 7
      %v2727 = vrot.slane %v2697, 7
      %v2728 = vrot.slane %v2701, 7
      %v2729 = vrot.slane %v2705, 7
      %v2730 = vrot.slane %v2709, 7
      %v2731 = vrot.slane %v2713, 7
      %v2732 = vrot.slane %v2687, 7
      %v2733 = vrot.slane %v2691, 7
      %v2734 = vrot.slane %v2695, 7
      %v2735 = vrot.slane %v2699, 7
      %v2736 = vrot.slane %v2703, 7
      %v2737 = vrot.slane %v2707, 7
      %v2738 = vrot.slane %v2711, 7
      %v2739 = vrot.slane %v2715, 7
      %vm2740 = vcmp.lt.s32.totalorder %v372, 1
      %v2741 = vsel %vm2740, %v2716, %v2724
      %v2742 = vsel %vm2740, %v2717, %v2725
      %v2743 = vsel %vm2740, %v2718, %v2726
      %v2744 = vsel %vm2740, %v2719, %v2727
      %v2745 = vsel %vm2740, %v2720, %v2728
      %v2746 = vsel %vm2740, %v2721, %v2729
      %v2747 = vsel %vm2740, %v2722, %v2730
      %v2748 = vsel %vm2740, %v2723, %v2731
      %v2749 = vsel %vm2740, %v2732, %v2716
      %v2750 = vsel %vm2740, %v2733, %v2717
      %v2751 = vsel %vm2740, %v2734, %v2718
      %v2752 = vsel %vm2740, %v2735, %v2719
      %v2753 = vsel %vm2740, %v2736, %v2720
      %v2754 = vsel %vm2740, %v2737, %v2721
      %v2755 = vsel %vm2740, %v2738, %v2722
      %v2756 = vsel %vm2740, %v2739, %v2723
      %v2757 = vpack.c.bf16 %v2741, %v2749
      %v2758 = vpack.c.bf16 %v2742, %v2750
      %v2759 = vpack.c.bf16 %v2743, %v2751
      %v2760 = vpack.c.bf16 %v2744, %v2752
      %v2761 = vpack.c.bf16 %v2745, %v2753
      %v2762 = vpack.c.bf16 %v2746, %v2754
      %v2763 = vpack.c.bf16 %v2747, %v2755
      %v2764 = vpack.c.bf16 %v2748, %v2756
      %v2765 = vld [vmem:[%s3] sm:$0xf]
      %v2766 = vld [vmem:[%s3 + $0x4] sm:$0xf]
      %v2767 = vld [vmem:[%s3 + $0x8] sm:$0xf]
      %v2768 = vld [vmem:[%s3 + $0xc] sm:$0xf]
      %v2769 = vld [vmem:[%s3 + $0x10] sm:$0xf]
      %v2770 = vld [vmem:[%s3 + $0x14] sm:$0xf]
      %v2771 = vld [vmem:[%s3 + $0x18] sm:$0xf]
      %v2772 = vld [vmem:[%s3 + $0x1c] sm:$0xf]
      %v2773 = vld [vmem:[%s3 + $0x20] sm:$0xf]
      %v2774 = vld [vmem:[%s3 + $0x24] sm:$0xf]
      %v2775 = vld [vmem:[%s3 + $0x28] sm:$0xf]
      %v2776 = vld [vmem:[%s3 + $0x2c] sm:$0xf]
      %v2777 = vld [vmem:[%s3 + $0x30] sm:$0xf]
      %v2778 = vld [vmem:[%s3 + $0x34] sm:$0xf]
      %v2779 = vld [vmem:[%s3 + $0x38] sm:$0xf]
      %v2780 = vld [vmem:[%s3 + $0x3c] sm:$0xf]
      %v2781 = vpack.c.bf16 %v2685, %v2684
      %v2782 = vpack.c.bf16 %v2689, %v2688
      %v2783 = vpack.c.bf16 %v2693, %v2692
      %v2784 = vpack.c.bf16 %v2697, %v2696
      %v2785 = vpack.c.bf16 %v2701, %v2700
      %v2786 = vpack.c.bf16 %v2705, %v2704
      %v2787 = vpack.c.bf16 %v2709, %v2708
      %v2788 = vpack.c.bf16 %v2713, %v2712
      %s2789 = scalar_lea.vmem %s3, 64
      %v2790 = vld [vmem:[%s2789] sm:$0xf]
      %v2791 = vld [vmem:[%s2789 + $0x4] sm:$0xf]
      %v2792 = vld [vmem:[%s2789 + $0x8] sm:$0xf]
      %v2793 = vld [vmem:[%s2789 + $0xc] sm:$0xf]
      %v2794 = vld [vmem:[%s2789 + $0x10] sm:$0xf]
      %v2795 = vld [vmem:[%s2789 + $0x14] sm:$0xf]
      %v2796 = vld [vmem:[%s2789 + $0x18] sm:$0xf]
      %v2797 = vld [vmem:[%s2789 + $0x1c] sm:$0xf]
      %v2798 = vld [vmem:[%s2789 + $0x20] sm:$0xf]
      %v2799 = vld [vmem:[%s2789 + $0x24] sm:$0xf]
      %v2800 = vld [vmem:[%s2789 + $0x28] sm:$0xf]
      %v2801 = vld [vmem:[%s2789 + $0x2c] sm:$0xf]
      %v2802 = vld [vmem:[%s2789 + $0x30] sm:$0xf]
      %v2803 = vld [vmem:[%s2789 + $0x34] sm:$0xf]
      %v2804 = vld [vmem:[%s2789 + $0x38] sm:$0xf]
      %v2805 = vld [vmem:[%s2789 + $0x3c] sm:$0xf]
      %v2822 = vunpack.c.l.b16 %v2790
      %v2823 = vunpack.c.l.b16 %v2791
      %v2824 = vunpack.c.l.b16 %v2792
      %v2825 = vunpack.c.l.b16 %v2793
      %v2826 = vunpack.c.l.b16 %v2794
      %v2827 = vunpack.c.l.b16 %v2795
      %v2828 = vunpack.c.l.b16 %v2796
      %v2829 = vunpack.c.l.b16 %v2797
      %v2830 = vunpack.c.l.b16 %v2798
      %v2831 = vunpack.c.l.b16 %v2799
      %v2832 = vunpack.c.l.b16 %v2800
      %v2833 = vunpack.c.l.b16 %v2801
      %v2834 = vunpack.c.l.b16 %v2802
      %v2835 = vunpack.c.l.b16 %v2803
      %v2836 = vunpack.c.l.b16 %v2804
      %v2837 = vunpack.c.l.b16 %v2805
      %v2838 = vpack.c.b16 %v2823, %v2822
      %v2839 = vpack.c.b16 %v2825, %v2824
      %v2840 = vpack.c.b16 %v2827, %v2826
      %v2841 = vpack.c.b16 %v2829, %v2828
      %v2842 = vpack.c.b16 %v2831, %v2830
      %v2843 = vpack.c.b16 %v2833, %v2832
      %v2844 = vpack.c.b16 %v2835, %v2834
      %v2845 = vpack.c.b16 %v2837, %v2836
      %2854 = vmatprep.subr.bf16.mxu0 0
      %2855 = vmatpush1.bf16.msra.mxu0 %v2838
      %2856 = vmatprep.subr.bf16.mxu0 0
      %2857 = vmatpush1.bf16.msra.mxu0 %v2839
      %2858 = vmatprep.subr.bf16.mxu0 0
      %2859 = vmatpush1.bf16.msra.mxu0 %v2840
      %2860 = vmatprep.subr.bf16.mxu0 0
      %2861 = vmatpush1.bf16.msra.mxu0 %v2841
      %2862 = vmatprep.subr.bf16.mxu0 0
      %2863 = vmatpush1.bf16.msra.mxu0 %v2842
      %2864 = vmatprep.subr.bf16.mxu0 0
      %2865 = vmatpush1.bf16.msra.mxu0 %v2843
      %2866 = vmatprep.subr.bf16.mxu0 0
      %2867 = vmatpush1.bf16.msra.mxu0 %v2844
      %2868 = vmatprep.subr.bf16.mxu0 0
      %2869 = vmatpush1.bf16.msra.mxu0 %v2845
      %2870 = vmatprep.subr.bf16.mxu0 0
      %2871 = vmatpush1.bf16.msra.mxu0 0
      %2872 = vmatprep.subr.bf16.mxu0 0
      %2873 = vmatpush1.bf16.msra.mxu0 0
      %2874 = vmatprep.subr.bf16.mxu0 0
      %2875 = vmatpush1.bf16.msra.mxu0 0
      %2876 = vmatprep.subr.bf16.mxu0 0
      %2877 = vmatpush1.bf16.msra.mxu0 0
      %2878 = vmatprep.subr.bf16.mxu0 0
      %2879 = vmatpush1.bf16.msra.mxu0 0
      %2880 = vmatprep.subr.bf16.mxu0 0
      %2881 = vmatpush1.bf16.msra.mxu0 0
      %2882 = vmatprep.subr.bf16.mxu0 0
      %2883 = vmatpush1.bf16.msra.mxu0 0
      %2884 = vmatprep.subr.bf16.mxu0 0
      %2885 = vmatpush1.bf16.msra.mxu0 0
      %2886 = vmatprep.mubr.bf16.mxu0 0
      %2887 = vmatmul.mubr.bf16.gmra.mrb[0].mxu0 %v2781
      %v2888 = vpop.f32.mrb[0].mxu0
      %v2889 = vadd.f32 0.0, %v2888
      %v2890 = vpop.f32.mrb[0].mxu0
      %v2891 = vpop.f32.mrb[0].mxu0
      %v2892 = vadd.f32 0.0, %v2891
      %v2893 = vpop.f32.mrb[0].mxu0
      %2894 = vmatprep.mubr.bf16.mxu0 0
      %2895 = vmatmul.mubr.bf16.gmra.mrb[0].mxu0 %v2782
      %v2896 = vpop.f32.mrb[0].mxu0
      %v2897 = vadd.f32 0.0, %v2896
      %v2898 = vpop.f32.mrb[0].mxu0
      %v2899 = vpop.f32.mrb[0].mxu0
      %v2900 = vadd.f32 0.0, %v2899
      %v2901 = vpop.f32.mrb[0].mxu0
      %2902 = vmatprep.mubr.bf16.mxu0 0
      %2903 = vmatmul.mubr.bf16.gmra.mrb[0].mxu0 %v2783
      %v2904 = vpop.f32.mrb[0].mxu0
      %v2905 = vadd.f32 0.0, %v2904
      %v2906 = vpop.f32.mrb[0].mxu0
      %v2907 = vpop.f32.mrb[0].mxu0
      %v2908 = vadd.f32 0.0, %v2907
      %v2909 = vpop.f32.mrb[0].mxu0
      %2910 = vmatprep.mubr.bf16.mxu0 0
      %2911 = vmatmul.mubr.bf16.gmra.mrb[0].mxu0 %v2784
      %v2912 = vpop.f32.mrb[0].mxu0
      %v2913 = vadd.f32 0.0, %v2912
      %v2914 = vpop.f32.mrb[0].mxu0
      %v2915 = vpop.f32.mrb[0].mxu0
      %v2916 = vadd.f32 0.0, %v2915
      %v2917 = vpop.f32.mrb[0].mxu0
      %2918 = vmatprep.mubr.bf16.mxu0 0
      %2919 = vmatmul.mubr.bf16.gmra.mrb[0].mxu0 %v2785
      %v2920 = vpop.f32.mrb[0].mxu0
      %v2921 = vadd.f32 0.0, %v2920
      %v2922 = vpop.f32.mrb[0].mxu0
      %v2923 = vpop.f32.mrb[0].mxu0
      %v2924 = vadd.f32 0.0, %v2923
      %v2925 = vpop.f32.mrb[0].mxu0
      %2926 = vmatprep.mubr.bf16.mxu0 0
      %2927 = vmatmul.mubr.bf16.gmra.mrb[0].mxu0 %v2786
      %v2928 = vpop.f32.mrb[0].mxu0
      %v2929 = vadd.f32 0.0, %v2928
      %v2930 = vpop.f32.mrb[0].mxu0
      %v2931 = vpop.f32.mrb[0].mxu0
      %v2932 = vadd.f32 0.0, %v2931
      %v2933 = vpop.f32.mrb[0].mxu0
      %2934 = vmatprep.mubr.bf16.mxu0 0
      %2935 = vmatmul.mubr.bf16.gmra.mrb[0].mxu0 %v2787
      %v2936 = vpop.f32.mrb[0].mxu0
      %v2937 = vadd.f32 0.0, %v2936
      %v2938 = vpop.f32.mrb[0].mxu0
      %v2939 = vpop.f32.mrb[0].mxu0
      %v2940 = vadd.f32 0.0, %v2939
      %v2941 = vpop.f32.mrb[0].mxu0
      %2942 = vmatprep.mubr.bf16.mxu0 0
      %2943 = vmatmul.mubr.bf16.gmra.mrb[0].mxu0 %v2788
      %v2944 = vpop.f32.mrb[0].mxu0
      %v2945 = vadd.f32 0.0, %v2944
      %v2946 = vpop.f32.mrb[0].mxu0
      %v2947 = vpop.f32.mrb[0].mxu0
      %v2948 = vadd.f32 0.0, %v2947
      %v2949 = vpop.f32.mrb[0].mxu0
      %2950 = vdwg.mxu0
      %v2967 = vunpack.c.l.b16 %v2765
      %v2968 = vunpack.c.l.b16 %v2766
      %v2969 = vunpack.c.l.b16 %v2767
      %v2970 = vunpack.c.l.b16 %v2768
      %v2971 = vunpack.c.l.b16 %v2769
      %v2972 = vunpack.c.l.b16 %v2770
      %v2973 = vunpack.c.l.b16 %v2771
      %v2974 = vunpack.c.l.b16 %v2772
      %v2975 = vunpack.c.l.b16 %v2773
      %v2976 = vunpack.c.l.b16 %v2774
      %v2977 = vunpack.c.l.b16 %v2775
      %v2978 = vunpack.c.l.b16 %v2776
      %v2979 = vunpack.c.l.b16 %v2777
      %v2980 = vunpack.c.l.b16 %v2778
      %v2981 = vunpack.c.l.b16 %v2779
      %v2982 = vunpack.c.l.b16 %v2780
      %v2983 = vpack.c.b16 %v2968, %v2967
      %v2984 = vpack.c.b16 %v2970, %v2969
      %v2985 = vpack.c.b16 %v2972, %v2971
      %v2986 = vpack.c.b16 %v2974, %v2973
      %v2987 = vpack.c.b16 %v2976, %v2975
      %v2988 = vpack.c.b16 %v2978, %v2977
      %v2989 = vpack.c.b16 %v2980, %v2979
      %v2990 = vpack.c.b16 %v2982, %v2981
      %2999 = vmatprep.subr.bf16.mxu0 0
      %3000 = vmatpush1.bf16.msra.mxu0 %v2983
      %3001 = vmatprep.subr.bf16.mxu0 0
      %3002 = vmatpush1.bf16.msra.mxu0 %v2984
      %3003 = vmatprep.subr.bf16.mxu0 0
      %3004 = vmatpush1.bf16.msra.mxu0 %v2985
      %3005 = vmatprep.subr.bf16.mxu0 0
      %3006 = vmatpush1.bf16.msra.mxu0 %v2986
      %3007 = vmatprep.subr.bf16.mxu0 0
      %3008 = vmatpush1.bf16.msra.mxu0 %v2987
      %3009 = vmatprep.subr.bf16.mxu0 0
      %3010 = vmatpush1.bf16.msra.mxu0 %v2988
      %3011 = vmatprep.subr.bf16.mxu0 0
      %3012 = vmatpush1.bf16.msra.mxu0 %v2989
      %3013 = vmatprep.subr.bf16.mxu0 0
      %3014 = vmatpush1.bf16.msra.mxu0 %v2990
      %3015 = vmatprep.subr.bf16.mxu0 0
      %3016 = vmatpush1.bf16.msra.mxu0 0
      %3017 = vmatprep.subr.bf16.mxu0 0
      %3018 = vmatpush1.bf16.msra.mxu0 0
      %3019 = vmatprep.subr.bf16.mxu0 0
      %3020 = vmatpush1.bf16.msra.mxu0 0
      %3021 = vmatprep.subr.bf16.mxu0 0
      %3022 = vmatpush1.bf16.msra.mxu0 0
      %3023 = vmatprep.subr.bf16.mxu0 0
      %3024 = vmatpush1.bf16.msra.mxu0 0
      %3025 = vmatprep.subr.bf16.mxu0 0
      %3026 = vmatpush1.bf16.msra.mxu0 0
      %3027 = vmatprep.subr.bf16.mxu0 0
      %3028 = vmatpush1.bf16.msra.mxu0 0
      %3029 = vmatprep.subr.bf16.mxu0 0
      %3030 = vmatpush1.bf16.msra.mxu0 0
      %3031 = vmatprep.mubr.bf16.mxu0 0
      %3032 = vmatmul.mubr.bf16.gmra.mrb[0].mxu0 %v2757
      %v3033 = vpop.f32.mrb[0].mxu0
      %v3034 = vadd.f32 %v2889, %v3033
      %v3035 = vpop.f32.mrb[0].mxu0
      %v3036 = vpop.f32.mrb[0].mxu0
      %v3037 = vadd.f32 %v2892, %v3036
      %v3038 = vpop.f32.mrb[0].mxu0
      %3039 = vmatprep.mubr.bf16.mxu0 0
      %3040 = vmatmul.mubr.bf16.gmra.mrb[0].mxu0 %v2758
      %v3041 = vpop.f32.mrb[0].mxu0
      %v3042 = vadd.f32 %v2897, %v3041
      %v3043 = vpop.f32.mrb[0].mxu0
      %v3044 = vpop.f32.mrb[0].mxu0
      %v3045 = vadd.f32 %v2900, %v3044
      %v3046 = vpop.f32.mrb[0].mxu0
      %3047 = vmatprep.mubr.bf16.mxu0 0
      %3048 = vmatmul.mubr.bf16.gmra.mrb[0].mxu0 %v2759
      %v3049 = vpop.f32.mrb[0].mxu0
      %v3050 = vadd.f32 %v2905, %v3049
      %v3051 = vpop.f32.mrb[0].mxu0
      %v3052 = vpop.f32.mrb[0].mxu0
      %v3053 = vadd.f32 %v2908, %v3052
      %v3054 = vpop.f32.mrb[0].mxu0
      %3055 = vmatprep.mubr.bf16.mxu0 0
      %3056 = vmatmul.mubr.bf16.gmra.mrb[0].mxu0 %v2760
      %v3057 = vpop.f32.mrb[0].mxu0
      %v3058 = vadd.f32 %v2913, %v3057
      %v3059 = vpop.f32.mrb[0].mxu0
      %v3060 = vpop.f32.mrb[0].mxu0
      %v3061 = vadd.f32 %v2916, %v3060
      %v3062 = vpop.f32.mrb[0].mxu0
      %3063 = vmatprep.mubr.bf16.mxu0 0
      %3064 = vmatmul.mubr.bf16.gmra.mrb[0].mxu0 %v2761
      %v3065 = vpop.f32.mrb[0].mxu0
      %v3066 = vadd.f32 %v2921, %v3065
      %v3067 = vpop.f32.mrb[0].mxu0
      %v3068 = vpop.f32.mrb[0].mxu0
      %v3069 = vadd.f32 %v2924, %v3068
      %v3070 = vpop.f32.mrb[0].mxu0
      %3071 = vmatprep.mubr.bf16.mxu0 0
      %3072 = vmatmul.mubr.bf16.gmra.mrb[0].mxu0 %v2762
      %v3073 = vpop.f32.mrb[0].mxu0
      %v3074 = vadd.f32 %v2929, %v3073
      %v3075 = vpop.f32.mrb[0].mxu0
      %v3076 = vpop.f32.mrb[0].mxu0
      %v3077 = vadd.f32 %v2932, %v3076
      %v3078 = vpop.f32.mrb[0].mxu0
      %3079 = vmatprep.mubr.bf16.mxu0 0
      %3080 = vmatmul.mubr.bf16.gmra.mrb[0].mxu0 %v2763
      %v3081 = vpop.f32.mrb[0].mxu0
      %v3082 = vadd.f32 %v2937, %v3081
      %v3083 = vpop.f32.mrb[0].mxu0
      %v3084 = vpop.f32.mrb[0].mxu0
      %v3085 = vadd.f32 %v2940, %v3084
      %v3086 = vpop.f32.mrb[0].mxu0
      %3087 = vmatprep.mubr.bf16.mxu0 0
      %3088 = vmatmul.mubr.bf16.gmra.mrb[0].mxu0 %v2764
      %v3089 = vpop.f32.mrb[0].mxu0
      %v3090 = vadd.f32 %v2945, %v3089
      %v3091 = vpop.f32.mrb[0].mxu0
      %v3092 = vpop.f32.mrb[0].mxu0
      %v3093 = vadd.f32 %v2948, %v3092
      %v3094 = vpop.f32.mrb[0].mxu0
      %3095 = vdwg.mxu0
      %v3096 = vrot.slane %v2684, 1
      %v3097 = vrot.slane %v2688, 1
      %v3098 = vrot.slane %v2692, 1
      %v3099 = vrot.slane %v2696, 1
      %v3100 = vrot.slane %v2700, 1
      %v3101 = vrot.slane %v2704, 1
      %v3102 = vrot.slane %v2708, 1
      %v3103 = vrot.slane %v2712, 1
      %v3104 = vrot.slane %v2685, 1
      %v3105 = vrot.slane %v2689, 1
      %v3106 = vrot.slane %v2693, 1
      %v3107 = vrot.slane %v2697, 1
      %v3108 = vrot.slane %v2701, 1
      %v3109 = vrot.slane %v2705, 1
      %v3110 = vrot.slane %v2709, 1
      %v3111 = vrot.slane %v2713, 1
      %v3112 = vrot.slane %v2686, 1
      %v3113 = vrot.slane %v2690, 1
      %v3114 = vrot.slane %v2694, 1
      %v3115 = vrot.slane %v2698, 1
      %v3116 = vrot.slane %v2702, 1
      %v3117 = vrot.slane %v2706, 1
      %v3118 = vrot.slane %v2710, 1
      %v3119 = vrot.slane %v2714, 1
      %v3120 = vsel %vm373, %v3104, %v3112
      %v3121 = vsel %vm373, %v3105, %v3113
      %v3122 = vsel %vm373, %v3106, %v3114
      %v3123 = vsel %vm373, %v3107, %v3115
      %v3124 = vsel %vm373, %v3108, %v3116
      %v3125 = vsel %vm373, %v3109, %v3117
      %v3126 = vsel %vm373, %v3110, %v3118
      %v3127 = vsel %vm373, %v3111, %v3119
      %v3128 = vsel %vm373, %v3096, %v3104
      %v3129 = vsel %vm373, %v3097, %v3105
      %v3130 = vsel %vm373, %v3098, %v3106
      %v3131 = vsel %vm373, %v3099, %v3107
      %v3132 = vsel %vm373, %v3100, %v3108
      %v3133 = vsel %vm373, %v3101, %v3109
      %v3134 = vsel %vm373, %v3102, %v3110
      %v3135 = vsel %vm373, %v3103, %v3111
      %v3136 = vpack.c.bf16 %v3120, %v3128
      %v3137 = vpack.c.bf16 %v3121, %v3129
      %v3138 = vpack.c.bf16 %v3122, %v3130
      %v3139 = vpack.c.bf16 %v3123, %v3131
      %v3140 = vpack.c.bf16 %v3124, %v3132
      %v3141 = vpack.c.bf16 %v3125, %v3133
      %v3142 = vpack.c.bf16 %v3126, %v3134
      %v3143 = vpack.c.bf16 %v3127, %v3135
      %s3144 = scalar_lea.vmem %s3, 128
      %v3145 = vld [vmem:[%s3144] sm:$0xf]
      %v3146 = vld [vmem:[%s3144 + $0x4] sm:$0xf]
      %v3147 = vld [vmem:[%s3144 + $0x8] sm:$0xf]
      %v3148 = vld [vmem:[%s3144 + $0xc] sm:$0xf]
      %v3149 = vld [vmem:[%s3144 + $0x10] sm:$0xf]
      %v3150 = vld [vmem:[%s3144 + $0x14] sm:$0xf]
      %v3151 = vld [vmem:[%s3144 + $0x18] sm:$0xf]
      %v3152 = vld [vmem:[%s3144 + $0x1c] sm:$0xf]
      %v3153 = vld [vmem:[%s3144 + $0x20] sm:$0xf]
      %v3154 = vld [vmem:[%s3144 + $0x24] sm:$0xf]
      %v3155 = vld [vmem:[%s3144 + $0x28] sm:$0xf]
      %v3156 = vld [vmem:[%s3144 + $0x2c] sm:$0xf]
      %v3157 = vld [vmem:[%s3144 + $0x30] sm:$0xf]
      %v3158 = vld [vmem:[%s3144 + $0x34] sm:$0xf]
      %v3159 = vld [vmem:[%s3144 + $0x38] sm:$0xf]
      %v3160 = vld [vmem:[%s3144 + $0x3c] sm:$0xf]
      %v3177 = vunpack.c.l.b16 %v3145
      %v3178 = vunpack.c.l.b16 %v3146
      %v3179 = vunpack.c.l.b16 %v3147
      %v3180 = vunpack.c.l.b16 %v3148
      %v3181 = vunpack.c.l.b16 %v3149
      %v3182 = vunpack.c.l.b16 %v3150
      %v3183 = vunpack.c.l.b16 %v3151
      %v3184 = vunpack.c.l.b16 %v3152
      %v3185 = vunpack.c.l.b16 %v3153
      %v3186 = vunpack.c.l.b16 %v3154
      %v3187 = vunpack.c.l.b16 %v3155
      %v3188 = vunpack.c.l.b16 %v3156
      %v3189 = vunpack.c.l.b16 %v3157
      %v3190 = vunpack.c.l.b16 %v3158
      %v3191 = vunpack.c.l.b16 %v3159
      %v3192 = vunpack.c.l.b16 %v3160
      %v3193 = vpack.c.b16 %v3178, %v3177
      %v3194 = vpack.c.b16 %v3180, %v3179
      %v3195 = vpack.c.b16 %v3182, %v3181
      %v3196 = vpack.c.b16 %v3184, %v3183
      %v3197 = vpack.c.b16 %v3186, %v3185
      %v3198 = vpack.c.b16 %v3188, %v3187
      %v3199 = vpack.c.b16 %v3190, %v3189
      %v3200 = vpack.c.b16 %v3192, %v3191
      %3209 = vmatprep.subr.bf16.mxu0 0
      %3210 = vmatpush1.bf16.msra.mxu0 %v3193
      %3211 = vmatprep.subr.bf16.mxu0 0
      %3212 = vmatpush1.bf16.msra.mxu0 %v3194
      %3213 = vmatprep.subr.bf16.mxu0 0
      %3214 = vmatpush1.bf16.msra.mxu0 %v3195
      %3215 = vmatprep.subr.bf16.mxu0 0
      %3216 = vmatpush1.bf16.msra.mxu0 %v3196
      %3217 = vmatprep.subr.bf16.mxu0 0
      %3218 = vmatpush1.bf16.msra.mxu0 %v3197
      %3219 = vmatprep.subr.bf16.mxu0 0
      %3220 = vmatpush1.bf16.msra.mxu0 %v3198
      %3221 = vmatprep.subr.bf16.mxu0 0
      %3222 = vmatpush1.bf16.msra.mxu0 %v3199
      %3223 = vmatprep.subr.bf16.mxu0 0
      %3224 = vmatpush1.bf16.msra.mxu0 %v3200
      %3225 = vmatprep.subr.bf16.mxu0 0
      %3226 = vmatpush1.bf16.msra.mxu0 0
      %3227 = vmatprep.subr.bf16.mxu0 0
      %3228 = vmatpush1.bf16.msra.mxu0 0
      %3229 = vmatprep.subr.bf16.mxu0 0
      %3230 = vmatpush1.bf16.msra.mxu0 0
      %3231 = vmatprep.subr.bf16.mxu0 0
      %3232 = vmatpush1.bf16.msra.mxu0 0
      %3233 = vmatprep.subr.bf16.mxu0 0
      %3234 = vmatpush1.bf16.msra.mxu0 0
      %3235 = vmatprep.subr.bf16.mxu0 0
      %3236 = vmatpush1.bf16.msra.mxu0 0
      %3237 = vmatprep.subr.bf16.mxu0 0
      %3238 = vmatpush1.bf16.msra.mxu0 0
      %3239 = vmatprep.subr.bf16.mxu0 0
      %3240 = vmatpush1.bf16.msra.mxu0 0
      %3241 = vmatprep.mubr.bf16.mxu0 0
      %3242 = vmatmul.mubr.bf16.gmra.mrb[0].mxu0 %v3136
      %v3243 = vpop.f32.mrb[0].mxu0
      %v3244 = vadd.f32 0.0, %v3243
      %v3245 = vpop.f32.mrb[0].mxu0
      %v3246 = vpop.f32.mrb[0].mxu0
      %v3247 = vadd.f32 0.0, %v3246
      %v3248 = vpop.f32.mrb[0].mxu0
      %3249 = vmatprep.mubr.bf16.mxu0 0
      %3250 = vmatmul.mubr.bf16.gmra.mrb[0].mxu0 %v3137
      %v3251 = vpop.f32.mrb[0].mxu0
      %v3252 = vadd.f32 0.0, %v3251
      %v3253 = vpop.f32.mrb[0].mxu0
      %v3254 = vpop.f32.mrb[0].mxu0
      %v3255 = vadd.f32 0.0, %v3254
      %v3256 = vpop.f32.mrb[0].mxu0
      %3257 = vmatprep.mubr.bf16.mxu0 0
      %3258 = vmatmul.mubr.bf16.gmra.mrb[0].mxu0 %v3138
      %v3259 = vpop.f32.mrb[0].mxu0
      %v3260 = vadd.f32 0.0, %v3259
      %v3261 = vpop.f32.mrb[0].mxu0
      %v3262 = vpop.f32.mrb[0].mxu0
      %v3263 = vadd.f32 0.0, %v3262
      %v3264 = vpop.f32.mrb[0].mxu0
      %3265 = vmatprep.mubr.bf16.mxu0 0
      %3266 = vmatmul.mubr.bf16.gmra.mrb[0].mxu0 %v3139
      %v3267 = vpop.f32.mrb[0].mxu0
      %v3268 = vadd.f32 0.0, %v3267
      %v3269 = vpop.f32.mrb[0].mxu0
      %v3270 = vpop.f32.mrb[0].mxu0
      %v3271 = vadd.f32 0.0, %v3270
      %v3272 = vpop.f32.mrb[0].mxu0
      %3273 = vmatprep.mubr.bf16.mxu0 0
      %3274 = vmatmul.mubr.bf16.gmra.mrb[0].mxu0 %v3140
      %v3275 = vpop.f32.mrb[0].mxu0
      %v3276 = vadd.f32 0.0, %v3275
      %v3277 = vpop.f32.mrb[0].mxu0
      %v3278 = vpop.f32.mrb[0].mxu0
      %v3279 = vadd.f32 0.0, %v3278
      %v3280 = vpop.f32.mrb[0].mxu0
      %3281 = vmatprep.mubr.bf16.mxu0 0
      %3282 = vmatmul.mubr.bf16.gmra.mrb[0].mxu0 %v3141
      %v3283 = vpop.f32.mrb[0].mxu0
      %v3284 = vadd.f32 0.0, %v3283
      %v3285 = vpop.f32.mrb[0].mxu0
      %v3286 = vpop.f32.mrb[0].mxu0
      %v3287 = vadd.f32 0.0, %v3286
      %v3288 = vpop.f32.mrb[0].mxu0
      %3289 = vmatprep.mubr.bf16.mxu0 0
      %3290 = vmatmul.mubr.bf16.gmra.mrb[0].mxu0 %v3142
      %v3291 = vpop.f32.mrb[0].mxu0
      %v3292 = vadd.f32 0.0, %v3291
      %v3293 = vpop.f32.mrb[0].mxu0
      %v3294 = vpop.f32.mrb[0].mxu0
      %v3295 = vadd.f32 0.0, %v3294
      %v3296 = vpop.f32.mrb[0].mxu0
      %3297 = vmatprep.mubr.bf16.mxu0 0
      %3298 = vmatmul.mubr.bf16.gmra.mrb[0].mxu0 %v3143
      %v3299 = vpop.f32.mrb[0].mxu0
      %v3300 = vadd.f32 0.0, %v3299
      %v3301 = vpop.f32.mrb[0].mxu0
      %v3302 = vpop.f32.mrb[0].mxu0
      %v3303 = vadd.f32 0.0, %v3302
      %v3304 = vpop.f32.mrb[0].mxu0
      %3305 = vdwg.mxu0
      %v3306 = vadd.f32 %v3034, %v3244
      %v3307 = vadd.f32 %v3037, %v3247
      %v3308 = vadd.f32 %v3042, %v3252
      %v3309 = vadd.f32 %v3045, %v3255
      %v3310 = vadd.f32 %v3050, %v3260
      %v3311 = vadd.f32 %v3053, %v3263
      %v3312 = vadd.f32 %v3058, %v3268
      %v3313 = vadd.f32 %v3061, %v3271
      %v3314 = vadd.f32 %v3066, %v3276
      %v3315 = vadd.f32 %v3069, %v3279
      %v3316 = vadd.f32 %v3074, %v3284
      %v3317 = vadd.f32 %v3077, %v3287
      %v3318 = vadd.f32 %v3082, %v3292
      %v3319 = vadd.f32 %v3085, %v3295
      %v3320 = vadd.f32 %v3090, %v3300
      %v3321 = vadd.f32 %v3093, %v3303
      %s3322 = scalar_lea.vmem [#allocation2], 16
      %v3323 = vld [vmem:[%s3322] sm:$0xff]
      %v3324 = vld [vmem:[%s3322 + $0x8] sm:$0xff]
      %v3325 = vld [vmem:[%s3322 + $0x10] sm:$0xff]
      %v3326 = vld [vmem:[%s3322 + $0x18] sm:$0xff]
      %v3327 = vld [vmem:[%s3322 + $0x20] sm:$0xff]
      %v3328 = vld [vmem:[%s3322 + $0x28] sm:$0xff]
      %v3329 = vld [vmem:[%s3322 + $0x30] sm:$0xff]
      %v3330 = vld [vmem:[%s3322 + $0x38] sm:$0xff]
      %v3331 = vld [vmem:[%s3322 + $0x40] sm:$0xff]
      %v3332 = vld [vmem:[%s3322 + $0x48] sm:$0xff]
      %v3333 = vld [vmem:[%s3322 + $0x50] sm:$0xff]
      %v3334 = vld [vmem:[%s3322 + $0x58] sm:$0xff]
      %v3335 = vld [vmem:[%s3322 + $0x60] sm:$0xff]
      %v3336 = vld [vmem:[%s3322 + $0x68] sm:$0xff]
      %v3337 = vld [vmem:[%s3322 + $0x70] sm:$0xff]
      %v3338 = vld [vmem:[%s3322 + $0x78] sm:$0xff]
      %v3339 = vunpack.c.l.bf16 %v3323
      %v3340 = vunpack.c.h.bf16 %v3323
      %v3341 = vunpack.c.l.bf16 %v3324
      %v3342 = vunpack.c.h.bf16 %v3324
      %v3343 = vunpack.c.l.bf16 %v3325
      %v3344 = vunpack.c.h.bf16 %v3325
      %v3345 = vunpack.c.l.bf16 %v3326
      %v3346 = vunpack.c.h.bf16 %v3326
      %v3347 = vunpack.c.l.bf16 %v3327
      %v3348 = vunpack.c.h.bf16 %v3327
      %v3349 = vunpack.c.l.bf16 %v3328
      %v3350 = vunpack.c.h.bf16 %v3328
      %v3351 = vunpack.c.l.bf16 %v3329
      %v3352 = vunpack.c.h.bf16 %v3329
      %v3353 = vunpack.c.l.bf16 %v3330
      %v3354 = vunpack.c.h.bf16 %v3330
      %v3355 = vunpack.c.l.bf16 %v3331
      %v3356 = vunpack.c.h.bf16 %v3331
      %v3357 = vunpack.c.l.bf16 %v3332
      %v3358 = vunpack.c.h.bf16 %v3332
      %v3359 = vunpack.c.l.bf16 %v3333
      %v3360 = vunpack.c.h.bf16 %v3333
      %v3361 = vunpack.c.l.bf16 %v3334
      %v3362 = vunpack.c.h.bf16 %v3334
      %v3363 = vunpack.c.l.bf16 %v3335
      %v3364 = vunpack.c.h.bf16 %v3335
      %v3365 = vunpack.c.l.bf16 %v3336
      %v3366 = vunpack.c.h.bf16 %v3336
      %v3367 = vunpack.c.l.bf16 %v3337
      %v3368 = vunpack.c.h.bf16 %v3337
      %v3369 = vunpack.c.l.bf16 %v3338
      %v3370 = vunpack.c.h.bf16 %v3338
      %v3371 = vrot.slane %v3339, 7
      %v3372 = vrot.slane %v3343, 7
      %v3373 = vrot.slane %v3347, 7
      %v3374 = vrot.slane %v3351, 7
      %v3375 = vrot.slane %v3355, 7
      %v3376 = vrot.slane %v3359, 7
      %v3377 = vrot.slane %v3363, 7
      %v3378 = vrot.slane %v3367, 7
      %v3379 = vrot.slane %v3340, 7
      %v3380 = vrot.slane %v3344, 7
      %v3381 = vrot.slane %v3348, 7
      %v3382 = vrot.slane %v3352, 7
      %v3383 = vrot.slane %v3356, 7
      %v3384 = vrot.slane %v3360, 7
      %v3385 = vrot.slane %v3364, 7
      %v3386 = vrot.slane %v3368, 7
      %v3387 = vrot.slane %v3342, 7
      %v3388 = vrot.slane %v3346, 7
      %v3389 = vrot.slane %v3350, 7
      %v3390 = vrot.slane %v3354, 7
      %v3391 = vrot.slane %v3358, 7
      %v3392 = vrot.slane %v3362, 7
      %v3393 = vrot.slane %v3366, 7
      %v3394 = vrot.slane %v3370, 7
      %v3395 = vsel %vm2740, %v3371, %v3379
      %v3396 = vsel %vm2740, %v3372, %v3380
      %v3397 = vsel %vm2740, %v3373, %v3381
      %v3398 = vsel %vm2740, %v3374, %v3382
      %v3399 = vsel %vm2740, %v3375, %v3383
      %v3400 = vsel %vm2740, %v3376, %v3384
      %v3401 = vsel %vm2740, %v3377, %v3385
      %v3402 = vsel %vm2740, %v3378, %v3386
      %v3403 = vsel %vm2740, %v3387, %v3371
      %v3404 = vsel %vm2740, %v3388, %v3372
      %v3405 = vsel %vm2740, %v3389, %v3373
      %v3406 = vsel %vm2740, %v3390, %v3374
      %v3407 = vsel %vm2740, %v3391, %v3375
      %v3408 = vsel %vm2740, %v3392, %v3376
      %v3409 = vsel %vm2740, %v3393, %v3377
      %v3410 = vsel %vm2740, %v3394, %v3378
      %v3411 = vpack.c.bf16 %v3395, %v3403
      %v3412 = vpack.c.bf16 %v3396, %v3404
      %v3413 = vpack.c.bf16 %v3397, %v3405
      %v3414 = vpack.c.bf16 %v3398, %v3406
      %v3415 = vpack.c.bf16 %v3399, %v3407
      %v3416 = vpack.c.bf16 %v3400, %v3408
      %v3417 = vpack.c.bf16 %v3401, %v3409
      %v3418 = vpack.c.bf16 %v3402, %v3410
      %s3419 = scalar_lea.vmem %s3, 192
      %v3420 = vld [vmem:[%s3419] sm:$0xf]
      %v3421 = vld [vmem:[%s3419 + $0x4] sm:$0xf]
      %v3422 = vld [vmem:[%s3419 + $0x8] sm:$0xf]
      %v3423 = vld [vmem:[%s3419 + $0xc] sm:$0xf]
      %v3424 = vld [vmem:[%s3419 + $0x10] sm:$0xf]
      %v3425 = vld [vmem:[%s3419 + $0x14] sm:$0xf]
      %v3426 = vld [vmem:[%s3419 + $0x18] sm:$0xf]
      %v3427 = vld [vmem:[%s3419 + $0x1c] sm:$0xf]
      %v3428 = vld [vmem:[%s3419 + $0x20] sm:$0xf]
      %v3429 = vld [vmem:[%s3419 + $0x24] sm:$0xf]
      %v3430 = vld [vmem:[%s3419 + $0x28] sm:$0xf]
      %v3431 = vld [vmem:[%s3419 + $0x2c] sm:$0xf]
      %v3432 = vld [vmem:[%s3419 + $0x30] sm:$0xf]
      %v3433 = vld [vmem:[%s3419 + $0x34] sm:$0xf]
      %v3434 = vld [vmem:[%s3419 + $0x38] sm:$0xf]
      %v3435 = vld [vmem:[%s3419 + $0x3c] sm:$0xf]
      %v3452 = vunpack.c.l.b16 %v3420
      %v3453 = vunpack.c.l.b16 %v3421
      %v3454 = vunpack.c.l.b16 %v3422
      %v3455 = vunpack.c.l.b16 %v3423
      %v3456 = vunpack.c.l.b16 %v3424
      %v3457 = vunpack.c.l.b16 %v3425
      %v3458 = vunpack.c.l.b16 %v3426
      %v3459 = vunpack.c.l.b16 %v3427
      %v3460 = vunpack.c.l.b16 %v3428
      %v3461 = vunpack.c.l.b16 %v3429
      %v3462 = vunpack.c.l.b16 %v3430
      %v3463 = vunpack.c.l.b16 %v3431
      %v3464 = vunpack.c.l.b16 %v3432
      %v3465 = vunpack.c.l.b16 %v3433
      %v3466 = vunpack.c.l.b16 %v3434
      %v3467 = vunpack.c.l.b16 %v3435
      %v3468 = vpack.c.b16 %v3453, %v3452
      %v3469 = vpack.c.b16 %v3455, %v3454
      %v3470 = vpack.c.b16 %v3457, %v3456
      %v3471 = vpack.c.b16 %v3459, %v3458
      %v3472 = vpack.c.b16 %v3461, %v3460
      %v3473 = vpack.c.b16 %v3463, %v3462
      %v3474 = vpack.c.b16 %v3465, %v3464
      %v3475 = vpack.c.b16 %v3467, %v3466
      %3484 = vmatprep.subr.bf16.mxu0 0
      %3485 = vmatpush1.bf16.msra.mxu0 %v3468
      %3486 = vmatprep.subr.bf16.mxu0 0
      %3487 = vmatpush1.bf16.msra.mxu0 %v3469
      %3488 = vmatprep.subr.bf16.mxu0 0
      %3489 = vmatpush1.bf16.msra.mxu0 %v3470
      %3490 = vmatprep.subr.bf16.mxu0 0
      %3491 = vmatpush1.bf16.msra.mxu0 %v3471
      %3492 = vmatprep.subr.bf16.mxu0 0
      %3493 = vmatpush1.bf16.msra.mxu0 %v3472
      %3494 = vmatprep.subr.bf16.mxu0 0
      %3495 = vmatpush1.bf16.msra.mxu0 %v3473
      %3496 = vmatprep.subr.bf16.mxu0 0
      %3497 = vmatpush1.bf16.msra.mxu0 %v3474
      %3498 = vmatprep.subr.bf16.mxu0 0
      %3499 = vmatpush1.bf16.msra.mxu0 %v3475
      %3500 = vmatprep.subr.bf16.mxu0 0
      %3501 = vmatpush1.bf16.msra.mxu0 0
      %3502 = vmatprep.subr.bf16.mxu0 0
      %3503 = vmatpush1.bf16.msra.mxu0 0
      %3504 = vmatprep.subr.bf16.mxu0 0
      %3505 = vmatpush1.bf16.msra.mxu0 0
      %3506 = vmatprep.subr.bf16.mxu0 0
      %3507 = vmatpush1.bf16.msra.mxu0 0
      %3508 = vmatprep.subr.bf16.mxu0 0
      %3509 = vmatpush1.bf16.msra.mxu0 0
      %3510 = vmatprep.subr.bf16.mxu0 0
      %3511 = vmatpush1.bf16.msra.mxu0 0
      %3512 = vmatprep.subr.bf16.mxu0 0
      %3513 = vmatpush1.bf16.msra.mxu0 0
      %3514 = vmatprep.subr.bf16.mxu0 0
      %3515 = vmatpush1.bf16.msra.mxu0 0
      %3516 = vmatprep.mubr.bf16.mxu0 0
      %3517 = vmatmul.mubr.bf16.gmra.mrb[0].mxu0 %v3411
      %v3518 = vpop.f32.mrb[0].mxu0
      %v3519 = vadd.f32 0.0, %v3518
      %v3520 = vpop.f32.mrb[0].mxu0
      %v3521 = vpop.f32.mrb[0].mxu0
      %v3522 = vadd.f32 0.0, %v3521
      %v3523 = vpop.f32.mrb[0].mxu0
      %3524 = vmatprep.mubr.bf16.mxu0 0
      %3525 = vmatmul.mubr.bf16.gmra.mrb[0].mxu0 %v3412
      %v3526 = vpop.f32.mrb[0].mxu0
      %v3527 = vadd.f32 0.0, %v3526
      %v3528 = vpop.f32.mrb[0].mxu0
      %v3529 = vpop.f32.mrb[0].mxu0
      %v3530 = vadd.f32 0.0, %v3529
      %v3531 = vpop.f32.mrb[0].mxu0
      %3532 = vmatprep.mubr.bf16.mxu0 0
      %3533 = vmatmul.mubr.bf16.gmra.mrb[0].mxu0 %v3413
      %v3534 = vpop.f32.mrb[0].mxu0
      %v3535 = vadd.f32 0.0, %v3534
      %v3536 = vpop.f32.mrb[0].mxu0
      %v3537 = vpop.f32.mrb[0].mxu0
      %v3538 = vadd.f32 0.0, %v3537
      %v3539 = vpop.f32.mrb[0].mxu0
      %3540 = vmatprep.mubr.bf16.mxu0 0
      %3541 = vmatmul.mubr.bf16.gmra.mrb[0].mxu0 %v3414
      %v3542 = vpop.f32.mrb[0].mxu0
      %v3543 = vadd.f32 0.0, %v3542
      %v3544 = vpop.f32.mrb[0].mxu0
      %v3545 = vpop.f32.mrb[0].mxu0
      %v3546 = vadd.f32 0.0, %v3545
      %v3547 = vpop.f32.mrb[0].mxu0
      %3548 = vmatprep.mubr.bf16.mxu0 0
      %3549 = vmatmul.mubr.bf16.gmra.mrb[0].mxu0 %v3415
      %v3550 = vpop.f32.mrb[0].mxu0
      %v3551 = vadd.f32 0.0, %v3550
      %v3552 = vpop.f32.mrb[0].mxu0
      %v3553 = vpop.f32.mrb[0].mxu0
      %v3554 = vadd.f32 0.0, %v3553
      %v3555 = vpop.f32.mrb[0].mxu0
      %3556 = vmatprep.mubr.bf16.mxu0 0
      %3557 = vmatmul.mubr.bf16.gmra.mrb[0].mxu0 %v3416
      %v3558 = vpop.f32.mrb[0].mxu0
      %v3559 = vadd.f32 0.0, %v3558
      %v3560 = vpop.f32.mrb[0].mxu0
      %v3561 = vpop.f32.mrb[0].mxu0
      %v3562 = vadd.f32 0.0, %v3561
      %v3563 = vpop.f32.mrb[0].mxu0
      %3564 = vmatprep.mubr.bf16.mxu0 0
      %3565 = vmatmul.mubr.bf16.gmra.mrb[0].mxu0 %v3417
      %v3566 = vpop.f32.mrb[0].mxu0
      %v3567 = vadd.f32 0.0, %v3566
      %v3568 = vpop.f32.mrb[0].mxu0
      %v3569 = vpop.f32.mrb[0].mxu0
      %v3570 = vadd.f32 0.0, %v3569
      %v3571 = vpop.f32.mrb[0].mxu0
      %3572 = vmatprep.mubr.bf16.mxu0 0
      %3573 = vmatmul.mubr.bf16.gmra.mrb[0].mxu0 %v3418
      %v3574 = vpop.f32.mrb[0].mxu0
      %v3575 = vadd.f32 0.0, %v3574
      %v3576 = vpop.f32.mrb[0].mxu0
      %v3577 = vpop.f32.mrb[0].mxu0
      %v3578 = vadd.f32 0.0, %v3577
      %v3579 = vpop.f32.mrb[0].mxu0
      %3580 = vdwg.mxu0
      %v3581 = vadd.f32 %v3306, %v3519
      %v3582 = vadd.f32 %v3307, %v3522
      %v3583 = vadd.f32 %v3308, %v3527
      %v3584 = vadd.f32 %v3309, %v3530
      %v3585 = vadd.f32 %v3310, %v3535
      %v3586 = vadd.f32 %v3311, %v3538
      %v3587 = vadd.f32 %v3312, %v3543
      %v3588 = vadd.f32 %v3313, %v3546
      %v3589 = vadd.f32 %v3314, %v3551
      %v3590 = vadd.f32 %v3315, %v3554
      %v3591 = vadd.f32 %v3316, %v3559
      %v3592 = vadd.f32 %v3317, %v3562
      %v3593 = vadd.f32 %v3318, %v3567
      %v3594 = vadd.f32 %v3319, %v3570
      %v3595 = vadd.f32 %v3320, %v3575
      %v3596 = vadd.f32 %v3321, %v3578
      %v3597 = vpack.c.bf16 %v3340, %v3339
      %v3598 = vpack.c.bf16 %v3344, %v3343
      %v3599 = vpack.c.bf16 %v3348, %v3347
      %v3600 = vpack.c.bf16 %v3352, %v3351
      %v3601 = vpack.c.bf16 %v3356, %v3355
      %v3602 = vpack.c.bf16 %v3360, %v3359
      %v3603 = vpack.c.bf16 %v3364, %v3363
      %v3604 = vpack.c.bf16 %v3368, %v3367
      %s3605 = scalar_lea.vmem %s3, 256
      %v3606 = vld [vmem:[%s3605] sm:$0xf]
      %v3607 = vld [vmem:[%s3605 + $0x4] sm:$0xf]
      %v3608 = vld [vmem:[%s3605 + $0x8] sm:$0xf]
      %v3609 = vld [vmem:[%s3605 + $0xc] sm:$0xf]
      %v3610 = vld [vmem:[%s3605 + $0x10] sm:$0xf]
      %v3611 = vld [vmem:[%s3605 + $0x14] sm:$0xf]
      %v3612 = vld [vmem:[%s3605 + $0x18] sm:$0xf]
      %v3613 = vld [vmem:[%s3605 + $0x1c] sm:$0xf]
      %v3614 = vld [vmem:[%s3605 + $0x20] sm:$0xf]
      %v3615 = vld [vmem:[%s3605 + $0x24] sm:$0xf]
      %v3616 = vld [vmem:[%s3605 + $0x28] sm:$0xf]
      %v3617 = vld [vmem:[%s3605 + $0x2c] sm:$0xf]
      %v3618 = vld [vmem:[%s3605 + $0x30] sm:$0xf]
      %v3619 = vld [vmem:[%s3605 + $0x34] sm:$0xf]
      %v3620 = vld [vmem:[%s3605 + $0x38] sm:$0xf]
      %v3621 = vld [vmem:[%s3605 + $0x3c] sm:$0xf]
      %v3638 = vunpack.c.l.b16 %v3606
      %v3639 = vunpack.c.l.b16 %v3607
      %v3640 = vunpack.c.l.b16 %v3608
      %v3641 = vunpack.c.l.b16 %v3609
      %v3642 = vunpack.c.l.b16 %v3610
      %v3643 = vunpack.c.l.b16 %v3611
      %v3644 = vunpack.c.l.b16 %v3612
      %v3645 = vunpack.c.l.b16 %v3613
      %v3646 = vunpack.c.l.b16 %v3614
      %v3647 = vunpack.c.l.b16 %v3615
      %v3648 = vunpack.c.l.b16 %v3616
      %v3649 = vunpack.c.l.b16 %v3617
      %v3650 = vunpack.c.l.b16 %v3618
      %v3651 = vunpack.c.l.b16 %v3619
      %v3652 = vunpack.c.l.b16 %v3620
      %v3653 = vunpack.c.l.b16 %v3621
      %v3654 = vpack.c.b16 %v3639, %v3638
      %v3655 = vpack.c.b16 %v3641, %v3640
      %v3656 = vpack.c.b16 %v3643, %v3642
      %v3657 = vpack.c.b16 %v3645, %v3644
      %v3658 = vpack.c.b16 %v3647, %v3646
      %v3659 = vpack.c.b16 %v3649, %v3648
      %v3660 = vpack.c.b16 %v3651, %v3650
      %v3661 = vpack.c.b16 %v3653, %v3652
      %3670 = vmatprep.subr.bf16.mxu0 0
      %3671 = vmatpush1.bf16.msra.mxu0 %v3654
      %3672 = vmatprep.subr.bf16.mxu0 0
      %3673 = vmatpush1.bf16.msra.mxu0 %v3655
      %3674 = vmatprep.subr.bf16.mxu0 0
      %3675 = vmatpush1.bf16.msra.mxu0 %v3656
      %3676 = vmatprep.subr.bf16.mxu0 0
      %3677 = vmatpush1.bf16.msra.mxu0 %v3657
      %3678 = vmatprep.subr.bf16.mxu0 0
      %3679 = vmatpush1.bf16.msra.mxu0 %v3658
      %3680 = vmatprep.subr.bf16.mxu0 0
      %3681 = vmatpush1.bf16.msra.mxu0 %v3659
      %3682 = vmatprep.subr.bf16.mxu0 0
      %3683 = vmatpush1.bf16.msra.mxu0 %v3660
      %3684 = vmatprep.subr.bf16.mxu0 0
      %3685 = vmatpush1.bf16.msra.mxu0 %v3661
      %3686 = vmatprep.subr.bf16.mxu0 0
      %3687 = vmatpush1.bf16.msra.mxu0 0
      %3688 = vmatprep.subr.bf16.mxu0 0
      %3689 = vmatpush1.bf16.msra.mxu0 0
      %3690 = vmatprep.subr.bf16.mxu0 0
      %3691 = vmatpush1.bf16.msra.mxu0 0
      %3692 = vmatprep.subr.bf16.mxu0 0
      %3693 = vmatpush1.bf16.msra.mxu0 0
      %3694 = vmatprep.subr.bf16.mxu0 0
      %3695 = vmatpush1.bf16.msra.mxu0 0
      %3696 = vmatprep.subr.bf16.mxu0 0
      %3697 = vmatpush1.bf16.msra.mxu0 0
      %3698 = vmatprep.subr.bf16.mxu0 0
      %3699 = vmatpush1.bf16.msra.mxu0 0
      %3700 = vmatprep.subr.bf16.mxu0 0
      %3701 = vmatpush1.bf16.msra.mxu0 0
      %3702 = vmatprep.mubr.bf16.mxu0 0
      %3703 = vmatmul.mubr.bf16.gmra.mrb[0].mxu0 %v3597
      %v3704 = vpop.f32.mrb[0].mxu0
      %v3705 = vadd.f32 0.0, %v3704
      %v3706 = vpop.f32.mrb[0].mxu0
      %v3707 = vpop.f32.mrb[0].mxu0
      %v3708 = vadd.f32 0.0, %v3707
      %v3709 = vpop.f32.mrb[0].mxu0
      %3710 = vmatprep.mubr.bf16.mxu0 0
      %3711 = vmatmul.mubr.bf16.gmra.mrb[0].mxu0 %v3598
      %v3712 = vpop.f32.mrb[0].mxu0
      %v3713 = vadd.f32 0.0, %v3712
      %v3714 = vpop.f32.mrb[0].mxu0
      %v3715 = vpop.f32.mrb[0].mxu0
      %v3716 = vadd.f32 0.0, %v3715
      %v3717 = vpop.f32.mrb[0].mxu0
      %3718 = vmatprep.mubr.bf16.mxu0 0
      %3719 = vmatmul.mubr.bf16.gmra.mrb[0].mxu0 %v3599
      %v3720 = vpop.f32.mrb[0].mxu0
      %v3721 = vadd.f32 0.0, %v3720
      %v3722 = vpop.f32.mrb[0].mxu0
      %v3723 = vpop.f32.mrb[0].mxu0
      %v3724 = vadd.f32 0.0, %v3723
      %v3725 = vpop.f32.mrb[0].mxu0
      %3726 = vmatprep.mubr.bf16.mxu0 0
      %3727 = vmatmul.mubr.bf16.gmra.mrb[0].mxu0 %v3600
      %v3728 = vpop.f32.mrb[0].mxu0
      %v3729 = vadd.f32 0.0, %v3728
      %v3730 = vpop.f32.mrb[0].mxu0
      %v3731 = vpop.f32.mrb[0].mxu0
      %v3732 = vadd.f32 0.0, %v3731
      %v3733 = vpop.f32.mrb[0].mxu0
      %3734 = vmatprep.mubr.bf16.mxu0 0
      %3735 = vmatmul.mubr.bf16.gmra.mrb[0].mxu0 %v3601
      %v3736 = vpop.f32.mrb[0].mxu0
      %v3737 = vadd.f32 0.0, %v3736
      %v3738 = vpop.f32.mrb[0].mxu0
      %v3739 = vpop.f32.mrb[0].mxu0
      %v3740 = vadd.f32 0.0, %v3739
      %v3741 = vpop.f32.mrb[0].mxu0
      %3742 = vmatprep.mubr.bf16.mxu0 0
      %3743 = vmatmul.mubr.bf16.gmra.mrb[0].mxu0 %v3602
      %v3744 = vpop.f32.mrb[0].mxu0
      %v3745 = vadd.f32 0.0, %v3744
      %v3746 = vpop.f32.mrb[0].mxu0
      %v3747 = vpop.f32.mrb[0].mxu0
      %v3748 = vadd.f32 0.0, %v3747
      %v3749 = vpop.f32.mrb[0].mxu0
      %3750 = vmatprep.mubr.bf16.mxu0 0
      %3751 = vmatmul.mubr.bf16.gmra.mrb[0].mxu0 %v3603
      %v3752 = vpop.f32.mrb[0].mxu0
      %v3753 = vadd.f32 0.0, %v3752
      %v3754 = vpop.f32.mrb[0].mxu0
      %v3755 = vpop.f32.mrb[0].mxu0
      %v3756 = vadd.f32 0.0, %v3755
      %v3757 = vpop.f32.mrb[0].mxu0
      %3758 = vmatprep.mubr.bf16.mxu0 0
      %3759 = vmatmul.mubr.bf16.gmra.mrb[0].mxu0 %v3604
      %v3760 = vpop.f32.mrb[0].mxu0
      %v3761 = vadd.f32 0.0, %v3760
      %v3762 = vpop.f32.mrb[0].mxu0
      %v3763 = vpop.f32.mrb[0].mxu0
      %v3764 = vadd.f32 0.0, %v3763
      %v3765 = vpop.f32.mrb[0].mxu0
      %3766 = vdwg.mxu0
      %v3767 = vadd.f32 %v3581, %v3705
      %v3768 = vadd.f32 %v3582, %v3708
      %v3769 = vadd.f32 %v3583, %v3713
      %v3770 = vadd.f32 %v3584, %v3716
      %v3771 = vadd.f32 %v3585, %v3721
      %v3772 = vadd.f32 %v3586, %v3724
      %v3773 = vadd.f32 %v3587, %v3729
      %v3774 = vadd.f32 %v3588, %v3732
      %v3775 = vadd.f32 %v3589, %v3737
      %v3776 = vadd.f32 %v3590, %v3740
      %v3777 = vadd.f32 %v3591, %v3745
      %v3778 = vadd.f32 %v3592, %v3748
      %v3779 = vadd.f32 %v3593, %v3753
      %v3780 = vadd.f32 %v3594, %v3756
      %v3781 = vadd.f32 %v3595, %v3761
      %v3782 = vadd.f32 %v3596, %v3764
      %v3783 = vrot.slane %v3339, 1
      %v3784 = vrot.slane %v3343, 1
      %v3785 = vrot.slane %v3347, 1
      %v3786 = vrot.slane %v3351, 1
      %v3787 = vrot.slane %v3355, 1
      %v3788 = vrot.slane %v3359, 1
      %v3789 = vrot.slane %v3363, 1
      %v3790 = vrot.slane %v3367, 1
      %v3791 = vrot.slane %v3340, 1
      %v3792 = vrot.slane %v3344, 1
      %v3793 = vrot.slane %v3348, 1
      %v3794 = vrot.slane %v3352, 1
      %v3795 = vrot.slane %v3356, 1
      %v3796 = vrot.slane %v3360, 1
      %v3797 = vrot.slane %v3364, 1
      %v3798 = vrot.slane %v3368, 1
      %v3799 = vrot.slane %v3341, 1
      %v3800 = vrot.slane %v3345, 1
      %v3801 = vrot.slane %v3349, 1
      %v3802 = vrot.slane %v3353, 1
      %v3803 = vrot.slane %v3357, 1
      %v3804 = vrot.slane %v3361, 1
      %v3805 = vrot.slane %v3365, 1
      %v3806 = vrot.slane %v3369, 1
      %v3807 = vsel %vm373, %v3791, %v3799
      %v3808 = vsel %vm373, %v3792, %v3800
      %v3809 = vsel %vm373, %v3793, %v3801
      %v3810 = vsel %vm373, %v3794, %v3802
      %v3811 = vsel %vm373, %v3795, %v3803
      %v3812 = vsel %vm373, %v3796, %v3804
      %v3813 = vsel %vm373, %v3797, %v3805
      %v3814 = vsel %vm373, %v3798, %v3806
      %v3815 = vsel %vm373, %v3783, %v3791
      %v3816 = vsel %vm373, %v3784, %v3792
      %v3817 = vsel %vm373, %v3785, %v3793
      %v3818 = vsel %vm373, %v3786, %v3794
      %v3819 = vsel %vm373, %v3787, %v3795
      %v3820 = vsel %vm373, %v3788, %v3796
      %v3821 = vsel %vm373, %v3789, %v3797
      %v3822 = vsel %vm373, %v3790, %v3798
      %v3823 = vpack.c.bf16 %v3807, %v3815
      %v3824 = vpack.c.bf16 %v3808, %v3816
      %v3825 = vpack.c.bf16 %v3809, %v3817
      %v3826 = vpack.c.bf16 %v3810, %v3818
      %v3827 = vpack.c.bf16 %v3811, %v3819
      %v3828 = vpack.c.bf16 %v3812, %v3820
      %v3829 = vpack.c.bf16 %v3813, %v3821
      %v3830 = vpack.c.bf16 %v3814, %v3822
      %s3831 = scalar_lea.vmem %s3, 320
      %v3832 = vld [vmem:[%s3831] sm:$0xf]
      %v3833 = vld [vmem:[%s3831 + $0x4] sm:$0xf]
      %v3834 = vld [vmem:[%s3831 + $0x8] sm:$0xf]
      %v3835 = vld [vmem:[%s3831 + $0xc] sm:$0xf]
      %v3836 = vld [vmem:[%s3831 + $0x10] sm:$0xf]
      %v3837 = vld [vmem:[%s3831 + $0x14] sm:$0xf]
      %v3838 = vld [vmem:[%s3831 + $0x18] sm:$0xf]
      %v3839 = vld [vmem:[%s3831 + $0x1c] sm:$0xf]
      %v3840 = vld [vmem:[%s3831 + $0x20] sm:$0xf]
      %v3841 = vld [vmem:[%s3831 + $0x24] sm:$0xf]
      %v3842 = vld [vmem:[%s3831 + $0x28] sm:$0xf]
      %v3843 = vld [vmem:[%s3831 + $0x2c] sm:$0xf]
      %v3844 = vld [vmem:[%s3831 + $0x30] sm:$0xf]
      %v3845 = vld [vmem:[%s3831 + $0x34] sm:$0xf]
      %v3846 = vld [vmem:[%s3831 + $0x38] sm:$0xf]
      %v3847 = vld [vmem:[%s3831 + $0x3c] sm:$0xf]
      %v3864 = vunpack.c.l.b16 %v3832
      %v3865 = vunpack.c.l.b16 %v3833
      %v3866 = vunpack.c.l.b16 %v3834
      %v3867 = vunpack.c.l.b16 %v3835
      %v3868 = vunpack.c.l.b16 %v3836
      %v3869 = vunpack.c.l.b16 %v3837
      %v3870 = vunpack.c.l.b16 %v3838
      %v3871 = vunpack.c.l.b16 %v3839
      %v3872 = vunpack.c.l.b16 %v3840
      %v3873 = vunpack.c.l.b16 %v3841
      %v3874 = vunpack.c.l.b16 %v3842
      %v3875 = vunpack.c.l.b16 %v3843
      %v3876 = vunpack.c.l.b16 %v3844
      %v3877 = vunpack.c.l.b16 %v3845
      %v3878 = vunpack.c.l.b16 %v3846
      %v3879 = vunpack.c.l.b16 %v3847
      %v3880 = vpack.c.b16 %v3865, %v3864
      %v3881 = vpack.c.b16 %v3867, %v3866
      %v3882 = vpack.c.b16 %v3869, %v3868
      %v3883 = vpack.c.b16 %v3871, %v3870
      %v3884 = vpack.c.b16 %v3873, %v3872
      %v3885 = vpack.c.b16 %v3875, %v3874
      %v3886 = vpack.c.b16 %v3877, %v3876
      %v3887 = vpack.c.b16 %v3879, %v3878
      %3896 = vmatprep.subr.bf16.mxu0 0
      %3897 = vmatpush1.bf16.msra.mxu0 %v3880
      %3898 = vmatprep.subr.bf16.mxu0 0
      %3899 = vmatpush1.bf16.msra.mxu0 %v3881
      %3900 = vmatprep.subr.bf16.mxu0 0
      %3901 = vmatpush1.bf16.msra.mxu0 %v3882
      %3902 = vmatprep.subr.bf16.mxu0 0
      %3903 = vmatpush1.bf16.msra.mxu0 %v3883
      %3904 = vmatprep.subr.bf16.mxu0 0
      %3905 = vmatpush1.bf16.msra.mxu0 %v3884
      %3906 = vmatprep.subr.bf16.mxu0 0
      %3907 = vmatpush1.bf16.msra.mxu0 %v3885
      %3908 = vmatprep.subr.bf16.mxu0 0
      %3909 = vmatpush1.bf16.msra.mxu0 %v3886
      %3910 = vmatprep.subr.bf16.mxu0 0
      %3911 = vmatpush1.bf16.msra.mxu0 %v3887
      %3912 = vmatprep.subr.bf16.mxu0 0
      %3913 = vmatpush1.bf16.msra.mxu0 0
      %3914 = vmatprep.subr.bf16.mxu0 0
      %3915 = vmatpush1.bf16.msra.mxu0 0
      %3916 = vmatprep.subr.bf16.mxu0 0
      %3917 = vmatpush1.bf16.msra.mxu0 0
      %3918 = vmatprep.subr.bf16.mxu0 0
      %3919 = vmatpush1.bf16.msra.mxu0 0
      %3920 = vmatprep.subr.bf16.mxu0 0
      %3921 = vmatpush1.bf16.msra.mxu0 0
      %3922 = vmatprep.subr.bf16.mxu0 0
      %3923 = vmatpush1.bf16.msra.mxu0 0
      %3924 = vmatprep.subr.bf16.mxu0 0
      %3925 = vmatpush1.bf16.msra.mxu0 0
      %3926 = vmatprep.subr.bf16.mxu0 0
      %3927 = vmatpush1.bf16.msra.mxu0 0
      %3928 = vmatprep.mubr.bf16.mxu0 0
      %3929 = vmatmul.mubr.bf16.gmra.mrb[0].mxu0 %v3823
      %v3930 = vpop.f32.mrb[0].mxu0
      %v3931 = vadd.f32 0.0, %v3930
      %v3932 = vpop.f32.mrb[0].mxu0
      %v3933 = vpop.f32.mrb[0].mxu0
      %v3934 = vadd.f32 0.0, %v3933
      %v3935 = vpop.f32.mrb[0].mxu0
      %3936 = vmatprep.mubr.bf16.mxu0 0
      %3937 = vmatmul.mubr.bf16.gmra.mrb[0].mxu0 %v3824
      %v3938 = vpop.f32.mrb[0].mxu0
      %v3939 = vadd.f32 0.0, %v3938
      %v3940 = vpop.f32.mrb[0].mxu0
      %v3941 = vpop.f32.mrb[0].mxu0
      %v3942 = vadd.f32 0.0, %v3941
      %v3943 = vpop.f32.mrb[0].mxu0
      %3944 = vmatprep.mubr.bf16.mxu0 0
      %3945 = vmatmul.mubr.bf16.gmra.mrb[0].mxu0 %v3825
      %v3946 = vpop.f32.mrb[0].mxu0
      %v3947 = vadd.f32 0.0, %v3946
      %v3948 = vpop.f32.mrb[0].mxu0
      %v3949 = vpop.f32.mrb[0].mxu0
      %v3950 = vadd.f32 0.0, %v3949
      %v3951 = vpop.f32.mrb[0].mxu0
      %3952 = vmatprep.mubr.bf16.mxu0 0
      %3953 = vmatmul.mubr.bf16.gmra.mrb[0].mxu0 %v3826
      %v3954 = vpop.f32.mrb[0].mxu0
      %v3955 = vadd.f32 0.0, %v3954
      %v3956 = vpop.f32.mrb[0].mxu0
      %v3957 = vpop.f32.mrb[0].mxu0
      %v3958 = vadd.f32 0.0, %v3957
      %v3959 = vpop.f32.mrb[0].mxu0
      %3960 = vmatprep.mubr.bf16.mxu0 0
      %3961 = vmatmul.mubr.bf16.gmra.mrb[0].mxu0 %v3827
      %v3962 = vpop.f32.mrb[0].mxu0
      %v3963 = vadd.f32 0.0, %v3962
      %v3964 = vpop.f32.mrb[0].mxu0
      %v3965 = vpop.f32.mrb[0].mxu0
      %v3966 = vadd.f32 0.0, %v3965
      %v3967 = vpop.f32.mrb[0].mxu0
      %3968 = vmatprep.mubr.bf16.mxu0 0
      %3969 = vmatmul.mubr.bf16.gmra.mrb[0].mxu0 %v3828
      %v3970 = vpop.f32.mrb[0].mxu0
      %v3971 = vadd.f32 0.0, %v3970
      %v3972 = vpop.f32.mrb[0].mxu0
      %v3973 = vpop.f32.mrb[0].mxu0
      %v3974 = vadd.f32 0.0, %v3973
      %v3975 = vpop.f32.mrb[0].mxu0
      %3976 = vmatprep.mubr.bf16.mxu0 0
      %3977 = vmatmul.mubr.bf16.gmra.mrb[0].mxu0 %v3829
      %v3978 = vpop.f32.mrb[0].mxu0
      %v3979 = vadd.f32 0.0, %v3978
      %v3980 = vpop.f32.mrb[0].mxu0
      %v3981 = vpop.f32.mrb[0].mxu0
      %v3982 = vadd.f32 0.0, %v3981
      %v3983 = vpop.f32.mrb[0].mxu0
      %3984 = vmatprep.mubr.bf16.mxu0 0
      %3985 = vmatmul.mubr.bf16.gmra.mrb[0].mxu0 %v3830
      %v3986 = vpop.f32.mrb[0].mxu0
      %v3987 = vadd.f32 0.0, %v3986
      %v3988 = vpop.f32.mrb[0].mxu0
      %v3989 = vpop.f32.mrb[0].mxu0
      %v3990 = vadd.f32 0.0, %v3989
      %v3991 = vpop.f32.mrb[0].mxu0
      %3992 = vdwg.mxu0
      %v3993 = vadd.f32 %v3767, %v3931
      %v3994 = vadd.f32 %v3768, %v3934
      %v3995 = vadd.f32 %v3769, %v3939
      %v3996 = vadd.f32 %v3770, %v3942
      %v3997 = vadd.f32 %v3771, %v3947
      %v3998 = vadd.f32 %v3772, %v3950
      %v3999 = vadd.f32 %v3773, %v3955
      %v4000 = vadd.f32 %v3774, %v3958
      %v4001 = vadd.f32 %v3775, %v3963
      %v4002 = vadd.f32 %v3776, %v3966
      %v4003 = vadd.f32 %v3777, %v3971
      %v4004 = vadd.f32 %v3778, %v3974
      %v4005 = vadd.f32 %v3779, %v3979
      %v4006 = vadd.f32 %v3780, %v3982
      %v4007 = vadd.f32 %v3781, %v3987
      %v4008 = vadd.f32 %v3782, %v3990
      %s4009 = scalar_lea.vmem [#allocation2], 32
      %v4010 = vld [vmem:[%s4009] sm:$0xff]
      %v4011 = vld [vmem:[%s4009 + $0x8] sm:$0xff]
      %v4012 = vld [vmem:[%s4009 + $0x10] sm:$0xff]
      %v4013 = vld [vmem:[%s4009 + $0x18] sm:$0xff]
      %v4014 = vld [vmem:[%s4009 + $0x20] sm:$0xff]
      %v4015 = vld [vmem:[%s4009 + $0x28] sm:$0xff]
      %v4016 = vld [vmem:[%s4009 + $0x30] sm:$0xff]
      %v4017 = vld [vmem:[%s4009 + $0x38] sm:$0xff]
      %v4018 = vld [vmem:[%s4009 + $0x40] sm:$0xff]
      %v4019 = vld [vmem:[%s4009 + $0x48] sm:$0xff]
      %v4020 = vld [vmem:[%s4009 + $0x50] sm:$0xff]
      %v4021 = vld [vmem:[%s4009 + $0x58] sm:$0xff]
      %v4022 = vld [vmem:[%s4009 + $0x60] sm:$0xff]
      %v4023 = vld [vmem:[%s4009 + $0x68] sm:$0xff]
      %v4024 = vld [vmem:[%s4009 + $0x70] sm:$0xff]
      %v4025 = vld [vmem:[%s4009 + $0x78] sm:$0xff]
      %v4026 = vunpack.c.l.bf16 %v4010
      %v4027 = vunpack.c.h.bf16 %v4010
      %v4028 = vunpack.c.l.bf16 %v4011
      %v4029 = vunpack.c.h.bf16 %v4011
      %v4030 = vunpack.c.l.bf16 %v4012
      %v4031 = vunpack.c.h.bf16 %v4012
      %v4032 = vunpack.c.l.bf16 %v4013
      %v4033 = vunpack.c.h.bf16 %v4013
      %v4034 = vunpack.c.l.bf16 %v4014
      %v4035 = vunpack.c.h.bf16 %v4014
      %v4036 = vunpack.c.l.bf16 %v4015
      %v4037 = vunpack.c.h.bf16 %v4015
      %v4038 = vunpack.c.l.bf16 %v4016
      %v4039 = vunpack.c.h.bf16 %v4016
      %v4040 = vunpack.c.l.bf16 %v4017
      %v4041 = vunpack.c.h.bf16 %v4017
      %v4042 = vunpack.c.l.bf16 %v4018
      %v4043 = vunpack.c.h.bf16 %v4018
      %v4044 = vunpack.c.l.bf16 %v4019
      %v4045 = vunpack.c.h.bf16 %v4019
      %v4046 = vunpack.c.l.bf16 %v4020
      %v4047 = vunpack.c.h.bf16 %v4020
      %v4048 = vunpack.c.l.bf16 %v4021
      %v4049 = vunpack.c.h.bf16 %v4021
      %v4050 = vunpack.c.l.bf16 %v4022
      %v4051 = vunpack.c.h.bf16 %v4022
      %v4052 = vunpack.c.l.bf16 %v4023
      %v4053 = vunpack.c.h.bf16 %v4023
      %v4054 = vunpack.c.l.bf16 %v4024
      %v4055 = vunpack.c.h.bf16 %v4024
      %v4056 = vunpack.c.l.bf16 %v4025
      %v4057 = vunpack.c.h.bf16 %v4025
      %v4058 = vrot.slane %v4026, 7
      %v4059 = vrot.slane %v4030, 7
      %v4060 = vrot.slane %v4034, 7
      %v4061 = vrot.slane %v4038, 7
      %v4062 = vrot.slane %v4042, 7
      %v4063 = vrot.slane %v4046, 7
      %v4064 = vrot.slane %v4050, 7
      %v4065 = vrot.slane %v4054, 7
      %v4066 = vrot.slane %v4027, 7
      %v4067 = vrot.slane %v4031, 7
      %v4068 = vrot.slane %v4035, 7
      %v4069 = vrot.slane %v4039, 7
      %v4070 = vrot.slane %v4043, 7
      %v4071 = vrot.slane %v4047, 7
      %v4072 = vrot.slane %v4051, 7
      %v4073 = vrot.slane %v4055, 7
      %v4074 = vrot.slane %v4029, 7
      %v4075 = vrot.slane %v4033, 7
      %v4076 = vrot.slane %v4037, 7
      %v4077 = vrot.slane %v4041, 7
      %v4078 = vrot.slane %v4045, 7
      %v4079 = vrot.slane %v4049, 7
      %v4080 = vrot.slane %v4053, 7
      %v4081 = vrot.slane %v4057, 7
      %v4082 = vsel %vm2740, %v4058, %v4066
      %v4083 = vsel %vm2740, %v4059, %v4067
      %v4084 = vsel %vm2740, %v4060, %v4068
      %v4085 = vsel %vm2740, %v4061, %v4069
      %v4086 = vsel %vm2740, %v4062, %v4070
      %v4087 = vsel %vm2740, %v4063, %v4071
      %v4088 = vsel %vm2740, %v4064, %v4072
      %v4089 = vsel %vm2740, %v4065, %v4073
      %v4090 = vsel %vm2740, %v4074, %v4058
      %v4091 = vsel %vm2740, %v4075, %v4059
      %v4092 = vsel %vm2740, %v4076, %v4060
      %v4093 = vsel %vm2740, %v4077, %v4061
      %v4094 = vsel %vm2740, %v4078, %v4062
      %v4095 = vsel %vm2740, %v4079, %v4063
      %v4096 = vsel %vm2740, %v4080, %v4064
      %v4097 = vsel %vm2740, %v4081, %v4065
      %v4098 = vpack.c.bf16 %v4082, %v4090
      %v4099 = vpack.c.bf16 %v4083, %v4091
      %v4100 = vpack.c.bf16 %v4084, %v4092
      %v4101 = vpack.c.bf16 %v4085, %v4093
      %v4102 = vpack.c.bf16 %v4086, %v4094
      %v4103 = vpack.c.bf16 %v4087, %v4095
      %v4104 = vpack.c.bf16 %v4088, %v4096
      %v4105 = vpack.c.bf16 %v4089, %v4097
      %s4106 = scalar_lea.vmem %s3, 384
      %v4107 = vld [vmem:[%s4106] sm:$0xf]
      %v4108 = vld [vmem:[%s4106 + $0x4] sm:$0xf]
      %v4109 = vld [vmem:[%s4106 + $0x8] sm:$0xf]
      %v4110 = vld [vmem:[%s4106 + $0xc] sm:$0xf]
      %v4111 = vld [vmem:[%s4106 + $0x10] sm:$0xf]
      %v4112 = vld [vmem:[%s4106 + $0x14] sm:$0xf]
      %v4113 = vld [vmem:[%s4106 + $0x18] sm:$0xf]
      %v4114 = vld [vmem:[%s4106 + $0x1c] sm:$0xf]
      %v4115 = vld [vmem:[%s4106 + $0x20] sm:$0xf]
      %v4116 = vld [vmem:[%s4106 + $0x24] sm:$0xf]
      %v4117 = vld [vmem:[%s4106 + $0x28] sm:$0xf]
      %v4118 = vld [vmem:[%s4106 + $0x2c] sm:$0xf]
      %v4119 = vld [vmem:[%s4106 + $0x30] sm:$0xf]
      %v4120 = vld [vmem:[%s4106 + $0x34] sm:$0xf]
      %v4121 = vld [vmem:[%s4106 + $0x38] sm:$0xf]
      %v4122 = vld [vmem:[%s4106 + $0x3c] sm:$0xf]
      %v4139 = vunpack.c.l.b16 %v4107
      %v4140 = vunpack.c.l.b16 %v4108
      %v4141 = vunpack.c.l.b16 %v4109
      %v4142 = vunpack.c.l.b16 %v4110
      %v4143 = vunpack.c.l.b16 %v4111
      %v4144 = vunpack.c.l.b16 %v4112
      %v4145 = vunpack.c.l.b16 %v4113
      %v4146 = vunpack.c.l.b16 %v4114
      %v4147 = vunpack.c.l.b16 %v4115
      %v4148 = vunpack.c.l.b16 %v4116
      %v4149 = vunpack.c.l.b16 %v4117
      %v4150 = vunpack.c.l.b16 %v4118
      %v4151 = vunpack.c.l.b16 %v4119
      %v4152 = vunpack.c.l.b16 %v4120
      %v4153 = vunpack.c.l.b16 %v4121
      %v4154 = vunpack.c.l.b16 %v4122
      %v4155 = vpack.c.b16 %v4140, %v4139
      %v4156 = vpack.c.b16 %v4142, %v4141
      %v4157 = vpack.c.b16 %v4144, %v4143
      %v4158 = vpack.c.b16 %v4146, %v4145
      %v4159 = vpack.c.b16 %v4148, %v4147
      %v4160 = vpack.c.b16 %v4150, %v4149
      %v4161 = vpack.c.b16 %v4152, %v4151
      %v4162 = vpack.c.b16 %v4154, %v4153
      %4171 = vmatprep.subr.bf16.mxu0 0
      %4172 = vmatpush1.bf16.msra.mxu0 %v4155
      %4173 = vmatprep.subr.bf16.mxu0 0
      %4174 = vmatpush1.bf16.msra.mxu0 %v4156
      %4175 = vmatprep.subr.bf16.mxu0 0
      %4176 = vmatpush1.bf16.msra.mxu0 %v4157
      %4177 = vmatprep.subr.bf16.mxu0 0
      %4178 = vmatpush1.bf16.msra.mxu0 %v4158
      %4179 = vmatprep.subr.bf16.mxu0 0
      %4180 = vmatpush1.bf16.msra.mxu0 %v4159
      %4181 = vmatprep.subr.bf16.mxu0 0
      %4182 = vmatpush1.bf16.msra.mxu0 %v4160
      %4183 = vmatprep.subr.bf16.mxu0 0
      %4184 = vmatpush1.bf16.msra.mxu0 %v4161
      %4185 = vmatprep.subr.bf16.mxu0 0
      %4186 = vmatpush1.bf16.msra.mxu0 %v4162
      %4187 = vmatprep.subr.bf16.mxu0 0
      %4188 = vmatpush1.bf16.msra.mxu0 0
      %4189 = vmatprep.subr.bf16.mxu0 0
      %4190 = vmatpush1.bf16.msra.mxu0 0
      %4191 = vmatprep.subr.bf16.mxu0 0
      %4192 = vmatpush1.bf16.msra.mxu0 0
      %4193 = vmatprep.subr.bf16.mxu0 0
      %4194 = vmatpush1.bf16.msra.mxu0 0
      %4195 = vmatprep.subr.bf16.mxu0 0
      %4196 = vmatpush1.bf16.msra.mxu0 0
      %4197 = vmatprep.subr.bf16.mxu0 0
      %4198 = vmatpush1.bf16.msra.mxu0 0
      %4199 = vmatprep.subr.bf16.mxu0 0
      %4200 = vmatpush1.bf16.msra.mxu0 0
      %4201 = vmatprep.subr.bf16.mxu0 0
      %4202 = vmatpush1.bf16.msra.mxu0 0
      %4203 = vmatprep.mubr.bf16.mxu0 0
      %4204 = vmatmul.mubr.bf16.gmra.mrb[0].mxu0 %v4098
      %v4205 = vpop.f32.mrb[0].mxu0
      %v4206 = vadd.f32 0.0, %v4205
      %v4207 = vpop.f32.mrb[0].mxu0
      %v4208 = vpop.f32.mrb[0].mxu0
      %v4209 = vadd.f32 0.0, %v4208
      %v4210 = vpop.f32.mrb[0].mxu0
      %4211 = vmatprep.mubr.bf16.mxu0 0
      %4212 = vmatmul.mubr.bf16.gmra.mrb[0].mxu0 %v4099
      %v4213 = vpop.f32.mrb[0].mxu0
      %v4214 = vadd.f32 0.0, %v4213
      %v4215 = vpop.f32.mrb[0].mxu0
      %v4216 = vpop.f32.mrb[0].mxu0
      %v4217 = vadd.f32 0.0, %v4216
      %v4218 = vpop.f32.mrb[0].mxu0
      %4219 = vmatprep.mubr.bf16.mxu0 0
      %4220 = vmatmul.mubr.bf16.gmra.mrb[0].mxu0 %v4100
      %v4221 = vpop.f32.mrb[0].mxu0
      %v4222 = vadd.f32 0.0, %v4221
      %v4223 = vpop.f32.mrb[0].mxu0
      %v4224 = vpop.f32.mrb[0].mxu0
      %v4225 = vadd.f32 0.0, %v4224
      %v4226 = vpop.f32.mrb[0].mxu0
      %4227 = vmatprep.mubr.bf16.mxu0 0
      %4228 = vmatmul.mubr.bf16.gmra.mrb[0].mxu0 %v4101
      %v4229 = vpop.f32.mrb[0].mxu0
      %v4230 = vadd.f32 0.0, %v4229
      %v4231 = vpop.f32.mrb[0].mxu0
      %v4232 = vpop.f32.mrb[0].mxu0
      %v4233 = vadd.f32 0.0, %v4232
      %v4234 = vpop.f32.mrb[0].mxu0
      %4235 = vmatprep.mubr.bf16.mxu0 0
      %4236 = vmatmul.mubr.bf16.gmra.mrb[0].mxu0 %v4102
      %v4237 = vpop.f32.mrb[0].mxu0
      %v4238 = vadd.f32 0.0, %v4237
      %v4239 = vpop.f32.mrb[0].mxu0
      %v4240 = vpop.f32.mrb[0].mxu0
      %v4241 = vadd.f32 0.0, %v4240
      %v4242 = vpop.f32.mrb[0].mxu0
      %4243 = vmatprep.mubr.bf16.mxu0 0
      %4244 = vmatmul.mubr.bf16.gmra.mrb[0].mxu0 %v4103
      %v4245 = vpop.f32.mrb[0].mxu0
      %v4246 = vadd.f32 0.0, %v4245
      %v4247 = vpop.f32.mrb[0].mxu0
      %v4248 = vpop.f32.mrb[0].mxu0
      %v4249 = vadd.f32 0.0, %v4248
      %v4250 = vpop.f32.mrb[0].mxu0
      %4251 = vmatprep.mubr.bf16.mxu0 0
      %4252 = vmatmul.mubr.bf16.gmra.mrb[0].mxu0 %v4104
      %v4253 = vpop.f32.mrb[0].mxu0
      %v4254 = vadd.f32 0.0, %v4253
      %v4255 = vpop.f32.mrb[0].mxu0
      %v4256 = vpop.f32.mrb[0].mxu0
      %v4257 = vadd.f32 0.0, %v4256
      %v4258 = vpop.f32.mrb[0].mxu0
      %4259 = vmatprep.mubr.bf16.mxu0 0
      %4260 = vmatmul.mubr.bf16.gmra.mrb[0].mxu0 %v4105
      %v4261 = vpop.f32.mrb[0].mxu0
      %v4262 = vadd.f32 0.0, %v4261
      %v4263 = vpop.f32.mrb[0].mxu0
      %v4264 = vpop.f32.mrb[0].mxu0
      %v4265 = vadd.f32 0.0, %v4264
      %v4266 = vpop.f32.mrb[0].mxu0
      %4267 = vdwg.mxu0
      %v4268 = vadd.f32 %v3993, %v4206
      %v4269 = vadd.f32 %v3994, %v4209
      %v4270 = vadd.f32 %v3995, %v4214
      %v4271 = vadd.f32 %v3996, %v4217
      %v4272 = vadd.f32 %v3997, %v4222
      %v4273 = vadd.f32 %v3998, %v4225
      %v4274 = vadd.f32 %v3999, %v4230
      %v4275 = vadd.f32 %v4000, %v4233
      %v4276 = vadd.f32 %v4001, %v4238
      %v4277 = vadd.f32 %v4002, %v4241
      %v4278 = vadd.f32 %v4003, %v4246
      %v4279 = vadd.f32 %v4004, %v4249
      %v4280 = vadd.f32 %v4005, %v4254
      %v4281 = vadd.f32 %v4006, %v4257
      %v4282 = vadd.f32 %v4007, %v4262
      %v4283 = vadd.f32 %v4008, %v4265
      %v4284 = vpack.c.bf16 %v4027, %v4026
      %v4285 = vpack.c.bf16 %v4031, %v4030
      %v4286 = vpack.c.bf16 %v4035, %v4034
      %v4287 = vpack.c.bf16 %v4039, %v4038
      %v4288 = vpack.c.bf16 %v4043, %v4042
      %v4289 = vpack.c.bf16 %v4047, %v4046
      %v4290 = vpack.c.bf16 %v4051, %v4050
      %v4291 = vpack.c.bf16 %v4055, %v4054
      %s4292 = scalar_lea.vmem %s3, 448
      %v4293 = vld [vmem:[%s4292] sm:$0xf]
      %v4294 = vld [vmem:[%s4292 + $0x4] sm:$0xf]
      %v4295 = vld [vmem:[%s4292 + $0x8] sm:$0xf]
      %v4296 = vld [vmem:[%s4292 + $0xc] sm:$0xf]
      %v4297 = vld [vmem:[%s4292 + $0x10] sm:$0xf]
      %v4298 = vld [vmem:[%s4292 + $0x14] sm:$0xf]
      %v4299 = vld [vmem:[%s4292 + $0x18] sm:$0xf]
      %v4300 = vld [vmem:[%s4292 + $0x1c] sm:$0xf]
      %v4301 = vld [vmem:[%s4292 + $0x20] sm:$0xf]
      %v4302 = vld [vmem:[%s4292 + $0x24] sm:$0xf]
      %v4303 = vld [vmem:[%s4292 + $0x28] sm:$0xf]
      %v4304 = vld [vmem:[%s4292 + $0x2c] sm:$0xf]
      %v4305 = vld [vmem:[%s4292 + $0x30] sm:$0xf]
      %v4306 = vld [vmem:[%s4292 + $0x34] sm:$0xf]
      %v4307 = vld [vmem:[%s4292 + $0x38] sm:$0xf]
      %v4308 = vld [vmem:[%s4292 + $0x3c] sm:$0xf]
      %v4325 = vunpack.c.l.b16 %v4293
      %v4326 = vunpack.c.l.b16 %v4294
      %v4327 = vunpack.c.l.b16 %v4295
      %v4328 = vunpack.c.l.b16 %v4296
      %v4329 = vunpack.c.l.b16 %v4297
      %v4330 = vunpack.c.l.b16 %v4298
      %v4331 = vunpack.c.l.b16 %v4299
      %v4332 = vunpack.c.l.b16 %v4300
      %v4333 = vunpack.c.l.b16 %v4301
      %v4334 = vunpack.c.l.b16 %v4302
      %v4335 = vunpack.c.l.b16 %v4303
      %v4336 = vunpack.c.l.b16 %v4304
      %v4337 = vunpack.c.l.b16 %v4305
      %v4338 = vunpack.c.l.b16 %v4306
      %v4339 = vunpack.c.l.b16 %v4307
      %v4340 = vunpack.c.l.b16 %v4308
      %v4341 = vpack.c.b16 %v4326, %v4325
      %v4342 = vpack.c.b16 %v4328, %v4327
      %v4343 = vpack.c.b16 %v4330, %v4329
      %v4344 = vpack.c.b16 %v4332, %v4331
      %v4345 = vpack.c.b16 %v4334, %v4333
      %v4346 = vpack.c.b16 %v4336, %v4335
      %v4347 = vpack.c.b16 %v4338, %v4337
      %v4348 = vpack.c.b16 %v4340, %v4339
      %4357 = vmatprep.subr.bf16.mxu0 0
      %4358 = vmatpush1.bf16.msra.mxu0 %v4341
      %4359 = vmatprep.subr.bf16.mxu0 0
      %4360 = vmatpush1.bf16.msra.mxu0 %v4342
      %4361 = vmatprep.subr.bf16.mxu0 0
      %4362 = vmatpush1.bf16.msra.mxu0 %v4343
      %4363 = vmatprep.subr.bf16.mxu0 0
      %4364 = vmatpush1.bf16.msra.mxu0 %v4344
      %4365 = vmatprep.subr.bf16.mxu0 0
      %4366 = vmatpush1.bf16.msra.mxu0 %v4345
      %4367 = vmatprep.subr.bf16.mxu0 0
      %4368 = vmatpush1.bf16.msra.mxu0 %v4346
      %4369 = vmatprep.subr.bf16.mxu0 0
      %4370 = vmatpush1.bf16.msra.mxu0 %v4347
      %4371 = vmatprep.subr.bf16.mxu0 0
      %4372 = vmatpush1.bf16.msra.mxu0 %v4348
      %4373 = vmatprep.subr.bf16.mxu0 0
      %4374 = vmatpush1.bf16.msra.mxu0 0
      %4375 = vmatprep.subr.bf16.mxu0 0
      %4376 = vmatpush1.bf16.msra.mxu0 0
      %4377 = vmatprep.subr.bf16.mxu0 0
      %4378 = vmatpush1.bf16.msra.mxu0 0
      %4379 = vmatprep.subr.bf16.mxu0 0
      %4380 = vmatpush1.bf16.msra.mxu0 0
      %4381 = vmatprep.subr.bf16.mxu0 0
      %4382 = vmatpush1.bf16.msra.mxu0 0
      %4383 = vmatprep.subr.bf16.mxu0 0
      %4384 = vmatpush1.bf16.msra.mxu0 0
      %4385 = vmatprep.subr.bf16.mxu0 0
      %4386 = vmatpush1.bf16.msra.mxu0 0
      %4387 = vmatprep.subr.bf16.mxu0 0
      %4388 = vmatpush1.bf16.msra.mxu0 0
      %4389 = vmatprep.mubr.bf16.mxu0 0
      %4390 = vmatmul.mubr.bf16.gmra.mrb[0].mxu0 %v4284
      %v4391 = vpop.f32.mrb[0].mxu0
      %v4392 = vadd.f32 0.0, %v4391
      %v4393 = vpop.f32.mrb[0].mxu0
      %v4394 = vpop.f32.mrb[0].mxu0
      %v4395 = vadd.f32 0.0, %v4394
      %v4396 = vpop.f32.mrb[0].mxu0
      %4397 = vmatprep.mubr.bf16.mxu0 0
      %4398 = vmatmul.mubr.bf16.gmra.mrb[0].mxu0 %v4285
      %v4399 = vpop.f32.mrb[0].mxu0
      %v4400 = vadd.f32 0.0, %v4399
      %v4401 = vpop.f32.mrb[0].mxu0
      %v4402 = vpop.f32.mrb[0].mxu0
      %v4403 = vadd.f32 0.0, %v4402
      %v4404 = vpop.f32.mrb[0].mxu0
      %4405 = vmatprep.mubr.bf16.mxu0 0
      %4406 = vmatmul.mubr.bf16.gmra.mrb[0].mxu0 %v4286
      %v4407 = vpop.f32.mrb[0].mxu0
      %v4408 = vadd.f32 0.0, %v4407
      %v4409 = vpop.f32.mrb[0].mxu0
      %v4410 = vpop.f32.mrb[0].mxu0
      %v4411 = vadd.f32 0.0, %v4410
      %v4412 = vpop.f32.mrb[0].mxu0
      %4413 = vmatprep.mubr.bf16.mxu0 0
      %4414 = vmatmul.mubr.bf16.gmra.mrb[0].mxu0 %v4287
      %v4415 = vpop.f32.mrb[0].mxu0
      %v4416 = vadd.f32 0.0, %v4415
      %v4417 = vpop.f32.mrb[0].mxu0
      %v4418 = vpop.f32.mrb[0].mxu0
      %v4419 = vadd.f32 0.0, %v4418
      %v4420 = vpop.f32.mrb[0].mxu0
      %4421 = vmatprep.mubr.bf16.mxu0 0
      %4422 = vmatmul.mubr.bf16.gmra.mrb[0].mxu0 %v4288
      %v4423 = vpop.f32.mrb[0].mxu0
      %v4424 = vadd.f32 0.0, %v4423
      %v4425 = vpop.f32.mrb[0].mxu0
      %v4426 = vpop.f32.mrb[0].mxu0
      %v4427 = vadd.f32 0.0, %v4426
      %v4428 = vpop.f32.mrb[0].mxu0
      %4429 = vmatprep.mubr.bf16.mxu0 0
      %4430 = vmatmul.mubr.bf16.gmra.mrb[0].mxu0 %v4289
      %v4431 = vpop.f32.mrb[0].mxu0
      %v4432 = vadd.f32 0.0, %v4431
      %v4433 = vpop.f32.mrb[0].mxu0
      %v4434 = vpop.f32.mrb[0].mxu0
      %v4435 = vadd.f32 0.0, %v4434
      %v4436 = vpop.f32.mrb[0].mxu0
      %4437 = vmatprep.mubr.bf16.mxu0 0
      %4438 = vmatmul.mubr.bf16.gmra.mrb[0].mxu0 %v4290
      %v4439 = vpop.f32.mrb[0].mxu0
      %v4440 = vadd.f32 0.0, %v4439
      %v4441 = vpop.f32.mrb[0].mxu0
      %v4442 = vpop.f32.mrb[0].mxu0
      %v4443 = vadd.f32 0.0, %v4442
      %v4444 = vpop.f32.mrb[0].mxu0
      %4445 = vmatprep.mubr.bf16.mxu0 0
      %4446 = vmatmul.mubr.bf16.gmra.mrb[0].mxu0 %v4291
      %v4447 = vpop.f32.mrb[0].mxu0
      %v4448 = vadd.f32 0.0, %v4447
      %v4449 = vpop.f32.mrb[0].mxu0
      %v4450 = vpop.f32.mrb[0].mxu0
      %v4451 = vadd.f32 0.0, %v4450
      %v4452 = vpop.f32.mrb[0].mxu0
      %4453 = vdwg.mxu0
      %v4454 = vadd.f32 %v4268, %v4392
      %v4455 = vadd.f32 %v4269, %v4395
      %v4456 = vadd.f32 %v4270, %v4400
      %v4457 = vadd.f32 %v4271, %v4403
      %v4458 = vadd.f32 %v4272, %v4408
      %v4459 = vadd.f32 %v4273, %v4411
      %v4460 = vadd.f32 %v4274, %v4416
      %v4461 = vadd.f32 %v4275, %v4419
      %v4462 = vadd.f32 %v4276, %v4424
      %v4463 = vadd.f32 %v4277, %v4427
      %v4464 = vadd.f32 %v4278, %v4432
      %v4465 = vadd.f32 %v4279, %v4435
      %v4466 = vadd.f32 %v4280, %v4440
      %v4467 = vadd.f32 %v4281, %v4443
      %v4468 = vadd.f32 %v4282, %v4448
      %v4469 = vadd.f32 %v4283, %v4451
      %v4470 = vrot.slane %v4026, 1
      %v4471 = vrot.slane %v4030, 1
      %v4472 = vrot.slane %v4034, 1
      %v4473 = vrot.slane %v4038, 1
      %v4474 = vrot.slane %v4042, 1
      %v4475 = vrot.slane %v4046, 1
      %v4476 = vrot.slane %v4050, 1
      %v4477 = vrot.slane %v4054, 1
      %v4478 = vrot.slane %v4027, 1
      %v4479 = vrot.slane %v4031, 1
      %v4480 = vrot.slane %v4035, 1
      %v4481 = vrot.slane %v4039, 1
      %v4482 = vrot.slane %v4043, 1
      %v4483 = vrot.slane %v4047, 1
      %v4484 = vrot.slane %v4051, 1
      %v4485 = vrot.slane %v4055, 1
      %v4486 = vrot.slane %v4028, 1
      %v4487 = vrot.slane %v4032, 1
      %v4488 = vrot.slane %v4036, 1
      %v4489 = vrot.slane %v4040, 1
      %v4490 = vrot.slane %v4044, 1
      %v4491 = vrot.slane %v4048, 1
      %v4492 = vrot.slane %v4052, 1
      %v4493 = vrot.slane %v4056, 1
      %v4494 = vsel %vm373, %v4478, %v4486
      %v4495 = vsel %vm373, %v4479, %v4487
      %v4496 = vsel %vm373, %v4480, %v4488
      %v4497 = vsel %vm373, %v4481, %v4489
      %v4498 = vsel %vm373, %v4482, %v4490
      %v4499 = vsel %vm373, %v4483, %v4491
      %v4500 = vsel %vm373, %v4484, %v4492
      %v4501 = vsel %vm373, %v4485, %v4493
      %v4502 = vsel %vm373, %v4470, %v4478
      %v4503 = vsel %vm373, %v4471, %v4479
      %v4504 = vsel %vm373, %v4472, %v4480
      %v4505 = vsel %vm373, %v4473, %v4481
      %v4506 = vsel %vm373, %v4474, %v4482
      %v4507 = vsel %vm373, %v4475, %v4483
      %v4508 = vsel %vm373, %v4476, %v4484
      %v4509 = vsel %vm373, %v4477, %v4485
      %v4510 = vpack.c.bf16 %v4494, %v4502
      %v4511 = vpack.c.bf16 %v4495, %v4503
      %v4512 = vpack.c.bf16 %v4496, %v4504
      %v4513 = vpack.c.bf16 %v4497, %v4505
      %v4514 = vpack.c.bf16 %v4498, %v4506
      %v4515 = vpack.c.bf16 %v4499, %v4507
      %v4516 = vpack.c.bf16 %v4500, %v4508
      %v4517 = vpack.c.bf16 %v4501, %v4509
      %s4518 = scalar_lea.vmem %s3, 512
      %v4519 = vld [vmem:[%s4518] sm:$0xf]
      %v4520 = vld [vmem:[%s4518 + $0x4] sm:$0xf]
      %v4521 = vld [vmem:[%s4518 + $0x8] sm:$0xf]
      %v4522 = vld [vmem:[%s4518 + $0xc] sm:$0xf]
      %v4523 = vld [vmem:[%s4518 + $0x10] sm:$0xf]
      %v4524 = vld [vmem:[%s4518 + $0x14] sm:$0xf]
      %v4525 = vld [vmem:[%s4518 + $0x18] sm:$0xf]
      %v4526 = vld [vmem:[%s4518 + $0x1c] sm:$0xf]
      %v4527 = vld [vmem:[%s4518 + $0x20] sm:$0xf]
      %v4528 = vld [vmem:[%s4518 + $0x24] sm:$0xf]
      %v4529 = vld [vmem:[%s4518 + $0x28] sm:$0xf]
      %v4530 = vld [vmem:[%s4518 + $0x2c] sm:$0xf]
      %v4531 = vld [vmem:[%s4518 + $0x30] sm:$0xf]
      %v4532 = vld [vmem:[%s4518 + $0x34] sm:$0xf]
      %v4533 = vld [vmem:[%s4518 + $0x38] sm:$0xf]
      %v4534 = vld [vmem:[%s4518 + $0x3c] sm:$0xf]
      %v4551 = vunpack.c.l.b16 %v4519
      %v4552 = vunpack.c.l.b16 %v4520
      %v4553 = vunpack.c.l.b16 %v4521
      %v4554 = vunpack.c.l.b16 %v4522
      %v4555 = vunpack.c.l.b16 %v4523
      %v4556 = vunpack.c.l.b16 %v4524
      %v4557 = vunpack.c.l.b16 %v4525
      %v4558 = vunpack.c.l.b16 %v4526
      %v4559 = vunpack.c.l.b16 %v4527
      %v4560 = vunpack.c.l.b16 %v4528
      %v4561 = vunpack.c.l.b16 %v4529
      %v4562 = vunpack.c.l.b16 %v4530
      %v4563 = vunpack.c.l.b16 %v4531
      %v4564 = vunpack.c.l.b16 %v4532
      %v4565 = vunpack.c.l.b16 %v4533
      %v4566 = vunpack.c.l.b16 %v4534
      %v4567 = vpack.c.b16 %v4552, %v4551
      %v4568 = vpack.c.b16 %v4554, %v4553
      %v4569 = vpack.c.b16 %v4556, %v4555
      %v4570 = vpack.c.b16 %v4558, %v4557
      %v4571 = vpack.c.b16 %v4560, %v4559
      %v4572 = vpack.c.b16 %v4562, %v4561
      %v4573 = vpack.c.b16 %v4564, %v4563
      %v4574 = vpack.c.b16 %v4566, %v4565
      %4583 = vmatprep.subr.bf16.mxu0 0
      %4584 = vmatpush1.bf16.msra.mxu0 %v4567
      %4585 = vmatprep.subr.bf16.mxu0 0
      %4586 = vmatpush1.bf16.msra.mxu0 %v4568
      %4587 = vmatprep.subr.bf16.mxu0 0
      %4588 = vmatpush1.bf16.msra.mxu0 %v4569
      %4589 = vmatprep.subr.bf16.mxu0 0
      %4590 = vmatpush1.bf16.msra.mxu0 %v4570
      %4591 = vmatprep.subr.bf16.mxu0 0
      %4592 = vmatpush1.bf16.msra.mxu0 %v4571
      %4593 = vmatprep.subr.bf16.mxu0 0
      %4594 = vmatpush1.bf16.msra.mxu0 %v4572
      %4595 = vmatprep.subr.bf16.mxu0 0
      %4596 = vmatpush1.bf16.msra.mxu0 %v4573
      %4597 = vmatprep.subr.bf16.mxu0 0
      %4598 = vmatpush1.bf16.msra.mxu0 %v4574
      %4599 = vmatprep.subr.bf16.mxu0 0
      %4600 = vmatpush1.bf16.msra.mxu0 0
      %4601 = vmatprep.subr.bf16.mxu0 0
      %4602 = vmatpush1.bf16.msra.mxu0 0
      %4603 = vmatprep.subr.bf16.mxu0 0
      %4604 = vmatpush1.bf16.msra.mxu0 0
      %4605 = vmatprep.subr.bf16.mxu0 0
      %4606 = vmatpush1.bf16.msra.mxu0 0
      %4607 = vmatprep.subr.bf16.mxu0 0
      %4608 = vmatpush1.bf16.msra.mxu0 0
      %4609 = vmatprep.subr.bf16.mxu0 0
      %4610 = vmatpush1.bf16.msra.mxu0 0
      %4611 = vmatprep.subr.bf16.mxu0 0
      %4612 = vmatpush1.bf16.msra.mxu0 0
      %4613 = vmatprep.subr.bf16.mxu0 0
      %4614 = vmatpush1.bf16.msra.mxu0 0
      %4615 = vmatprep.mubr.bf16.mxu0 0
      %4616 = vmatmul.mubr.bf16.gmra.mrb[0].mxu0 %v4510
      %v4617 = vpop.f32.mrb[0].mxu0
      %v4618 = vadd.f32 0.0, %v4617
      %v4619 = vpop.f32.mrb[0].mxu0
      %v4620 = vpop.f32.mrb[0].mxu0
      %v4621 = vadd.f32 0.0, %v4620
      %v4622 = vpop.f32.mrb[0].mxu0
      %4623 = vmatprep.mubr.bf16.mxu0 0
      %4624 = vmatmul.mubr.bf16.gmra.mrb[0].mxu0 %v4511
      %v4625 = vpop.f32.mrb[0].mxu0
      %v4626 = vadd.f32 0.0, %v4625
      %v4627 = vpop.f32.mrb[0].mxu0
      %v4628 = vpop.f32.mrb[0].mxu0
      %v4629 = vadd.f32 0.0, %v4628
      %v4630 = vpop.f32.mrb[0].mxu0
      %4631 = vmatprep.mubr.bf16.mxu0 0
      %4632 = vmatmul.mubr.bf16.gmra.mrb[0].mxu0 %v4512
      %v4633 = vpop.f32.mrb[0].mxu0
      %v4634 = vadd.f32 0.0, %v4633
      %v4635 = vpop.f32.mrb[0].mxu0
      %v4636 = vpop.f32.mrb[0].mxu0
      %v4637 = vadd.f32 0.0, %v4636
      %v4638 = vpop.f32.mrb[0].mxu0
      %4639 = vmatprep.mubr.bf16.mxu0 0
      %4640 = vmatmul.mubr.bf16.gmra.mrb[0].mxu0 %v4513
      %v4641 = vpop.f32.mrb[0].mxu0
      %v4642 = vadd.f32 0.0, %v4641
      %v4643 = vpop.f32.mrb[0].mxu0
      %v4644 = vpop.f32.mrb[0].mxu0
      %v4645 = vadd.f32 0.0, %v4644
      %v4646 = vpop.f32.mrb[0].mxu0
      %4647 = vmatprep.mubr.bf16.mxu0 0
      %4648 = vmatmul.mubr.bf16.gmra.mrb[0].mxu0 %v4514
      %v4649 = vpop.f32.mrb[0].mxu0
      %v4650 = vadd.f32 0.0, %v4649
      %v4651 = vpop.f32.mrb[0].mxu0
      %v4652 = vpop.f32.mrb[0].mxu0
      %v4653 = vadd.f32 0.0, %v4652
      %v4654 = vpop.f32.mrb[0].mxu0
      %4655 = vmatprep.mubr.bf16.mxu0 0
      %4656 = vmatmul.mubr.bf16.gmra.mrb[0].mxu0 %v4515
      %v4657 = vpop.f32.mrb[0].mxu0
      %v4658 = vadd.f32 0.0, %v4657
      %v4659 = vpop.f32.mrb[0].mxu0
      %v4660 = vpop.f32.mrb[0].mxu0
      %v4661 = vadd.f32 0.0, %v4660
      %v4662 = vpop.f32.mrb[0].mxu0
      %4663 = vmatprep.mubr.bf16.mxu0 0
      %4664 = vmatmul.mubr.bf16.gmra.mrb[0].mxu0 %v4516
      %v4665 = vpop.f32.mrb[0].mxu0
      %v4666 = vadd.f32 0.0, %v4665
      %v4667 = vpop.f32.mrb[0].mxu0
      %v4668 = vpop.f32.mrb[0].mxu0
      %v4669 = vadd.f32 0.0, %v4668
      %v4670 = vpop.f32.mrb[0].mxu0
      %4671 = vmatprep.mubr.bf16.mxu0 0
      %4672 = vmatmul.mubr.bf16.gmra.mrb[0].mxu0 %v4517
      %v4673 = vpop.f32.mrb[0].mxu0
      %v4674 = vadd.f32 0.0, %v4673
      %v4675 = vpop.f32.mrb[0].mxu0
      %v4676 = vpop.f32.mrb[0].mxu0
      %v4677 = vadd.f32 0.0, %v4676
      %v4678 = vpop.f32.mrb[0].mxu0
      %4679 = vdwg.mxu0
      %v4680 = vadd.f32 %v4454, %v4618
      %v4681 = vadd.f32 %v4455, %v4621
      %v4682 = vadd.f32 %v4456, %v4626
      %v4683 = vadd.f32 %v4457, %v4629
      %v4684 = vadd.f32 %v4458, %v4634
      %v4685 = vadd.f32 %v4459, %v4637
      %v4686 = vadd.f32 %v4460, %v4642
      %v4687 = vadd.f32 %v4461, %v4645
      %v4688 = vadd.f32 %v4462, %v4650
      %v4689 = vadd.f32 %v4463, %v4653
      %v4690 = vadd.f32 %v4464, %v4658
      %v4691 = vadd.f32 %v4465, %v4661
      %v4692 = vadd.f32 %v4466, %v4666
      %v4693 = vadd.f32 %v4467, %v4669
      %v4694 = vadd.f32 %v4468, %v4674
      %v4695 = vadd.f32 %v4469, %v4677
      %v4696 = vld [vmem:[%s4] sm:$0x1]
      %v4698 = vlaneseq
      %v4699 = vshrl.u32 %v4698, 7
      %v4700 = vsub.s32 0, %v4699
      %v4701 = vrot.slane %v4696, %v4700
      %v4703 = vadd.f32 %v4680, %v4701
      %v4704 = vadd.f32 %v4681, %v4701
      %v4705 = vadd.f32 %v4682, %v4701
      %v4706 = vadd.f32 %v4683, %v4701
      %v4707 = vadd.f32 %v4684, %v4701
      %v4708 = vadd.f32 %v4685, %v4701
      %v4709 = vadd.f32 %v4686, %v4701
      %v4710 = vadd.f32 %v4687, %v4701
      %v4711 = vadd.f32 %v4688, %v4701
      %v4712 = vadd.f32 %v4689, %v4701
      %v4713 = vadd.f32 %v4690, %v4701
      %v4714 = vadd.f32 %v4691, %v4701
      %v4715 = vadd.f32 %v4692, %v4701
      %v4716 = vadd.f32 %v4693, %v4701
      %v4717 = vadd.f32 %v4694, %v4701
      %v4718 = vadd.f32 %v4695, %v4701
      %v4719 = vmax.f32 %v4703, 0.0
      %v4720 = vmax.f32 %v4704, 0.0
      %v4721 = vmax.f32 %v4705, 0.0
      %v4722 = vmax.f32 %v4706, 0.0
      %v4723 = vmax.f32 %v4707, 0.0
      %v4724 = vmax.f32 %v4708, 0.0
      %v4725 = vmax.f32 %v4709, 0.0
      %v4726 = vmax.f32 %v4710, 0.0
      %v4727 = vmax.f32 %v4711, 0.0
      %v4728 = vmax.f32 %v4712, 0.0
      %v4729 = vmax.f32 %v4713, 0.0
      %v4730 = vmax.f32 %v4714, 0.0
      %v4731 = vmax.f32 %v4715, 0.0
      %v4732 = vmax.f32 %v4716, 0.0
      %v4733 = vmax.f32 %v4717, 0.0
      %v4734 = vmax.f32 %v4718, 0.0
      %4735 = vst [vmem:[%s248] sm:$0xff] %v4719
      %4736 = vst [vmem:[%s248 + $0x8] sm:$0xff] %v4720
      %4737 = vst [vmem:[%s248 + $0x10] sm:$0xff] %v4721
      %4738 = vst [vmem:[%s248 + $0x18] sm:$0xff] %v4722
      %4739 = vst [vmem:[%s248 + $0x20] sm:$0xff] %v4723
      %4740 = vst [vmem:[%s248 + $0x28] sm:$0xff] %v4724
      %4741 = vst [vmem:[%s248 + $0x30] sm:$0xff] %v4725
      %4742 = vst [vmem:[%s248 + $0x38] sm:$0xff] %v4726
      %4743 = vst [vmem:[%s248 + $0x40] sm:$0xff] %v4727
      %4744 = vst [vmem:[%s248 + $0x48] sm:$0xff] %v4728
      %4745 = vst [vmem:[%s248 + $0x50] sm:$0xff] %v4729
      %4746 = vst [vmem:[%s248 + $0x58] sm:$0xff] %v4730
      %4747 = vst [vmem:[%s248 + $0x60] sm:$0xff] %v4731
      %4748 = vst [vmem:[%s248 + $0x68] sm:$0xff] %v4732
      %4749 = vst [vmem:[%s248 + $0x70] sm:$0xff] %v4733
      %4750 = vst [vmem:[%s248 + $0x78] sm:$0xff] %v4734
      %s4751 = smul.u32 8, %s21
      %p4752 = scmp.lt.s32.totalorder %s20, 1
      %s4753 = scalar_select %p4752, %s20, 1
      %p4754 = scmp.lt.s32.totalorder %s4751, 15
      %s4755 = scalar_select %p4754, %s4751, 15
      %s4756 = smul.addr %s4755, 2
      %s4757 = smul.addr %s4753, 32
      %s4758 = sadd.s32 %s4756, %s4757
      %s4759 = smul.addr %s4758, 8
      %s4760 = scalar_lea.vmem %s5, %s4759
      // Predicated region
      $region49: #{double_conv.1} parent=39 // pred_check
        %p4761 = pneg %p158
      $region50: #{double_conv.1} parent=39 // pred_check_branch
        %4763 = sbr.rel (%p4761) target = $region52
      $region51: #{double_conv.1} parent=39 // pred_region
        %s4764 = smul.u32 8, %s21
      $region52: #{double_conv.1} parent=39 // pred_fallthru
        _
    $region40: #{double_conv.1} parent=5 // pred_fallthru
      _
    %p4765 = scmp.le.s32.totalorder 2, %s11
    // Predicated region
    $region53: #{double_conv.1} parent=5 // pred_check
      %p4766 = pneg %p4765
    $region54: #{double_conv.1} parent=5 // pred_check_branch
      %4768 = sbr.rel (%p4766) target = $region56
    $region55: #{double_conv.1} parent=5 // pred_region
      %s4769 = ssub.s32 %s11, 2
      // Predicated region
      $region57: #{double_conv.1} parent=55 // pred_check
        %p4770 = pneg %p164
      $region58: #{double_conv.1} parent=55 // pred_check_branch
        %4772 = sbr.rel (%p4770) target = $region60
      $region59: #{double_conv.1} parent=55 // pred_region
        %s4773 = smul.u32 8, %s23
        %p4774 = scmp.lt.s32.totalorder %s22, 1
        %s4775 = scalar_select %p4774, %s22, 1
        %p4776 = scmp.lt.s32.totalorder %s4773, 15
        %s4777 = scalar_select %p4776, %s4773, 15
        %s4778 = smul.addr %s4777, 2
        %s4779 = smul.addr %s4775, 32
        %s4780 = sadd.s32 %s4778, %s4779
        %s4781 = smul.addr %s4780, 8
        %s4782 = scalar_lea.vmem %s5, %s4781
      $region60: #{double_conv.1} parent=55 // pred_fallthru
        _
    $region56: #{double_conv.1} parent=5 // pred_fallthru
      _
  $region6: #{double_conv.1} parent=0 // loop_footer
    %s15 = sadd.s32 1, %s11
  $region7: #{double_conv.1} parent=0 // loop_footer_branch
    %10 = sbr.rel target = $region3
  $region8: #{double_conv.1} parent=0 // loop_exit
    _

</llo_original>
